<compile_context>
chip_gen: v7x
topology: tpu7x:2x2x1
jax: 0.10.0
libtpu: 0.0.40
codegen_flags: <defaults>
</compile_context>

<pallas_src>
import functools

import jax
import jax.numpy as jnp
from jax import lax
from jax.experimental import pallas as pl
from jax.experimental.pallas import tpu as pltpu


def mlp_kernel(x_ref,
               w1_ref, b1_ref,
               w2_ref, b2_ref,
               w3_ref, b3_ref,
               w4_ref, b4_ref,
               o_ref):
    cdt = w1_ref.dtype  # matmul-operand dtype (bf16 or f32)

    # Cast x inside the kernel (hides under the MXU; keeps the kernel the only
    # pass over x in HBM).
    x = x_ref[...].astype(cdt)

    # Layer 1: Linear (BN folded) -> ReLU   [f32 accumulate, f32 epilogue]
    h = jnp.dot(x, w1_ref[...], preferred_element_type=jnp.float32)
    h = jnp.maximum(h + b1_ref[...], 0.0)

    # Layer 2
    h = jnp.dot(h.astype(cdt), w2_ref[...], preferred_element_type=jnp.float32)
    h = jnp.maximum(h + b2_ref[...], 0.0)

    # Layer 3
    h = jnp.dot(h.astype(cdt), w3_ref[...], preferred_element_type=jnp.float32)
    h = jnp.maximum(h + b3_ref[...], 0.0)

    # Head: Linear(128, 1).  Computed as w4 (1,H3) contracted with h (tile_b,H3)
    # over the feature axis -> (1, tile_b): the result is lane-dense (tile_b on
    # lanes), so the store is an unmasked vst instead of masked 1-lane stores.
    o = lax.dot_general(w4_ref[...], h, (((1,), (1,)), ((), ())),
                        preferred_element_type=jnp.float32) + b4_ref[...]
    o_ref[...] = o.astype(o_ref.dtype)


def _full_spec(shape):
    # Whole-array block; constant index map -> stays resident across the grid.
    return pl.BlockSpec(shape, lambda i: tuple(0 for _ in shape))


def _round_up(n, m):
    return ((n + m - 1) // m) * m


@functools.partial(jax.jit, static_argnames=("tile_b",))
def deep_mlp_forward(x, fparams, tile_b=1024):
    """x: [B, D] float32. fparams: folded kernel params (see fold_params).

    tile_b: requested batch tile (multiple of 256).  It is adaptively clamped
    to round_up(B, 256) so small batches don't pay for padded zero rows.
    """
    B, D = x.shape
    H1 = fparams["w1"].shape[1]
    H2 = fparams["w2"].shape[1]
    H3 = fparams["w3"].shape[1]

    # Adaptive batch tile: multiple of 256, no bigger than the padded batch.
    tb = _round_up(min(tile_b, _round_up(B, 256)), 256)
    n_tiles = pl.cdiv(B, tb)
    B_pad = n_tiles * tb

    # Pad batch to a multiple of tb so no rows are silently dropped.
    if B_pad != B:
        x = jnp.pad(x, ((0, B_pad - B), (0, 0)))

    grid = (n_tiles,)

    in_specs = [
        pl.BlockSpec((tb, D), lambda i: (i, 0)),       # x, tiled over batch
        _full_spec((D, H1)), _full_spec((1, H1)),
        _full_spec((H1, H2)), _full_spec((1, H2)),
        _full_spec((H2, H3)), _full_spec((1, H3)),
        _full_spec((1, H3)), _full_spec((1, 1)),       # head row + bias
    ]
    # Lane-dense output: one (1, tile_b) row per grid step along the lane axis.
    out_spec = pl.BlockSpec((1, tb), lambda i: (0, i))

    flops = 2 * B_pad * (D * H1 + H1 * H2 + H2 * H3 + H3)
    weight_bytes = sum(int(v.size) * v.dtype.itemsize for v in fparams.values())
    bytes_accessed = B_pad * D * x.dtype.itemsize + weight_bytes + B_pad * 4
    cost = pl.CostEstimate(flops=flops, transcendentals=0,
                           bytes_accessed=bytes_accessed)

    out = pl.pallas_call(
        mlp_kernel,
        out_shape=jax.ShapeDtypeStruct((1, B_pad), jnp.float32),
        grid_spec=pltpu.PrefetchScalarGridSpec(
            num_scalar_prefetch=0,
            grid=grid,
            in_specs=in_specs,
            out_specs=out_spec,
        ),
        compiler_params=pltpu.CompilerParams(
            # Batch tiles are independent -> shard across TCs (v7x megacore).
            dimension_semantics=("parallel",)),
        cost_estimate=cost,
    )(
        x,
        fparams["w1"], fparams["b1"],
        fparams["w2"], fparams["b2"],
        fparams["w3"], fparams["b3"],
        fparams["w4"], fparams["b4"],
    )
    return out.reshape(B_pad, 1)[:B]


def init_params(key, input_dim, hidden_dims=(512, 256, 128)):
    """Raw PyTorch-like parameters: Linear (uniform(-1/sqrt(fan_in), ...)) + BN."""
    dims = [input_dim] + list(hidden_dims) + [1]
    params = {}
    keys = jax.random.split(key, 2 * (len(dims) - 1))
    for li in range(len(dims) - 1):
        fan_in, fan_out = dims[li], dims[li + 1]
        bound = 1.0 / (fan_in ** 0.5)
        params[f"w{li + 1}"] = jax.random.uniform(
            keys[2 * li], (fan_in, fan_out), minval=-bound, maxval=bound,
            dtype=jnp.float32)
        params[f"b{li + 1}"] = jax.random.uniform(
            keys[2 * li + 1], (1, fan_out), minval=-bound, maxval=bound,
            dtype=jnp.float32)
        if li < len(hidden_dims):
            # BatchNorm1d at init: gamma=1, beta=0, running_mean=0, running_var=1
            params[f"gamma{li + 1}"] = jnp.ones((1, fan_out), jnp.float32)
            params[f"beta{li + 1}"] = jnp.zeros((1, fan_out), jnp.float32)
            params[f"mean{li + 1}"] = jnp.zeros((1, fan_out), jnp.float32)
            params[f"var{li + 1}"] = jnp.ones((1, fan_out), jnp.float32)
    return params


def fold_params(params, n_hidden=3, eps=1e-5, use_bf16=True):
    """Fold eval-mode BN into the Linear weights; cast matmul operands."""
    mat_dtype = jnp.bfloat16 if use_bf16 else jnp.float32
    fp = {}
    for li in range(1, n_hidden + 1):
        w, b = params[f"w{li}"], params[f"b{li}"]
        scale = params[f"gamma{li}"] / jnp.sqrt(params[f"var{li}"] + eps)
        shift = params[f"beta{li}"] - params[f"mean{li}"] * scale
        fp[f"w{li}"] = (w * scale).astype(mat_dtype)            # (in,out)*(1,out)
        fp[f"b{li}"] = (b * scale + shift).astype(jnp.float32)  # epilogue in f32
    # Head Linear(H3, 1): store as a (1, H3) f32 row.
    head = n_hidden + 1
    fp[f"w{head}"] = params[f"w{head}"].reshape(1, -1).astype(jnp.float32)
    fp[f"b{head}"] = params[f"b{head}"].astype(jnp.float32)
    return fp


def reference_forward(x, fparams):
    """Pure-JAX reference mirroring the kernel's precision choices."""
    cdt = fparams["w1"].dtype
    h = x.astype(cdt)
    for li in (1, 2, 3):
        h = jnp.dot(h, fparams[f"w{li}"], preferred_element_type=jnp.float32)
        h = jnp.maximum(h + fparams[f"b{li}"], 0.0)
        if li < 3:
            h = h.astype(cdt)
    return (jnp.dot(h, fparams["w4"].T, preferred_element_type=jnp.float32)
            + fparams["b4"])


if __name__ == "__main__":
    key = jax.random.PRNGKey(0)
    k_param, k_x = jax.random.split(key)

    # Small shapes consistent with the module: input_dim=32, batch=300
    # (not a multiple of 256 -> exercises padding; a forced tile_b=256 run
    # below exercises the multi-step grid path).
    B, D = 300, 32
    raw_params = init_params(k_param, input_dim=D, hidden_dims=(512, 256, 128))
    x = jax.random.normal(k_x, (B, D), dtype=jnp.float32)

    # --- bf16 matmul operands (default fast path) ---
    fparams_bf16 = fold_params(raw_params, use_bf16=True)
    out = jax.block_until_ready(deep_mlp_forward(x, fparams_bf16))
    ref = reference_forward(x, fparams_bf16)
    assert out.shape == (B, 1)
    assert jnp.allclose(out, ref, atol=2e-3, rtol=2e-3), \
        f"bf16 mismatch (max abs err {float(jnp.max(jnp.abs(out - ref)))})"

    # Forced small tile -> 2 grid steps; same numerics.
    out_small = jax.block_until_ready(deep_mlp_forward(x, fparams_bf16, tile_b=256))
    assert jnp.allclose(out_small, ref, atol=2e-3, rtol=2e-3), \
        "bf16 multi-tile mismatch"

    # --- f32 matmul operands (closest to PyTorch's f32 forward) ---
    fparams_f32 = fold_params(raw_params, use_bf16=False)
    out_f32 = jax.block_until_ready(deep_mlp_forward(x, fparams_f32))
    ref_f32 = reference_forward(x, fparams_f32)
    assert jnp.allclose(out_f32, ref_f32, atol=1e-3, rtol=1e-3), \
        f"f32 mismatch (max abs err {float(jnp.max(jnp.abs(out_f32 - ref_f32)))})"

    print("KERNEL_OK")
</pallas_src>

<mosaic_0001>
module attributes {stable_mosaic.version = 11 : i64} {
  func.func @mlp_kernel(%arg0: i32, %arg1: memref<512x32xf32, #tpu.memory_space<vmem>>, %arg2: memref<32x512xbf16, #tpu.memory_space<vmem>>, %arg3: memref<1x512xf32, #tpu.memory_space<vmem>>, %arg4: memref<512x256xbf16, #tpu.memory_space<vmem>>, %arg5: memref<1x256xf32, #tpu.memory_space<vmem>>, %arg6: memref<256x128xbf16, #tpu.memory_space<vmem>>, %arg7: memref<1x128xf32, #tpu.memory_space<vmem>>, %arg8: memref<1x128xf32, #tpu.memory_space<vmem>>, %arg9: memref<1x1xf32, #tpu.memory_space<vmem>>, %arg10: memref<1x512xf32, #tpu.memory_space<vmem>>) attributes {dimension_semantics = [#tpu.dimension_semantics<parallel>], iteration_bounds = array<i64: 1>, scalar_prefetch = 0 : i64, scratch_operands = 0 : i64, tpu.core_type = #tpu.core_type<tc>, window_params = [{transform_indices = @transform_0, window_bounds = array<i64: 512, 32>}, {pipeline_mode = #tpu.pipeline_mode<synchronous>, transform_indices = @transform_1, window_bounds = array<i64: 32, 512>}, {pipeline_mode = #tpu.pipeline_mode<synchronous>, transform_indices = @transform_2, window_bounds = array<i64: 1, 512>}, {pipeline_mode = #tpu.pipeline_mode<synchronous>, transform_indices = @transform_3, window_bounds = array<i64: 512, 256>}, {pipeline_mode = #tpu.pipeline_mode<synchronous>, transform_indices = @transform_4, window_bounds = array<i64: 1, 256>}, {pipeline_mode = #tpu.pipeline_mode<synchronous>, transform_indices = @transform_5, window_bounds = array<i64: 256, 128>}, {pipeline_mode = #tpu.pipeline_mode<synchronous>, transform_indices = @transform_6, window_bounds = array<i64: 1, 128>}, {pipeline_mode = #tpu.pipeline_mode<synchronous>, transform_indices = @transform_7, window_bounds = array<i64: 1, 128>}, {pipeline_mode = #tpu.pipeline_mode<synchronous>, transform_indices = @transform_8, window_bounds = array<i64: 1, 1>}, {transform_indices = @transform_9, window_bounds = array<i64: 1, 512>}]} {
    %c0 = arith.constant 0 : index
    %c0_0 = arith.constant 0 : index
    %0 = vector.load %arg1[%c0, %c0_0] : memref<512x32xf32, #tpu.memory_space<vmem>>, vector<512x32xf32>
    %1 = arith.truncf %0 : vector<512x32xf32> to vector<512x32xbf16>
    %c0_1 = arith.constant 0 : index
    %c0_2 = arith.constant 0 : index
    %2 = vector.load %arg2[%c0_1, %c0_2] : memref<32x512xbf16, #tpu.memory_space<vmem>>, vector<32x512xbf16>
    %cst = arith.constant dense<0.000000e+00> : vector<512x512xf32>
    %3 = tpu.matmul %1, %2, %cst {dimension_numbers = #tpu.dot_dimension_numbers<[1], [0], [0], [1], [0, 0, 1, 1], [], []>} : vector<512x32xbf16>, vector<32x512xbf16>, vector<512x512xf32> -> vector<512x512xf32>
    %c0_3 = arith.constant 0 : index
    %c0_4 = arith.constant 0 : index
    %4 = vector.load %arg3[%c0_3, %c0_4] : memref<1x512xf32, #tpu.memory_space<vmem>>, vector<1x512xf32>
    %5 = vector.broadcast %4 : vector<1x512xf32> to vector<512x512xf32>
    %6 = arith.addf %3, %5 : vector<512x512xf32>
    %cst_5 = arith.constant 0.000000e+00 : f32
    %7 = vector.broadcast %cst_5 : f32 to vector<512x512xf32>
    %8 = arith.maximumf %6, %7 : vector<512x512xf32>
    %9 = arith.truncf %8 : vector<512x512xf32> to vector<512x512xbf16>
    %c0_6 = arith.constant 0 : index
    %c0_7 = arith.constant 0 : index
    %10 = vector.load %arg4[%c0_6, %c0_7] : memref<512x256xbf16, #tpu.memory_space<vmem>>, vector<512x256xbf16>
    %cst_8 = arith.constant dense<0.000000e+00> : vector<512x256xf32>
    %11 = tpu.matmul %9, %10, %cst_8 {dimension_numbers = #tpu.dot_dimension_numbers<[1], [0], [0], [1], [0, 0, 1, 1], [], []>} : vector<512x512xbf16>, vector<512x256xbf16>, vector<512x256xf32> -> vector<512x256xf32>
    %c0_9 = arith.constant 0 : index
    %c0_10 = arith.constant 0 : index
    %12 = vector.load %arg5[%c0_9, %c0_10] : memref<1x256xf32, #tpu.memory_space<vmem>>, vector<1x256xf32>
    %13 = vector.broadcast %12 : vector<1x256xf32> to vector<512x256xf32>
    %14 = arith.addf %11, %13 : vector<512x256xf32>
    %cst_11 = arith.constant 0.000000e+00 : f32
    %15 = vector.broadcast %cst_11 : f32 to vector<512x256xf32>
    %16 = arith.maximumf %14, %15 : vector<512x256xf32>
    %17 = arith.truncf %16 : vector<512x256xf32> to vector<512x256xbf16>
    %c0_12 = arith.constant 0 : index
    %c0_13 = arith.constant 0 : index
    %18 = vector.load %arg6[%c0_12, %c0_13] : memref<256x128xbf16, #tpu.memory_space<vmem>>, vector<256x128xbf16>
    %cst_14 = arith.constant dense<0.000000e+00> : vector<512x128xf32>
    %19 = tpu.matmul %17, %18, %cst_14 {dimension_numbers = #tpu.dot_dimension_numbers<[1], [0], [0], [1], [0, 0, 1, 1], [], []>} : vector<512x256xbf16>, vector<256x128xbf16>, vector<512x128xf32> -> vector<512x128xf32>
    %c0_15 = arith.constant 0 : index
    %c0_16 = arith.constant 0 : index
    %20 = vector.load %arg7[%c0_15, %c0_16] : memref<1x128xf32, #tpu.memory_space<vmem>>, vector<1x128xf32>
    %21 = vector.broadcast %20 : vector<1x128xf32> to vector<512x128xf32>
    %22 = arith.addf %19, %21 : vector<512x128xf32>
    %cst_17 = arith.constant 0.000000e+00 : f32
    %23 = vector.broadcast %cst_17 : f32 to vector<512x128xf32>
    %24 = arith.maximumf %22, %23 : vector<512x128xf32>
    %c0_18 = arith.constant 0 : index
    %c0_19 = arith.constant 0 : index
    %25 = vector.load %arg8[%c0_18, %c0_19] : memref<1x128xf32, #tpu.memory_space<vmem>>, vector<1x128xf32>
    %cst_20 = arith.constant dense<0.000000e+00> : vector<1x512xf32>
    %26 = tpu.matmul %25, %24, %cst_20 {dimension_numbers = #tpu.dot_dimension_numbers<[1], [1], [0], [0], [0, 0, 1, 0], [], []>} : vector<1x128xf32>, vector<512x128xf32>, vector<1x512xf32> -> vector<1x512xf32>
    %c0_21 = arith.constant 0 : index
    %c0_22 = arith.constant 0 : index
    %27 = vector.load %arg9[%c0_21, %c0_22] : memref<1x1xf32, #tpu.memory_space<vmem>>, vector<1x1xf32>
    %28 = vector.broadcast %27 : vector<1x1xf32> to vector<1x512xf32>
    %29 = arith.addf %26, %28 : vector<1x512xf32>
    %c0_23 = arith.constant 0 : index
    %c0_24 = arith.constant 0 : index
    %30 = vector.load %arg10[%c0_23, %c0_24] : memref<1x512xf32, #tpu.memory_space<vmem>>, vector<1x512xf32>
    tpu.vector_store %arg10[%c0_23, %c0_24], %29 {strides = array<i32>} : memref<1x512xf32, #tpu.memory_space<vmem>>, vector<1x512xf32>,
    return
  }
  func.func @transform_0(%arg0: i32) -> (i32, i32) {
    %c0_i32 = arith.constant 0 : i32
    %c0_i32_0 = arith.constant 0 : i32
    return %arg0, %c0_i32 : i32, i32
  }
  func.func @transform_1(%arg0: i32) -> (i32, i32) {
    %c0_i32 = arith.constant 0 : i32
    %c0_i32_0 = arith.constant 0 : i32
    %c0_i32_1 = arith.constant 0 : i32
    return %c0_i32, %c0_i32_0 : i32, i32
  }
  func.func @transform_2(%arg0: i32) -> (i32, i32) {
    %c0_i32 = arith.constant 0 : i32
    %c0_i32_0 = arith.constant 0 : i32
    %c0_i32_1 = arith.constant 0 : i32
    return %c0_i32, %c0_i32_0 : i32, i32
  }
  func.func @transform_3(%arg0: i32) -> (i32, i32) {
    %c0_i32 = arith.constant 0 : i32
    %c0_i32_0 = arith.constant 0 : i32
    %c0_i32_1 = arith.constant 0 : i32
    return %c0_i32, %c0_i32_0 : i32, i32
  }
  func.func @transform_4(%arg0: i32) -> (i32, i32) {
    %c0_i32 = arith.constant 0 : i32
    %c0_i32_0 = arith.constant 0 : i32
    %c0_i32_1 = arith.constant 0 : i32
    return %c0_i32, %c0_i32_0 : i32, i32
  }
  func.func @transform_5(%arg0: i32) -> (i32, i32) {
    %c0_i32 = arith.constant 0 : i32
    %c0_i32_0 = arith.constant 0 : i32
    %c0_i32_1 = arith.constant 0 : i32
    return %c0_i32, %c0_i32_0 : i32, i32
  }
  func.func @transform_6(%arg0: i32) -> (i32, i32) {
    %c0_i32 = arith.constant 0 : i32
    %c0_i32_0 = arith.constant 0 : i32
    %c0_i32_1 = arith.constant 0 : i32
    return %c0_i32, %c0_i32_0 : i32, i32
  }
  func.func @transform_7(%arg0: i32) -> (i32, i32) {
    %c0_i32 = arith.constant 0 : i32
    %c0_i32_0 = arith.constant 0 : i32
    %c0_i32_1 = arith.constant 0 : i32
    return %c0_i32, %c0_i32_0 : i32, i32
  }
  func.func @transform_8(%arg0: i32) -> (i32, i32) {
    %c0_i32 = arith.constant 0 : i32
    %c0_i32_0 = arith.constant 0 : i32
    %c0_i32_1 = arith.constant 0 : i32
    return %c0_i32, %c0_i32_0 : i32, i32
  }
  func.func @transform_9(%arg0: i32) -> (i32, i32) {
    %c0_i32 = arith.constant 0 : i32
    %c0_i32_0 = arith.constant 0 : i32
    return %c0_i32, %arg0 : i32, i32
  }
}

</mosaic_0001>

<llo_original>
// kernel: deep_mlp_forward.1
$region0: #{deep_mlp_forward.1}
  #allocation0 [shape = 'u32[]', space=smem, size = 0x4, offset = 0x4, fixed_abs, tag = 'smem constant byte address 0x4 - core index']
  #allocation1 [shape = 'u32[144,128]{1,0:T(1,128)}', space=vmem, size = 0x12000, scoped, tag = 'internal scratch']
  #allocation2 [shape = 'f32[1,1]{1,0:T(1,128)S(1)}', space=vmem, size = 0x200, scoped, tag = 'scoped memory for deep_mlp_forward.1']
  %s0 = inlined_call_operand.vmem [shape: f32[512,32], index: 0, kind: input, shape index: {}]
  %s1 = inlined_call_operand.vmem [shape: bf16[32,512], index: 1, kind: input, shape index: {}]
  %s2 = inlined_call_operand.vmem [shape: f32[1,512], index: 2, kind: input, shape index: {}]
  %s3 = inlined_call_operand.vmem [shape: bf16[512,256], index: 3, kind: input, shape index: {}]
  %s4 = inlined_call_operand.vmem [shape: f32[1,256], index: 4, kind: input, shape index: {}]
  %s5 = inlined_call_operand.vmem [shape: bf16[256,128], index: 5, kind: input, shape index: {}]
  %s6 = inlined_call_operand.vmem [shape: f32[1,128], index: 6, kind: input, shape index: {}]
  %s7 = inlined_call_operand.vmem [shape: f32[1,128], index: 7, kind: input, shape index: {}]
  %s8 = inlined_call_operand.<no memory space> [shape: f32[1,1], index: 8, kind: input, shape index: {}]
  %s9 = inlined_call_operand.vmem [shape: f32[1,512], index: 9, kind: output, shape index: {}]
  %s10 = sld [smem:[#allocation0]]
  $region46: #{deep_mlp_forward.1} parent=0
    _
  %s12 = ssub.s32 1, %s10
  %s13 = scalar_select 0, %s12, %s10
  %v14 = vstv %s8
  %15 = vst [vmem:[#allocation2] sm:$0x1] %v14
  // Predicated region
  $region2: #{deep_mlp_forward.1} parent=0 // pred_check
    _
  $region3: #{deep_mlp_forward.1} parent=0 // pred_check_branch
    %17 = sbr.rel (0) target = $region5
  $region4: #{deep_mlp_forward.1} parent=0 // pred_region
    _
  $region5: #{deep_mlp_forward.1} parent=0 // pred_fallthru
    _
  // Predicated region
  $region6: #{deep_mlp_forward.1} parent=0 // pred_check
    _
  $region7: #{deep_mlp_forward.1} parent=0 // pred_check_branch
    %19 = sbr.rel (0) target = $region9
  $region8: #{deep_mlp_forward.1} parent=0 // pred_region
    _
  $region9: #{deep_mlp_forward.1} parent=0 // pred_fallthru
    _
  // Predicated region
  $region10: #{deep_mlp_forward.1} parent=0 // pred_check
    _
  $region11: #{deep_mlp_forward.1} parent=0 // pred_check_branch
    %21 = sbr.rel (0) target = $region13
  $region12: #{deep_mlp_forward.1} parent=0 // pred_region
    _
  $region13: #{deep_mlp_forward.1} parent=0 // pred_fallthru
    _
  // Predicated region
  $region14: #{deep_mlp_forward.1} parent=0 // pred_check
    _
  $region15: #{deep_mlp_forward.1} parent=0 // pred_check_branch
    %23 = sbr.rel (0) target = $region17
  $region16: #{deep_mlp_forward.1} parent=0 // pred_region
    _
  $region17: #{deep_mlp_forward.1} parent=0 // pred_fallthru
    _
  // Predicated region
  $region18: #{deep_mlp_forward.1} parent=0 // pred_check
    _
  $region19: #{deep_mlp_forward.1} parent=0 // pred_check_branch
    %25 = sbr.rel (0) target = $region21
  $region20: #{deep_mlp_forward.1} parent=0 // pred_region
    _
  $region21: #{deep_mlp_forward.1} parent=0 // pred_fallthru
    _
  // Predicated region
  $region22: #{deep_mlp_forward.1} parent=0 // pred_check
    _
  $region23: #{deep_mlp_forward.1} parent=0 // pred_check_branch
    %27 = sbr.rel (0) target = $region25
  $region24: #{deep_mlp_forward.1} parent=0 // pred_region
    _
  $region25: #{deep_mlp_forward.1} parent=0 // pred_fallthru
    _
  // Predicated region
  $region26: #{deep_mlp_forward.1} parent=0 // pred_check
    _
  $region27: #{deep_mlp_forward.1} parent=0 // pred_check_branch
    %29 = sbr.rel (0) target = $region29
  $region28: #{deep_mlp_forward.1} parent=0 // pred_region
    _
  $region29: #{deep_mlp_forward.1} parent=0 // pred_fallthru
    _
  // Predicated region
  $region30: #{deep_mlp_forward.1} parent=0 // pred_check
    _
  $region31: #{deep_mlp_forward.1} parent=0 // pred_check_branch
    %31 = sbr.rel (0) target = $region33
  $region32: #{deep_mlp_forward.1} parent=0 // pred_region
    _
  $region33: #{deep_mlp_forward.1} parent=0 // pred_fallthru
    _
  // Predicated region
  $region34: #{deep_mlp_forward.1} parent=0 // pred_check
    _
  $region35: #{deep_mlp_forward.1} parent=0 // pred_check_branch
    %33 = sbr.rel (0) target = $region37
  $region36: #{deep_mlp_forward.1} parent=0 // pred_region
    _
  $region37: #{deep_mlp_forward.1} parent=0 // pred_fallthru
    _
  %v35 = vld [vmem:[%s0] sm:$0xff]
  %v36 = vld [vmem:[%s0 + $0x8] sm:$0xff]
  %v37 = vld [vmem:[%s0 + $0x10] sm:$0xff]
  %v38 = vld [vmem:[%s0 + $0x18] sm:$0xff]
  %v39 = vld [vmem:[%s0 + $0x20] sm:$0xff]
  %v40 = vld [vmem:[%s0 + $0x28] sm:$0xff]
  %v41 = vld [vmem:[%s0 + $0x30] sm:$0xff]
  %v42 = vld [vmem:[%s0 + $0x38] sm:$0xff]
  %v43 = vld [vmem:[%s0 + $0x40] sm:$0xff]
  %v44 = vld [vmem:[%s0 + $0x48] sm:$0xff]
  %v45 = vld [vmem:[%s0 + $0x50] sm:$0xff]
  %v46 = vld [vmem:[%s0 + $0x58] sm:$0xff]
  %v47 = vld [vmem:[%s0 + $0x60] sm:$0xff]
  %v48 = vld [vmem:[%s0 + $0x68] sm:$0xff]
  %v49 = vld [vmem:[%s0 + $0x70] sm:$0xff]
  %v50 = vld [vmem:[%s0 + $0x78] sm:$0xff]
  %v51 = vld [vmem:[%s0 + $0x80] sm:$0xff]
  %v52 = vld [vmem:[%s0 + $0x88] sm:$0xff]
  %v53 = vld [vmem:[%s0 + $0x90] sm:$0xff]
  %v54 = vld [vmem:[%s0 + $0x98] sm:$0xff]
  %v55 = vld [vmem:[%s0 + $0xa0] sm:$0xff]
  %v56 = vld [vmem:[%s0 + $0xa8] sm:$0xff]
  %v57 = vld [vmem:[%s0 + $0xb0] sm:$0xff]
  %v58 = vld [vmem:[%s0 + $0xb8] sm:$0xff]
  %v59 = vld [vmem:[%s0 + $0xc0] sm:$0xff]
  %v60 = vld [vmem:[%s0 + $0xc8] sm:$0xff]
  %v61 = vld [vmem:[%s0 + $0xd0] sm:$0xff]
  %v62 = vld [vmem:[%s0 + $0xd8] sm:$0xff]
  %v63 = vld [vmem:[%s0 + $0xe0] sm:$0xff]
  %v64 = vld [vmem:[%s0 + $0xe8] sm:$0xff]
  %v65 = vld [vmem:[%s0 + $0xf0] sm:$0xff]
  %v66 = vld [vmem:[%s0 + $0xf8] sm:$0xff]
  %v67 = vld [vmem:[%s0 + $0x100] sm:$0xff]
  %v68 = vld [vmem:[%s0 + $0x108] sm:$0xff]
  %v69 = vld [vmem:[%s0 + $0x110] sm:$0xff]
  %v70 = vld [vmem:[%s0 + $0x118] sm:$0xff]
  %v71 = vld [vmem:[%s0 + $0x120] sm:$0xff]
  %v72 = vld [vmem:[%s0 + $0x128] sm:$0xff]
  %v73 = vld [vmem:[%s0 + $0x130] sm:$0xff]
  %v74 = vld [vmem:[%s0 + $0x138] sm:$0xff]
  %v75 = vld [vmem:[%s0 + $0x140] sm:$0xff]
  %v76 = vld [vmem:[%s0 + $0x148] sm:$0xff]
  %v77 = vld [vmem:[%s0 + $0x150] sm:$0xff]
  %v78 = vld [vmem:[%s0 + $0x158] sm:$0xff]
  %v79 = vld [vmem:[%s0 + $0x160] sm:$0xff]
  %v80 = vld [vmem:[%s0 + $0x168] sm:$0xff]
  %v81 = vld [vmem:[%s0 + $0x170] sm:$0xff]
  %v82 = vld [vmem:[%s0 + $0x178] sm:$0xff]
  %v83 = vld [vmem:[%s0 + $0x180] sm:$0xff]
  %v84 = vld [vmem:[%s0 + $0x188] sm:$0xff]
  %v85 = vld [vmem:[%s0 + $0x190] sm:$0xff]
  %v86 = vld [vmem:[%s0 + $0x198] sm:$0xff]
  %v87 = vld [vmem:[%s0 + $0x1a0] sm:$0xff]
  %v88 = vld [vmem:[%s0 + $0x1a8] sm:$0xff]
  %v89 = vld [vmem:[%s0 + $0x1b0] sm:$0xff]
  %v90 = vld [vmem:[%s0 + $0x1b8] sm:$0xff]
  %v91 = vld [vmem:[%s0 + $0x1c0] sm:$0xff]
  %v92 = vld [vmem:[%s0 + $0x1c8] sm:$0xff]
  %v93 = vld [vmem:[%s0 + $0x1d0] sm:$0xff]
  %v94 = vld [vmem:[%s0 + $0x1d8] sm:$0xff]
  %v95 = vld [vmem:[%s0 + $0x1e0] sm:$0xff]
  %v96 = vld [vmem:[%s0 + $0x1e8] sm:$0xff]
  %v97 = vld [vmem:[%s0 + $0x1f0] sm:$0xff]
  %v98 = vld [vmem:[%s0 + $0x1f8] sm:$0xff]
  %v99 = vpack.c.bf16 %v36, %v35
  %v100 = vpack.c.bf16 %v38, %v37
  %v101 = vpack.c.bf16 %v40, %v39
  %v102 = vpack.c.bf16 %v42, %v41
  %v103 = vpack.c.bf16 %v44, %v43
  %v104 = vpack.c.bf16 %v46, %v45
  %v105 = vpack.c.bf16 %v48, %v47
  %v106 = vpack.c.bf16 %v50, %v49
  %v107 = vpack.c.bf16 %v52, %v51
  %v108 = vpack.c.bf16 %v54, %v53
  %v109 = vpack.c.bf16 %v56, %v55
  %v110 = vpack.c.bf16 %v58, %v57
  %v111 = vpack.c.bf16 %v60, %v59
  %v112 = vpack.c.bf16 %v62, %v61
  %v113 = vpack.c.bf16 %v64, %v63
  %v114 = vpack.c.bf16 %v66, %v65
  %v115 = vpack.c.bf16 %v68, %v67
  %v116 = vpack.c.bf16 %v70, %v69
  %v117 = vpack.c.bf16 %v72, %v71
  %v118 = vpack.c.bf16 %v74, %v73
  %v119 = vpack.c.bf16 %v76, %v75
  %v120 = vpack.c.bf16 %v78, %v77
  %v121 = vpack.c.bf16 %v80, %v79
  %v122 = vpack.c.bf16 %v82, %v81
  %v123 = vpack.c.bf16 %v84, %v83
  %v124 = vpack.c.bf16 %v86, %v85
  %v125 = vpack.c.bf16 %v88, %v87
  %v126 = vpack.c.bf16 %v90, %v89
  %v127 = vpack.c.bf16 %v92, %v91
  %v128 = vpack.c.bf16 %v94, %v93
  %v129 = vpack.c.bf16 %v96, %v95
  %v130 = vpack.c.bf16 %v98, %v97
  %v131 = vld [vmem:[%s1] sm:$0xff]
  %v132 = vld [vmem:[%s1 + $0x8] sm:$0xff]
  %v133 = vld [vmem:[%s1 + $0x10] sm:$0xff]
  %v134 = vld [vmem:[%s1 + $0x18] sm:$0xff]
  %v135 = vld [vmem:[%s1 + $0x20] sm:$0xff]
  %v136 = vld [vmem:[%s1 + $0x28] sm:$0xff]
  %v137 = vld [vmem:[%s1 + $0x30] sm:$0xff]
  %v138 = vld [vmem:[%s1 + $0x38] sm:$0xff]
  %v139 = vld [vmem:[%s2] sm:$0xf]
  %v141 = vlaneseq
  %v142 = vshrl.u32 %v141, 7
  %v143 = vsub.s32 0, %v142
  %v144 = vrot.slane %v139, %v143
  %v145 = vlaneseq
  %v146 = vshrl.u32 %v145, 7
  %v147 = vsub.s32 1, %v146
  %v148 = vrot.slane %v139, %v147
  %v149 = vlaneseq
  %v150 = vshrl.u32 %v149, 7
  %v151 = vsub.s32 2, %v150
  %v152 = vrot.slane %v139, %v151
  %v153 = vlaneseq
  %v154 = vshrl.u32 %v153, 7
  %v155 = vsub.s32 3, %v154
  %v156 = vrot.slane %v139, %v155
  %v169 = vunpack.c.l.b16 %v131
  %v170 = vunpack.c.h.b16 %v131
  %v171 = vunpack.c.l.b16 %v132
  %v172 = vunpack.c.h.b16 %v132
  %v173 = vunpack.c.l.b16 %v133
  %v174 = vunpack.c.h.b16 %v133
  %v175 = vunpack.c.l.b16 %v134
  %v176 = vunpack.c.h.b16 %v134
  %v177 = vunpack.c.l.b16 %v135
  %v178 = vunpack.c.h.b16 %v135
  %v179 = vunpack.c.l.b16 %v136
  %v180 = vunpack.c.h.b16 %v136
  %v181 = vunpack.c.l.b16 %v137
  %v182 = vunpack.c.h.b16 %v137
  %v183 = vunpack.c.l.b16 %v138
  %v184 = vunpack.c.h.b16 %v138
  %v185 = vpack.c.b16 %v173, %v169
  %v186 = vpack.c.b16 %v174, %v170
  %v187 = vpack.c.b16 %v175, %v171
  %v188 = vpack.c.b16 %v176, %v172
  %v189 = vpack.c.b16 %v181, %v177
  %v190 = vpack.c.b16 %v182, %v178
  %v191 = vpack.c.b16 %v183, %v179
  %v192 = vpack.c.b16 %v184, %v180
  %vm201 = vcmask 261120
  %v203 = vsel %vm201, %v99, 0
  %v206 = vsel %vm201, %v100, 0
  %v209 = vsel %vm201, %v101, 0
  %v212 = vsel %vm201, %v102, 0
  %v215 = vsel %vm201, %v103, 0
  %v218 = vsel %vm201, %v104, 0
  %v221 = vsel %vm201, %v105, 0
  %v224 = vsel %vm201, %v106, 0
  %v227 = vsel %vm201, %v107, 0
  %v230 = vsel %vm201, %v108, 0
  %v233 = vsel %vm201, %v109, 0
  %v236 = vsel %vm201, %v110, 0
  %v239 = vsel %vm201, %v111, 0
  %v242 = vsel %vm201, %v112, 0
  %v245 = vsel %vm201, %v113, 0
  %v248 = vsel %vm201, %v114, 0
  %v251 = vsel %vm201, %v115, 0
  %v254 = vsel %vm201, %v116, 0
  %v257 = vsel %vm201, %v117, 0
  %v260 = vsel %vm201, %v118, 0
  %v263 = vsel %vm201, %v119, 0
  %v266 = vsel %vm201, %v120, 0
  %v269 = vsel %vm201, %v121, 0
  %v272 = vsel %vm201, %v122, 0
  %v275 = vsel %vm201, %v123, 0
  %v278 = vsel %vm201, %v124, 0
  %v281 = vsel %vm201, %v125, 0
  %v284 = vsel %vm201, %v126, 0
  %v287 = vsel %vm201, %v127, 0
  %v290 = vsel %vm201, %v128, 0
  %v293 = vsel %vm201, %v129, 0
  %v296 = vsel %vm201, %v130, 0
  %298 = vmatprep.subr.bf16.mxu0 %v186
  %299 = vmatpush1.bf16.msra.mxu0 %v185
  %300 = vmatprep.subr.bf16.mxu0 %v190
  %301 = vmatpush1.bf16.msra.mxu0 %v189
  %302 = vmatprep.subr.bf16.mxu0 0
  %303 = vmatpush1.bf16.msra.mxu0 0
  %304 = vmatprep.subr.bf16.mxu0 0
  %305 = vmatpush1.bf16.msra.mxu0 0
  %306 = vmatprep.subr.bf16.mxu0 0
  %307 = vmatpush1.bf16.msra.mxu0 0
  %308 = vmatprep.subr.bf16.mxu0 0
  %309 = vmatpush1.bf16.msra.mxu0 0
  %310 = vmatprep.subr.bf16.mxu0 0
  %311 = vmatpush1.bf16.msra.mxu0 0
  %312 = vmatprep.subr.bf16.mxu0 0
  %313 = vmatpush1.bf16.msra.mxu0 0
  %314 = vmatprep.subr.bf16.mxu0 0
  %315 = vmatpush1.bf16.msra.mxu0 0
  %316 = vmatprep.subr.bf16.mxu0 0
  %317 = vmatpush1.bf16.msra.mxu0 0
  %318 = vmatprep.subr.bf16.mxu0 0
  %319 = vmatpush1.bf16.msra.mxu0 0
  %320 = vmatprep.subr.bf16.mxu0 0
  %321 = vmatpush1.bf16.msra.mxu0 0
  %322 = vmatprep.subr.bf16.mxu0 0
  %323 = vmatpush1.bf16.msra.mxu0 0
  %324 = vmatprep.subr.bf16.mxu0 0
  %325 = vmatpush1.bf16.msra.mxu0 0
  %326 = vmatprep.subr.bf16.mxu0 0
  %327 = vmatpush1.bf16.msra.mxu0 0
  %328 = vmatprep.subr.bf16.mxu0 0
  %329 = vmatpush1.bf16.msra.mxu0 0
  %330 = vmatprep.mubr.bf16.mxu0 0
  %331 = vmatmul.mubr.bf16.gmra.mrb[0].mxu0 %v203
  %v332 = vpop.f32.mrb[0].mxu0
  %v333 = vadd.f32 %v144, %v332
  %v334 = vpop.f32.mrb[0].mxu0
  %v335 = vadd.f32 %v148, %v334
  %v336 = vpop.f32.mrb[0].mxu0
  %v337 = vadd.f32 %v144, %v336
  %v338 = vpop.f32.mrb[0].mxu0
  %v339 = vadd.f32 %v148, %v338
  %340 = vmatprep.mubr.bf16.mxu0 0
  %341 = vmatmul.mubr.bf16.gmra.mrb[0].mxu0 %v206
  %v342 = vpop.f32.mrb[0].mxu0
  %v343 = vadd.f32 %v144, %v342
  %v344 = vpop.f32.mrb[0].mxu0
  %v345 = vadd.f32 %v148, %v344
  %v346 = vpop.f32.mrb[0].mxu0
  %v347 = vadd.f32 %v144, %v346
  %v348 = vpop.f32.mrb[0].mxu0
  %v349 = vadd.f32 %v148, %v348
  %350 = vmatprep.mubr.bf16.mxu0 0
  %351 = vmatmul.mubr.bf16.gmra.mrb[0].mxu0 %v209
  %v352 = vpop.f32.mrb[0].mxu0
  %v353 = vadd.f32 %v144, %v352
  %v354 = vpop.f32.mrb[0].mxu0
  %v355 = vadd.f32 %v148, %v354
  %v356 = vpop.f32.mrb[0].mxu0
  %v357 = vadd.f32 %v144, %v356
  %v358 = vpop.f32.mrb[0].mxu0
  %v359 = vadd.f32 %v148, %v358
  %360 = vmatprep.mubr.bf16.mxu0 0
  %361 = vmatmul.mubr.bf16.gmra.mrb[0].mxu0 %v212
  %v362 = vpop.f32.mrb[0].mxu0
  %v363 = vadd.f32 %v144, %v362
  %v364 = vpop.f32.mrb[0].mxu0
  %v365 = vadd.f32 %v148, %v364
  %v366 = vpop.f32.mrb[0].mxu0
  %v367 = vadd.f32 %v144, %v366
  %v368 = vpop.f32.mrb[0].mxu0
  %v369 = vadd.f32 %v148, %v368
  %370 = vmatprep.mubr.bf16.mxu0 0
  %371 = vmatmul.mubr.bf16.gmra.mrb[0].mxu0 %v215
  %v372 = vpop.f32.mrb[0].mxu0
  %v373 = vadd.f32 %v144, %v372
  %v374 = vpop.f32.mrb[0].mxu0
  %v375 = vadd.f32 %v148, %v374
  %v376 = vpop.f32.mrb[0].mxu0
  %v377 = vadd.f32 %v144, %v376
  %v378 = vpop.f32.mrb[0].mxu0
  %v379 = vadd.f32 %v148, %v378
  %380 = vmatprep.mubr.bf16.mxu0 0
  %381 = vmatmul.mubr.bf16.gmra.mrb[0].mxu0 %v218
  %v382 = vpop.f32.mrb[0].mxu0
  %v383 = vadd.f32 %v144, %v382
  %v384 = vpop.f32.mrb[0].mxu0
  %v385 = vadd.f32 %v148, %v384
  %v386 = vpop.f32.mrb[0].mxu0
  %v387 = vadd.f32 %v144, %v386
  %v388 = vpop.f32.mrb[0].mxu0
  %v389 = vadd.f32 %v148, %v388
  %390 = vmatprep.mubr.bf16.mxu0 0
  %391 = vmatmul.mubr.bf16.gmra.mrb[0].mxu0 %v221
  %v392 = vpop.f32.mrb[0].mxu0
  %v393 = vadd.f32 %v144, %v392
  %v394 = vpop.f32.mrb[0].mxu0
  %v395 = vadd.f32 %v148, %v394
  %v396 = vpop.f32.mrb[0].mxu0
  %v397 = vadd.f32 %v144, %v396
  %v398 = vpop.f32.mrb[0].mxu0
  %v399 = vadd.f32 %v148, %v398
  %400 = vmatprep.mubr.bf16.mxu0 0
  %401 = vmatmul.mubr.bf16.gmra.mrb[0].mxu0 %v224
  %v402 = vpop.f32.mrb[0].mxu0
  %v403 = vadd.f32 %v144, %v402
  %v404 = vpop.f32.mrb[0].mxu0
  %v405 = vadd.f32 %v148, %v404
  %v406 = vpop.f32.mrb[0].mxu0
  %v407 = vadd.f32 %v144, %v406
  %v408 = vpop.f32.mrb[0].mxu0
  %v409 = vadd.f32 %v148, %v408
  %410 = vmatprep.mubr.bf16.mxu0 0
  %411 = vmatmul.mubr.bf16.gmra.mrb[0].mxu0 %v227
  %v412 = vpop.f32.mrb[0].mxu0
  %v413 = vadd.f32 %v144, %v412
  %v414 = vpop.f32.mrb[0].mxu0
  %v415 = vadd.f32 %v148, %v414
  %v416 = vpop.f32.mrb[0].mxu0
  %v417 = vadd.f32 %v144, %v416
  %v418 = vpop.f32.mrb[0].mxu0
  %v419 = vadd.f32 %v148, %v418
  %420 = vmatprep.mubr.bf16.mxu0 0
  %421 = vmatmul.mubr.bf16.gmra.mrb[0].mxu0 %v230
  %v422 = vpop.f32.mrb[0].mxu0
  %v423 = vadd.f32 %v144, %v422
  %v424 = vpop.f32.mrb[0].mxu0
  %v425 = vadd.f32 %v148, %v424
  %v426 = vpop.f32.mrb[0].mxu0
  %v427 = vadd.f32 %v144, %v426
  %v428 = vpop.f32.mrb[0].mxu0
  %v429 = vadd.f32 %v148, %v428
  %430 = vmatprep.mubr.bf16.mxu0 0
  %431 = vmatmul.mubr.bf16.gmra.mrb[0].mxu0 %v233
  %v432 = vpop.f32.mrb[0].mxu0
  %v433 = vadd.f32 %v144, %v432
  %v434 = vpop.f32.mrb[0].mxu0
  %v435 = vadd.f32 %v148, %v434
  %v436 = vpop.f32.mrb[0].mxu0
  %v437 = vadd.f32 %v144, %v436
  %v438 = vpop.f32.mrb[0].mxu0
  %v439 = vadd.f32 %v148, %v438
  %440 = vmatprep.mubr.bf16.mxu0 0
  %441 = vmatmul.mubr.bf16.gmra.mrb[0].mxu0 %v236
  %v442 = vpop.f32.mrb[0].mxu0
  %v443 = vadd.f32 %v144, %v442
  %v444 = vpop.f32.mrb[0].mxu0
  %v445 = vadd.f32 %v148, %v444
  %v446 = vpop.f32.mrb[0].mxu0
  %v447 = vadd.f32 %v144, %v446
  %v448 = vpop.f32.mrb[0].mxu0
  %v449 = vadd.f32 %v148, %v448
  %450 = vmatprep.mubr.bf16.mxu0 0
  %451 = vmatmul.mubr.bf16.gmra.mrb[0].mxu0 %v239
  %v452 = vpop.f32.mrb[0].mxu0
  %v453 = vadd.f32 %v144, %v452
  %v454 = vpop.f32.mrb[0].mxu0
  %v455 = vadd.f32 %v148, %v454
  %v456 = vpop.f32.mrb[0].mxu0
  %v457 = vadd.f32 %v144, %v456
  %v458 = vpop.f32.mrb[0].mxu0
  %v459 = vadd.f32 %v148, %v458
  %460 = vmatprep.mubr.bf16.mxu0 0
  %461 = vmatmul.mubr.bf16.gmra.mrb[0].mxu0 %v242
  %v462 = vpop.f32.mrb[0].mxu0
  %v463 = vadd.f32 %v144, %v462
  %v464 = vpop.f32.mrb[0].mxu0
  %v465 = vadd.f32 %v148, %v464
  %v466 = vpop.f32.mrb[0].mxu0
  %v467 = vadd.f32 %v144, %v466
  %v468 = vpop.f32.mrb[0].mxu0
  %v469 = vadd.f32 %v148, %v468
  %470 = vmatprep.mubr.bf16.mxu0 0
  %471 = vmatmul.mubr.bf16.gmra.mrb[0].mxu0 %v245
  %v472 = vpop.f32.mrb[0].mxu0
  %v473 = vadd.f32 %v144, %v472
  %v474 = vpop.f32.mrb[0].mxu0
  %v475 = vadd.f32 %v148, %v474
  %v476 = vpop.f32.mrb[0].mxu0
  %v477 = vadd.f32 %v144, %v476
  %v478 = vpop.f32.mrb[0].mxu0
  %v479 = vadd.f32 %v148, %v478
  %480 = vmatprep.mubr.bf16.mxu0 0
  %481 = vmatmul.mubr.bf16.gmra.mrb[0].mxu0 %v248
  %v482 = vpop.f32.mrb[0].mxu0
  %v483 = vadd.f32 %v144, %v482
  %v484 = vpop.f32.mrb[0].mxu0
  %v485 = vadd.f32 %v148, %v484
  %v486 = vpop.f32.mrb[0].mxu0
  %v487 = vadd.f32 %v144, %v486
  %v488 = vpop.f32.mrb[0].mxu0
  %v489 = vadd.f32 %v148, %v488
  %490 = vmatprep.mubr.bf16.mxu0 0
  %491 = vmatmul.mubr.bf16.gmra.mrb[0].mxu0 %v251
  %v492 = vpop.f32.mrb[0].mxu0
  %v493 = vadd.f32 %v144, %v492
  %v494 = vpop.f32.mrb[0].mxu0
  %v495 = vadd.f32 %v148, %v494
  %v496 = vpop.f32.mrb[0].mxu0
  %v497 = vadd.f32 %v144, %v496
  %v498 = vpop.f32.mrb[0].mxu0
  %v499 = vadd.f32 %v148, %v498
  %500 = vmatprep.mubr.bf16.mxu0 0
  %501 = vmatmul.mubr.bf16.gmra.mrb[0].mxu0 %v254
  %v502 = vpop.f32.mrb[0].mxu0
  %v503 = vadd.f32 %v144, %v502
  %v504 = vpop.f32.mrb[0].mxu0
  %v505 = vadd.f32 %v148, %v504
  %v506 = vpop.f32.mrb[0].mxu0
  %v507 = vadd.f32 %v144, %v506
  %v508 = vpop.f32.mrb[0].mxu0
  %v509 = vadd.f32 %v148, %v508
  %510 = vmatprep.mubr.bf16.mxu0 0
  %511 = vmatmul.mubr.bf16.gmra.mrb[0].mxu0 %v257
  %v512 = vpop.f32.mrb[0].mxu0
  %v513 = vadd.f32 %v144, %v512
  %v514 = vpop.f32.mrb[0].mxu0
  %v515 = vadd.f32 %v148, %v514
  %v516 = vpop.f32.mrb[0].mxu0
  %v517 = vadd.f32 %v144, %v516
  %v518 = vpop.f32.mrb[0].mxu0
  %v519 = vadd.f32 %v148, %v518
  %520 = vmatprep.mubr.bf16.mxu0 0
  %521 = vmatmul.mubr.bf16.gmra.mrb[0].mxu0 %v260
  %v522 = vpop.f32.mrb[0].mxu0
  %v523 = vadd.f32 %v144, %v522
  %v524 = vpop.f32.mrb[0].mxu0
  %v525 = vadd.f32 %v148, %v524
  %v526 = vpop.f32.mrb[0].mxu0
  %v527 = vadd.f32 %v144, %v526
  %v528 = vpop.f32.mrb[0].mxu0
  %v529 = vadd.f32 %v148, %v528
  %530 = vmatprep.mubr.bf16.mxu0 0
  %531 = vmatmul.mubr.bf16.gmra.mrb[0].mxu0 %v263
  %v532 = vpop.f32.mrb[0].mxu0
  %v533 = vadd.f32 %v144, %v532
  %v534 = vpop.f32.mrb[0].mxu0
  %v535 = vadd.f32 %v148, %v534
  %v536 = vpop.f32.mrb[0].mxu0
  %v537 = vadd.f32 %v144, %v536
  %v538 = vpop.f32.mrb[0].mxu0
  %v539 = vadd.f32 %v148, %v538
  %540 = vmatprep.mubr.bf16.mxu0 0
  %541 = vmatmul.mubr.bf16.gmra.mrb[0].mxu0 %v266
  %v542 = vpop.f32.mrb[0].mxu0
  %v543 = vadd.f32 %v144, %v542
  %v544 = vpop.f32.mrb[0].mxu0
  %v545 = vadd.f32 %v148, %v544
  %v546 = vpop.f32.mrb[0].mxu0
  %v547 = vadd.f32 %v144, %v546
  %v548 = vpop.f32.mrb[0].mxu0
  %v549 = vadd.f32 %v148, %v548
  %550 = vmatprep.mubr.bf16.mxu0 0
  %551 = vmatmul.mubr.bf16.gmra.mrb[0].mxu0 %v269
  %v552 = vpop.f32.mrb[0].mxu0
  %v553 = vadd.f32 %v144, %v552
  %v554 = vpop.f32.mrb[0].mxu0
  %v555 = vadd.f32 %v148, %v554
  %v556 = vpop.f32.mrb[0].mxu0
  %v557 = vadd.f32 %v144, %v556
  %v558 = vpop.f32.mrb[0].mxu0
  %v559 = vadd.f32 %v148, %v558
  %560 = vmatprep.mubr.bf16.mxu0 0
  %561 = vmatmul.mubr.bf16.gmra.mrb[0].mxu0 %v272
  %v562 = vpop.f32.mrb[0].mxu0
  %v563 = vadd.f32 %v144, %v562
  %v564 = vpop.f32.mrb[0].mxu0
  %v565 = vadd.f32 %v148, %v564
  %v566 = vpop.f32.mrb[0].mxu0
  %v567 = vadd.f32 %v144, %v566
  %v568 = vpop.f32.mrb[0].mxu0
  %v569 = vadd.f32 %v148, %v568
  %570 = vmatprep.mubr.bf16.mxu0 0
  %571 = vmatmul.mubr.bf16.gmra.mrb[0].mxu0 %v275
  %v572 = vpop.f32.mrb[0].mxu0
  %v573 = vadd.f32 %v144, %v572
  %v574 = vpop.f32.mrb[0].mxu0
  %v575 = vadd.f32 %v148, %v574
  %v576 = vpop.f32.mrb[0].mxu0
  %v577 = vadd.f32 %v144, %v576
  %v578 = vpop.f32.mrb[0].mxu0
  %v579 = vadd.f32 %v148, %v578
  %580 = vmatprep.mubr.bf16.mxu0 0
  %581 = vmatmul.mubr.bf16.gmra.mrb[0].mxu0 %v278
  %v582 = vpop.f32.mrb[0].mxu0
  %v583 = vadd.f32 %v144, %v582
  %v584 = vpop.f32.mrb[0].mxu0
  %v585 = vadd.f32 %v148, %v584
  %v586 = vpop.f32.mrb[0].mxu0
  %v587 = vadd.f32 %v144, %v586
  %v588 = vpop.f32.mrb[0].mxu0
  %v589 = vadd.f32 %v148, %v588
  %590 = vmatprep.mubr.bf16.mxu0 0
  %591 = vmatmul.mubr.bf16.gmra.mrb[0].mxu0 %v281
  %v592 = vpop.f32.mrb[0].mxu0
  %v593 = vadd.f32 %v144, %v592
  %v594 = vpop.f32.mrb[0].mxu0
  %v595 = vadd.f32 %v148, %v594
  %v596 = vpop.f32.mrb[0].mxu0
  %v597 = vadd.f32 %v144, %v596
  %v598 = vpop.f32.mrb[0].mxu0
  %v599 = vadd.f32 %v148, %v598
  %600 = vmatprep.mubr.bf16.mxu0 0
  %601 = vmatmul.mubr.bf16.gmra.mrb[0].mxu0 %v284
  %v602 = vpop.f32.mrb[0].mxu0
  %v603 = vadd.f32 %v144, %v602
  %v604 = vpop.f32.mrb[0].mxu0
  %v605 = vadd.f32 %v148, %v604
  %v606 = vpop.f32.mrb[0].mxu0
  %v607 = vadd.f32 %v144, %v606
  %v608 = vpop.f32.mrb[0].mxu0
  %v609 = vadd.f32 %v148, %v608
  %610 = vmatprep.mubr.bf16.mxu0 0
  %611 = vmatmul.mubr.bf16.gmra.mrb[0].mxu0 %v287
  %v612 = vpop.f32.mrb[0].mxu0
  %v613 = vadd.f32 %v144, %v612
  %v614 = vpop.f32.mrb[0].mxu0
  %v615 = vadd.f32 %v148, %v614
  %v616 = vpop.f32.mrb[0].mxu0
  %v617 = vadd.f32 %v144, %v616
  %v618 = vpop.f32.mrb[0].mxu0
  %v619 = vadd.f32 %v148, %v618
  %620 = vmatprep.mubr.bf16.mxu0 0
  %621 = vmatmul.mubr.bf16.gmra.mrb[0].mxu0 %v290
  %v622 = vpop.f32.mrb[0].mxu0
  %v623 = vadd.f32 %v144, %v622
  %v624 = vpop.f32.mrb[0].mxu0
  %v625 = vadd.f32 %v148, %v624
  %v626 = vpop.f32.mrb[0].mxu0
  %v627 = vadd.f32 %v144, %v626
  %v628 = vpop.f32.mrb[0].mxu0
  %v629 = vadd.f32 %v148, %v628
  %630 = vmatprep.mubr.bf16.mxu0 0
  %631 = vmatmul.mubr.bf16.gmra.mrb[0].mxu0 %v293
  %v632 = vpop.f32.mrb[0].mxu0
  %v633 = vadd.f32 %v144, %v632
  %v634 = vpop.f32.mrb[0].mxu0
  %v635 = vadd.f32 %v148, %v634
  %v636 = vpop.f32.mrb[0].mxu0
  %v637 = vadd.f32 %v144, %v636
  %v638 = vpop.f32.mrb[0].mxu0
  %v639 = vadd.f32 %v148, %v638
  %640 = vmatprep.mubr.bf16.mxu0 0
  %641 = vmatmul.mubr.bf16.gmra.mrb[0].mxu0 %v296
  %v642 = vpop.f32.mrb[0].mxu0
  %v643 = vadd.f32 %v144, %v642
  %v644 = vpop.f32.mrb[0].mxu0
  %v645 = vadd.f32 %v148, %v644
  %v646 = vpop.f32.mrb[0].mxu0
  %v647 = vadd.f32 %v144, %v646
  %v648 = vpop.f32.mrb[0].mxu0
  %v649 = vadd.f32 %v148, %v648
  %650 = vdwg.mxu0
  %651 = vmatprep.subr.bf16.mxu0 %v188
  %652 = vmatpush1.bf16.msra.mxu0 %v187
  %653 = vmatprep.subr.bf16.mxu0 %v192
  %654 = vmatpush1.bf16.msra.mxu0 %v191
  %655 = vmatprep.subr.bf16.mxu0 0
  %656 = vmatpush1.bf16.msra.mxu0 0
  %657 = vmatprep.subr.bf16.mxu0 0
  %658 = vmatpush1.bf16.msra.mxu0 0
  %659 = vmatprep.subr.bf16.mxu0 0
  %660 = vmatpush1.bf16.msra.mxu0 0
  %661 = vmatprep.subr.bf16.mxu0 0
  %662 = vmatpush1.bf16.msra.mxu0 0
  %663 = vmatprep.subr.bf16.mxu0 0
  %664 = vmatpush1.bf16.msra.mxu0 0
  %665 = vmatprep.subr.bf16.mxu0 0
  %666 = vmatpush1.bf16.msra.mxu0 0
  %667 = vmatprep.subr.bf16.mxu0 0
  %668 = vmatpush1.bf16.msra.mxu0 0
  %669 = vmatprep.subr.bf16.mxu0 0
  %670 = vmatpush1.bf16.msra.mxu0 0
  %671 = vmatprep.subr.bf16.mxu0 0
  %672 = vmatpush1.bf16.msra.mxu0 0
  %673 = vmatprep.subr.bf16.mxu0 0
  %674 = vmatpush1.bf16.msra.mxu0 0
  %675 = vmatprep.subr.bf16.mxu0 0
  %676 = vmatpush1.bf16.msra.mxu0 0
  %677 = vmatprep.subr.bf16.mxu0 0
  %678 = vmatpush1.bf16.msra.mxu0 0
  %679 = vmatprep.subr.bf16.mxu0 0
  %680 = vmatpush1.bf16.msra.mxu0 0
  %681 = vmatprep.subr.bf16.mxu0 0
  %682 = vmatpush1.bf16.msra.mxu0 0
  %683 = vmatprep.mubr.bf16.mxu0 0
  %684 = vmatmul.mubr.bf16.gmra.mrb[0].mxu0 %v203
  %v685 = vpop.f32.mrb[0].mxu0
  %v686 = vadd.f32 %v152, %v685
  %v687 = vpop.f32.mrb[0].mxu0
  %v688 = vadd.f32 %v156, %v687
  %v689 = vpop.f32.mrb[0].mxu0
  %v690 = vadd.f32 %v152, %v689
  %v691 = vpop.f32.mrb[0].mxu0
  %v692 = vadd.f32 %v156, %v691
  %693 = vmatprep.mubr.bf16.mxu0 0
  %694 = vmatmul.mubr.bf16.gmra.mrb[0].mxu0 %v206
  %v695 = vpop.f32.mrb[0].mxu0
  %v696 = vadd.f32 %v152, %v695
  %v697 = vpop.f32.mrb[0].mxu0
  %v698 = vadd.f32 %v156, %v697
  %v699 = vpop.f32.mrb[0].mxu0
  %v700 = vadd.f32 %v152, %v699
  %v701 = vpop.f32.mrb[0].mxu0
  %v702 = vadd.f32 %v156, %v701
  %703 = vmatprep.mubr.bf16.mxu0 0
  %704 = vmatmul.mubr.bf16.gmra.mrb[0].mxu0 %v209
  %v705 = vpop.f32.mrb[0].mxu0
  %v706 = vadd.f32 %v152, %v705
  %v707 = vpop.f32.mrb[0].mxu0
  %v708 = vadd.f32 %v156, %v707
  %v709 = vpop.f32.mrb[0].mxu0
  %v710 = vadd.f32 %v152, %v709
  %v711 = vpop.f32.mrb[0].mxu0
  %v712 = vadd.f32 %v156, %v711
  %713 = vmatprep.mubr.bf16.mxu0 0
  %714 = vmatmul.mubr.bf16.gmra.mrb[0].mxu0 %v212
  %v715 = vpop.f32.mrb[0].mxu0
  %v716 = vadd.f32 %v152, %v715
  %v717 = vpop.f32.mrb[0].mxu0
  %v718 = vadd.f32 %v156, %v717
  %v719 = vpop.f32.mrb[0].mxu0
  %v720 = vadd.f32 %v152, %v719
  %v721 = vpop.f32.mrb[0].mxu0
  %v722 = vadd.f32 %v156, %v721
  %723 = vmatprep.mubr.bf16.mxu0 0
  %724 = vmatmul.mubr.bf16.gmra.mrb[0].mxu0 %v215
  %v725 = vpop.f32.mrb[0].mxu0
  %v726 = vadd.f32 %v152, %v725
  %v727 = vpop.f32.mrb[0].mxu0
  %v728 = vadd.f32 %v156, %v727
  %v729 = vpop.f32.mrb[0].mxu0
  %v730 = vadd.f32 %v152, %v729
  %v731 = vpop.f32.mrb[0].mxu0
  %v732 = vadd.f32 %v156, %v731
  %733 = vmatprep.mubr.bf16.mxu0 0
  %734 = vmatmul.mubr.bf16.gmra.mrb[0].mxu0 %v218
  %v735 = vpop.f32.mrb[0].mxu0
  %v736 = vadd.f32 %v152, %v735
  %v737 = vpop.f32.mrb[0].mxu0
  %v738 = vadd.f32 %v156, %v737
  %v739 = vpop.f32.mrb[0].mxu0
  %v740 = vadd.f32 %v152, %v739
  %v741 = vpop.f32.mrb[0].mxu0
  %v742 = vadd.f32 %v156, %v741
  %743 = vmatprep.mubr.bf16.mxu0 0
  %744 = vmatmul.mubr.bf16.gmra.mrb[0].mxu0 %v221
  %v745 = vpop.f32.mrb[0].mxu0
  %v746 = vadd.f32 %v152, %v745
  %v747 = vpop.f32.mrb[0].mxu0
  %v748 = vadd.f32 %v156, %v747
  %v749 = vpop.f32.mrb[0].mxu0
  %v750 = vadd.f32 %v152, %v749
  %v751 = vpop.f32.mrb[0].mxu0
  %v752 = vadd.f32 %v156, %v751
  %753 = vmatprep.mubr.bf16.mxu0 0
  %754 = vmatmul.mubr.bf16.gmra.mrb[0].mxu0 %v224
  %v755 = vpop.f32.mrb[0].mxu0
  %v756 = vadd.f32 %v152, %v755
  %v757 = vpop.f32.mrb[0].mxu0
  %v758 = vadd.f32 %v156, %v757
  %v759 = vpop.f32.mrb[0].mxu0
  %v760 = vadd.f32 %v152, %v759
  %v761 = vpop.f32.mrb[0].mxu0
  %v762 = vadd.f32 %v156, %v761
  %763 = vmatprep.mubr.bf16.mxu0 0
  %764 = vmatmul.mubr.bf16.gmra.mrb[0].mxu0 %v227
  %v765 = vpop.f32.mrb[0].mxu0
  %v766 = vadd.f32 %v152, %v765
  %v767 = vpop.f32.mrb[0].mxu0
  %v768 = vadd.f32 %v156, %v767
  %v769 = vpop.f32.mrb[0].mxu0
  %v770 = vadd.f32 %v152, %v769
  %v771 = vpop.f32.mrb[0].mxu0
  %v772 = vadd.f32 %v156, %v771
  %773 = vmatprep.mubr.bf16.mxu0 0
  %774 = vmatmul.mubr.bf16.gmra.mrb[0].mxu0 %v230
  %v775 = vpop.f32.mrb[0].mxu0
  %v776 = vadd.f32 %v152, %v775
  %v777 = vpop.f32.mrb[0].mxu0
  %v778 = vadd.f32 %v156, %v777
  %v779 = vpop.f32.mrb[0].mxu0
  %v780 = vadd.f32 %v152, %v779
  %v781 = vpop.f32.mrb[0].mxu0
  %v782 = vadd.f32 %v156, %v781
  %783 = vmatprep.mubr.bf16.mxu0 0
  %784 = vmatmul.mubr.bf16.gmra.mrb[0].mxu0 %v233
  %v785 = vpop.f32.mrb[0].mxu0
  %v786 = vadd.f32 %v152, %v785
  %v787 = vpop.f32.mrb[0].mxu0
  %v788 = vadd.f32 %v156, %v787
  %v789 = vpop.f32.mrb[0].mxu0
  %v790 = vadd.f32 %v152, %v789
  %v791 = vpop.f32.mrb[0].mxu0
  %v792 = vadd.f32 %v156, %v791
  %793 = vmatprep.mubr.bf16.mxu0 0
  %794 = vmatmul.mubr.bf16.gmra.mrb[0].mxu0 %v236
  %v795 = vpop.f32.mrb[0].mxu0
  %v796 = vadd.f32 %v152, %v795
  %v797 = vpop.f32.mrb[0].mxu0
  %v798 = vadd.f32 %v156, %v797
  %v799 = vpop.f32.mrb[0].mxu0
  %v800 = vadd.f32 %v152, %v799
  %v801 = vpop.f32.mrb[0].mxu0
  %v802 = vadd.f32 %v156, %v801
  %803 = vmatprep.mubr.bf16.mxu0 0
  %804 = vmatmul.mubr.bf16.gmra.mrb[0].mxu0 %v239
  %v805 = vpop.f32.mrb[0].mxu0
  %v806 = vadd.f32 %v152, %v805
  %v807 = vpop.f32.mrb[0].mxu0
  %v808 = vadd.f32 %v156, %v807
  %v809 = vpop.f32.mrb[0].mxu0
  %v810 = vadd.f32 %v152, %v809
  %v811 = vpop.f32.mrb[0].mxu0
  %v812 = vadd.f32 %v156, %v811
  %813 = vmatprep.mubr.bf16.mxu0 0
  %814 = vmatmul.mubr.bf16.gmra.mrb[0].mxu0 %v242
  %v815 = vpop.f32.mrb[0].mxu0
  %v816 = vadd.f32 %v152, %v815
  %v817 = vpop.f32.mrb[0].mxu0
  %v818 = vadd.f32 %v156, %v817
  %v819 = vpop.f32.mrb[0].mxu0
  %v820 = vadd.f32 %v152, %v819
  %v821 = vpop.f32.mrb[0].mxu0
  %v822 = vadd.f32 %v156, %v821
  %823 = vmatprep.mubr.bf16.mxu0 0
  %824 = vmatmul.mubr.bf16.gmra.mrb[0].mxu0 %v245
  %v825 = vpop.f32.mrb[0].mxu0
  %v826 = vadd.f32 %v152, %v825
  %v827 = vpop.f32.mrb[0].mxu0
  %v828 = vadd.f32 %v156, %v827
  %v829 = vpop.f32.mrb[0].mxu0
  %v830 = vadd.f32 %v152, %v829
  %v831 = vpop.f32.mrb[0].mxu0
  %v832 = vadd.f32 %v156, %v831
  %833 = vmatprep.mubr.bf16.mxu0 0
  %834 = vmatmul.mubr.bf16.gmra.mrb[0].mxu0 %v248
  %v835 = vpop.f32.mrb[0].mxu0
  %v836 = vadd.f32 %v152, %v835
  %v837 = vpop.f32.mrb[0].mxu0
  %v838 = vadd.f32 %v156, %v837
  %v839 = vpop.f32.mrb[0].mxu0
  %v840 = vadd.f32 %v152, %v839
  %v841 = vpop.f32.mrb[0].mxu0
  %v842 = vadd.f32 %v156, %v841
  %843 = vmatprep.mubr.bf16.mxu0 0
  %844 = vmatmul.mubr.bf16.gmra.mrb[0].mxu0 %v251
  %v845 = vpop.f32.mrb[0].mxu0
  %v846 = vadd.f32 %v152, %v845
  %v847 = vpop.f32.mrb[0].mxu0
  %v848 = vadd.f32 %v156, %v847
  %v849 = vpop.f32.mrb[0].mxu0
  %v850 = vadd.f32 %v152, %v849
  %v851 = vpop.f32.mrb[0].mxu0
  %v852 = vadd.f32 %v156, %v851
  %853 = vmatprep.mubr.bf16.mxu0 0
  %854 = vmatmul.mubr.bf16.gmra.mrb[0].mxu0 %v254
  %v855 = vpop.f32.mrb[0].mxu0
  %v856 = vadd.f32 %v152, %v855
  %v857 = vpop.f32.mrb[0].mxu0
  %v858 = vadd.f32 %v156, %v857
  %v859 = vpop.f32.mrb[0].mxu0
  %v860 = vadd.f32 %v152, %v859
  %v861 = vpop.f32.mrb[0].mxu0
  %v862 = vadd.f32 %v156, %v861
  %863 = vmatprep.mubr.bf16.mxu0 0
  %864 = vmatmul.mubr.bf16.gmra.mrb[0].mxu0 %v257
  %v865 = vpop.f32.mrb[0].mxu0
  %v866 = vadd.f32 %v152, %v865
  %v867 = vpop.f32.mrb[0].mxu0
  %v868 = vadd.f32 %v156, %v867
  %v869 = vpop.f32.mrb[0].mxu0
  %v870 = vadd.f32 %v152, %v869
  %v871 = vpop.f32.mrb[0].mxu0
  %v872 = vadd.f32 %v156, %v871
  %873 = vmatprep.mubr.bf16.mxu0 0
  %874 = vmatmul.mubr.bf16.gmra.mrb[0].mxu0 %v260
  %v875 = vpop.f32.mrb[0].mxu0
  %v876 = vadd.f32 %v152, %v875
  %v877 = vpop.f32.mrb[0].mxu0
  %v878 = vadd.f32 %v156, %v877
  %v879 = vpop.f32.mrb[0].mxu0
  %v880 = vadd.f32 %v152, %v879
  %v881 = vpop.f32.mrb[0].mxu0
  %v882 = vadd.f32 %v156, %v881
  %883 = vmatprep.mubr.bf16.mxu0 0
  %884 = vmatmul.mubr.bf16.gmra.mrb[0].mxu0 %v263
  %v885 = vpop.f32.mrb[0].mxu0
  %v886 = vadd.f32 %v152, %v885
  %v887 = vpop.f32.mrb[0].mxu0
  %v888 = vadd.f32 %v156, %v887
  %v889 = vpop.f32.mrb[0].mxu0
  %v890 = vadd.f32 %v152, %v889
  %v891 = vpop.f32.mrb[0].mxu0
  %v892 = vadd.f32 %v156, %v891
  %893 = vmatprep.mubr.bf16.mxu0 0
  %894 = vmatmul.mubr.bf16.gmra.mrb[0].mxu0 %v266
  %v895 = vpop.f32.mrb[0].mxu0
  %v896 = vadd.f32 %v152, %v895
  %v897 = vpop.f32.mrb[0].mxu0
  %v898 = vadd.f32 %v156, %v897
  %v899 = vpop.f32.mrb[0].mxu0
  %v900 = vadd.f32 %v152, %v899
  %v901 = vpop.f32.mrb[0].mxu0
  %v902 = vadd.f32 %v156, %v901
  %903 = vmatprep.mubr.bf16.mxu0 0
  %904 = vmatmul.mubr.bf16.gmra.mrb[0].mxu0 %v269
  %v905 = vpop.f32.mrb[0].mxu0
  %v906 = vadd.f32 %v152, %v905
  %v907 = vpop.f32.mrb[0].mxu0
  %v908 = vadd.f32 %v156, %v907
  %v909 = vpop.f32.mrb[0].mxu0
  %v910 = vadd.f32 %v152, %v909
  %v911 = vpop.f32.mrb[0].mxu0
  %v912 = vadd.f32 %v156, %v911
  %913 = vmatprep.mubr.bf16.mxu0 0
  %914 = vmatmul.mubr.bf16.gmra.mrb[0].mxu0 %v272
  %v915 = vpop.f32.mrb[0].mxu0
  %v916 = vadd.f32 %v152, %v915
  %v917 = vpop.f32.mrb[0].mxu0
  %v918 = vadd.f32 %v156, %v917
  %v919 = vpop.f32.mrb[0].mxu0
  %v920 = vadd.f32 %v152, %v919
  %v921 = vpop.f32.mrb[0].mxu0
  %v922 = vadd.f32 %v156, %v921
  %923 = vmatprep.mubr.bf16.mxu0 0
  %924 = vmatmul.mubr.bf16.gmra.mrb[0].mxu0 %v275
  %v925 = vpop.f32.mrb[0].mxu0
  %v926 = vadd.f32 %v152, %v925
  %v927 = vpop.f32.mrb[0].mxu0
  %v928 = vadd.f32 %v156, %v927
  %v929 = vpop.f32.mrb[0].mxu0
  %v930 = vadd.f32 %v152, %v929
  %v931 = vpop.f32.mrb[0].mxu0
  %v932 = vadd.f32 %v156, %v931
  %933 = vmatprep.mubr.bf16.mxu0 0
  %934 = vmatmul.mubr.bf16.gmra.mrb[0].mxu0 %v278
  %v935 = vpop.f32.mrb[0].mxu0
  %v936 = vadd.f32 %v152, %v935
  %v937 = vpop.f32.mrb[0].mxu0
  %v938 = vadd.f32 %v156, %v937
  %v939 = vpop.f32.mrb[0].mxu0
  %v940 = vadd.f32 %v152, %v939
  %v941 = vpop.f32.mrb[0].mxu0
  %v942 = vadd.f32 %v156, %v941
  %943 = vmatprep.mubr.bf16.mxu0 0
  %944 = vmatmul.mubr.bf16.gmra.mrb[0].mxu0 %v281
  %v945 = vpop.f32.mrb[0].mxu0
  %v946 = vadd.f32 %v152, %v945
  %v947 = vpop.f32.mrb[0].mxu0
  %v948 = vadd.f32 %v156, %v947
  %v949 = vpop.f32.mrb[0].mxu0
  %v950 = vadd.f32 %v152, %v949
  %v951 = vpop.f32.mrb[0].mxu0
  %v952 = vadd.f32 %v156, %v951
  %953 = vmatprep.mubr.bf16.mxu0 0
  %954 = vmatmul.mubr.bf16.gmra.mrb[0].mxu0 %v284
  %v955 = vpop.f32.mrb[0].mxu0
  %v956 = vadd.f32 %v152, %v955
  %v957 = vpop.f32.mrb[0].mxu0
  %v958 = vadd.f32 %v156, %v957
  %v959 = vpop.f32.mrb[0].mxu0
  %v960 = vadd.f32 %v152, %v959
  %v961 = vpop.f32.mrb[0].mxu0
  %v962 = vadd.f32 %v156, %v961
  %963 = vmatprep.mubr.bf16.mxu0 0
  %964 = vmatmul.mubr.bf16.gmra.mrb[0].mxu0 %v287
  %v965 = vpop.f32.mrb[0].mxu0
  %v966 = vadd.f32 %v152, %v965
  %v967 = vpop.f32.mrb[0].mxu0
  %v968 = vadd.f32 %v156, %v967
  %v969 = vpop.f32.mrb[0].mxu0
  %v970 = vadd.f32 %v152, %v969
  %v971 = vpop.f32.mrb[0].mxu0
  %v972 = vadd.f32 %v156, %v971
  %973 = vmatprep.mubr.bf16.mxu0 0
  %974 = vmatmul.mubr.bf16.gmra.mrb[0].mxu0 %v290
  %v975 = vpop.f32.mrb[0].mxu0
  %v976 = vadd.f32 %v152, %v975
  %v977 = vpop.f32.mrb[0].mxu0
  %v978 = vadd.f32 %v156, %v977
  %v979 = vpop.f32.mrb[0].mxu0
  %v980 = vadd.f32 %v152, %v979
  %v981 = vpop.f32.mrb[0].mxu0
  %v982 = vadd.f32 %v156, %v981
  %983 = vmatprep.mubr.bf16.mxu0 0
  %984 = vmatmul.mubr.bf16.gmra.mrb[0].mxu0 %v293
  %v985 = vpop.f32.mrb[0].mxu0
  %v986 = vadd.f32 %v152, %v985
  %v987 = vpop.f32.mrb[0].mxu0
  %v988 = vadd.f32 %v156, %v987
  %v989 = vpop.f32.mrb[0].mxu0
  %v990 = vadd.f32 %v152, %v989
  %v991 = vpop.f32.mrb[0].mxu0
  %v992 = vadd.f32 %v156, %v991
  %993 = vmatprep.mubr.bf16.mxu0 0
  %994 = vmatmul.mubr.bf16.gmra.mrb[0].mxu0 %v296
  %v995 = vpop.f32.mrb[0].mxu0
  %v996 = vadd.f32 %v152, %v995
  %v997 = vpop.f32.mrb[0].mxu0
  %v998 = vadd.f32 %v156, %v997
  %v999 = vpop.f32.mrb[0].mxu0
  %v1000 = vadd.f32 %v152, %v999
  %v1001 = vpop.f32.mrb[0].mxu0
  %v1002 = vadd.f32 %v156, %v1001
  %1003 = vdwg.mxu0
  %v1004 = vmax.f32 %v333, 0.0
  %v1005 = vmax.f32 %v335, 0.0
  %v1006 = vmax.f32 %v686, 0.0
  %v1007 = vmax.f32 %v688, 0.0
  %v1008 = vmax.f32 %v337, 0.0
  %v1009 = vmax.f32 %v339, 0.0
  %v1010 = vmax.f32 %v690, 0.0
  %v1011 = vmax.f32 %v692, 0.0
  %v1012 = vmax.f32 %v343, 0.0
  %v1013 = vmax.f32 %v345, 0.0
  %v1014 = vmax.f32 %v696, 0.0
  %v1015 = vmax.f32 %v698, 0.0
  %v1016 = vmax.f32 %v347, 0.0
  %v1017 = vmax.f32 %v349, 0.0
  %v1018 = vmax.f32 %v700, 0.0
  %v1019 = vmax.f32 %v702, 0.0
  %v1020 = vmax.f32 %v353, 0.0
  %v1021 = vmax.f32 %v355, 0.0
  %v1022 = vmax.f32 %v706, 0.0
  %v1023 = vmax.f32 %v708, 0.0
  %v1024 = vmax.f32 %v357, 0.0
  %v1025 = vmax.f32 %v359, 0.0
  %v1026 = vmax.f32 %v710, 0.0
  %v1027 = vmax.f32 %v712, 0.0
  %v1028 = vmax.f32 %v363, 0.0
  %v1029 = vmax.f32 %v365, 0.0
  %v1030 = vmax.f32 %v716, 0.0
  %v1031 = vmax.f32 %v718, 0.0
  %v1032 = vmax.f32 %v367, 0.0
  %v1033 = vmax.f32 %v369, 0.0
  %v1034 = vmax.f32 %v720, 0.0
  %v1035 = vmax.f32 %v722, 0.0
  %v1036 = vmax.f32 %v373, 0.0
  %v1037 = vmax.f32 %v375, 0.0
  %v1038 = vmax.f32 %v726, 0.0
  %v1039 = vmax.f32 %v728, 0.0
  %v1040 = vmax.f32 %v377, 0.0
  %v1041 = vmax.f32 %v379, 0.0
  %v1042 = vmax.f32 %v730, 0.0
  %v1043 = vmax.f32 %v732, 0.0
  %v1044 = vmax.f32 %v383, 0.0
  %v1045 = vmax.f32 %v385, 0.0
  %v1046 = vmax.f32 %v736, 0.0
  %v1047 = vmax.f32 %v738, 0.0
  %v1048 = vmax.f32 %v387, 0.0
  %v1049 = vmax.f32 %v389, 0.0
  %v1050 = vmax.f32 %v740, 0.0
  %v1051 = vmax.f32 %v742, 0.0
  %v1052 = vmax.f32 %v393, 0.0
  %v1053 = vmax.f32 %v395, 0.0
  %v1054 = vmax.f32 %v746, 0.0
  %v1055 = vmax.f32 %v748, 0.0
  %v1056 = vmax.f32 %v397, 0.0
  %v1057 = vmax.f32 %v399, 0.0
  %v1058 = vmax.f32 %v750, 0.0
  %v1059 = vmax.f32 %v752, 0.0
  %v1060 = vmax.f32 %v403, 0.0
  %v1061 = vmax.f32 %v405, 0.0
  %v1062 = vmax.f32 %v756, 0.0
  %v1063 = vmax.f32 %v758, 0.0
  %v1064 = vmax.f32 %v407, 0.0
  %v1065 = vmax.f32 %v409, 0.0
  %v1066 = vmax.f32 %v760, 0.0
  %v1067 = vmax.f32 %v762, 0.0
  %v1068 = vmax.f32 %v413, 0.0
  %v1069 = vmax.f32 %v415, 0.0
  %v1070 = vmax.f32 %v766, 0.0
  %v1071 = vmax.f32 %v768, 0.0
  %v1072 = vmax.f32 %v417, 0.0
  %v1073 = vmax.f32 %v419, 0.0
  %v1074 = vmax.f32 %v770, 0.0
  %v1075 = vmax.f32 %v772, 0.0
  %v1076 = vmax.f32 %v423, 0.0
  %v1077 = vmax.f32 %v425, 0.0
  %v1078 = vmax.f32 %v776, 0.0
  %v1079 = vmax.f32 %v778, 0.0
  %v1080 = vmax.f32 %v427, 0.0
  %v1081 = vmax.f32 %v429, 0.0
  %v1082 = vmax.f32 %v780, 0.0
  %v1083 = vmax.f32 %v782, 0.0
  %v1084 = vmax.f32 %v433, 0.0
  %v1085 = vmax.f32 %v435, 0.0
  %v1086 = vmax.f32 %v786, 0.0
  %v1087 = vmax.f32 %v788, 0.0
  %v1088 = vmax.f32 %v437, 0.0
  %v1089 = vmax.f32 %v439, 0.0
  %v1090 = vmax.f32 %v790, 0.0
  %v1091 = vmax.f32 %v792, 0.0
  %v1092 = vmax.f32 %v443, 0.0
  %v1093 = vmax.f32 %v445, 0.0
  %v1094 = vmax.f32 %v796, 0.0
  %v1095 = vmax.f32 %v798, 0.0
  %v1096 = vmax.f32 %v447, 0.0
  %v1097 = vmax.f32 %v449, 0.0
  %v1098 = vmax.f32 %v800, 0.0
  %v1099 = vmax.f32 %v802, 0.0
  %v1100 = vmax.f32 %v453, 0.0
  %v1101 = vmax.f32 %v455, 0.0
  %v1102 = vmax.f32 %v806, 0.0
  %v1103 = vmax.f32 %v808, 0.0
  %v1104 = vmax.f32 %v457, 0.0
  %v1105 = vmax.f32 %v459, 0.0
  %v1106 = vmax.f32 %v810, 0.0
  %v1107 = vmax.f32 %v812, 0.0
  %v1108 = vmax.f32 %v463, 0.0
  %v1109 = vmax.f32 %v465, 0.0
  %v1110 = vmax.f32 %v816, 0.0
  %v1111 = vmax.f32 %v818, 0.0
  %v1112 = vmax.f32 %v467, 0.0
  %v1113 = vmax.f32 %v469, 0.0
  %v1114 = vmax.f32 %v820, 0.0
  %v1115 = vmax.f32 %v822, 0.0
  %v1116 = vmax.f32 %v473, 0.0
  %v1117 = vmax.f32 %v475, 0.0
  %v1118 = vmax.f32 %v826, 0.0
  %v1119 = vmax.f32 %v828, 0.0
  %v1120 = vmax.f32 %v477, 0.0
  %v1121 = vmax.f32 %v479, 0.0
  %v1122 = vmax.f32 %v830, 0.0
  %v1123 = vmax.f32 %v832, 0.0
  %v1124 = vmax.f32 %v483, 0.0
  %v1125 = vmax.f32 %v485, 0.0
  %v1126 = vmax.f32 %v836, 0.0
  %v1127 = vmax.f32 %v838, 0.0
  %v1128 = vmax.f32 %v487, 0.0
  %v1129 = vmax.f32 %v489, 0.0
  %v1130 = vmax.f32 %v840, 0.0
  %v1131 = vmax.f32 %v842, 0.0
  %v1132 = vmax.f32 %v493, 0.0
  %v1133 = vmax.f32 %v495, 0.0
  %v1134 = vmax.f32 %v846, 0.0
  %v1135 = vmax.f32 %v848, 0.0
  %v1136 = vmax.f32 %v497, 0.0
  %v1137 = vmax.f32 %v499, 0.0
  %v1138 = vmax.f32 %v850, 0.0
  %v1139 = vmax.f32 %v852, 0.0
  %v1140 = vmax.f32 %v503, 0.0
  %v1141 = vmax.f32 %v505, 0.0
  %v1142 = vmax.f32 %v856, 0.0
  %v1143 = vmax.f32 %v858, 0.0
  %v1144 = vmax.f32 %v507, 0.0
  %v1145 = vmax.f32 %v509, 0.0
  %v1146 = vmax.f32 %v860, 0.0
  %v1147 = vmax.f32 %v862, 0.0
  %v1148 = vmax.f32 %v513, 0.0
  %v1149 = vmax.f32 %v515, 0.0
  %v1150 = vmax.f32 %v866, 0.0
  %v1151 = vmax.f32 %v868, 0.0
  %v1152 = vmax.f32 %v517, 0.0
  %v1153 = vmax.f32 %v519, 0.0
  %v1154 = vmax.f32 %v870, 0.0
  %v1155 = vmax.f32 %v872, 0.0
  %v1156 = vmax.f32 %v523, 0.0
  %v1157 = vmax.f32 %v525, 0.0
  %v1158 = vmax.f32 %v876, 0.0
  %v1159 = vmax.f32 %v878, 0.0
  %v1160 = vmax.f32 %v527, 0.0
  %v1161 = vmax.f32 %v529, 0.0
  %v1162 = vmax.f32 %v880, 0.0
  %v1163 = vmax.f32 %v882, 0.0
  %v1164 = vmax.f32 %v533, 0.0
  %v1165 = vmax.f32 %v535, 0.0
  %v1166 = vmax.f32 %v886, 0.0
  %v1167 = vmax.f32 %v888, 0.0
  %v1168 = vmax.f32 %v537, 0.0
  %v1169 = vmax.f32 %v539, 0.0
  %v1170 = vmax.f32 %v890, 0.0
  %v1171 = vmax.f32 %v892, 0.0
  %v1172 = vmax.f32 %v543, 0.0
  %v1173 = vmax.f32 %v545, 0.0
  %v1174 = vmax.f32 %v896, 0.0
  %v1175 = vmax.f32 %v898, 0.0
  %v1176 = vmax.f32 %v547, 0.0
  %v1177 = vmax.f32 %v549, 0.0
  %v1178 = vmax.f32 %v900, 0.0
  %v1179 = vmax.f32 %v902, 0.0
  %v1180 = vmax.f32 %v553, 0.0
  %v1181 = vmax.f32 %v555, 0.0
  %v1182 = vmax.f32 %v906, 0.0
  %v1183 = vmax.f32 %v908, 0.0
  %v1184 = vmax.f32 %v557, 0.0
  %v1185 = vmax.f32 %v559, 0.0
  %v1186 = vmax.f32 %v910, 0.0
  %v1187 = vmax.f32 %v912, 0.0
  %v1188 = vmax.f32 %v563, 0.0
  %v1189 = vmax.f32 %v565, 0.0
  %v1190 = vmax.f32 %v916, 0.0
  %v1191 = vmax.f32 %v918, 0.0
  %v1192 = vmax.f32 %v567, 0.0
  %v1193 = vmax.f32 %v569, 0.0
  %v1194 = vmax.f32 %v920, 0.0
  %v1195 = vmax.f32 %v922, 0.0
  %v1196 = vmax.f32 %v573, 0.0
  %v1197 = vmax.f32 %v575, 0.0
  %v1198 = vmax.f32 %v926, 0.0
  %v1199 = vmax.f32 %v928, 0.0
  %v1200 = vmax.f32 %v577, 0.0
  %v1201 = vmax.f32 %v579, 0.0
  %v1202 = vmax.f32 %v930, 0.0
  %v1203 = vmax.f32 %v932, 0.0
  %v1204 = vmax.f32 %v583, 0.0
  %v1205 = vmax.f32 %v585, 0.0
  %v1206 = vmax.f32 %v936, 0.0
  %v1207 = vmax.f32 %v938, 0.0
  %v1208 = vmax.f32 %v587, 0.0
  %v1209 = vmax.f32 %v589, 0.0
  %v1210 = vmax.f32 %v940, 0.0
  %v1211 = vmax.f32 %v942, 0.0
  %v1212 = vmax.f32 %v593, 0.0
  %v1213 = vmax.f32 %v595, 0.0
  %v1214 = vmax.f32 %v946, 0.0
  %v1215 = vmax.f32 %v948, 0.0
  %v1216 = vmax.f32 %v597, 0.0
  %v1217 = vmax.f32 %v599, 0.0
  %v1218 = vmax.f32 %v950, 0.0
  %v1219 = vmax.f32 %v952, 0.0
  %v1220 = vmax.f32 %v603, 0.0
  %v1221 = vmax.f32 %v605, 0.0
  %v1222 = vmax.f32 %v956, 0.0
  %v1223 = vmax.f32 %v958, 0.0
  %v1224 = vmax.f32 %v607, 0.0
  %v1225 = vmax.f32 %v609, 0.0
  %v1226 = vmax.f32 %v960, 0.0
  %v1227 = vmax.f32 %v962, 0.0
  %v1228 = vmax.f32 %v613, 0.0
  %v1229 = vmax.f32 %v615, 0.0
  %v1230 = vmax.f32 %v966, 0.0
  %v1231 = vmax.f32 %v968, 0.0
  %v1232 = vmax.f32 %v617, 0.0
  %v1233 = vmax.f32 %v619, 0.0
  %v1234 = vmax.f32 %v970, 0.0
  %v1235 = vmax.f32 %v972, 0.0
  %v1236 = vmax.f32 %v623, 0.0
  %v1237 = vmax.f32 %v625, 0.0
  %v1238 = vmax.f32 %v976, 0.0
  %v1239 = vmax.f32 %v978, 0.0
  %v1240 = vmax.f32 %v627, 0.0
  %v1241 = vmax.f32 %v629, 0.0
  %v1242 = vmax.f32 %v980, 0.0
  %v1243 = vmax.f32 %v982, 0.0
  %v1244 = vmax.f32 %v633, 0.0
  %v1245 = vmax.f32 %v635, 0.0
  %v1246 = vmax.f32 %v986, 0.0
  %v1247 = vmax.f32 %v988, 0.0
  %v1248 = vmax.f32 %v637, 0.0
  %v1249 = vmax.f32 %v639, 0.0
  %v1250 = vmax.f32 %v990, 0.0
  %v1251 = vmax.f32 %v992, 0.0
  %v1252 = vmax.f32 %v643, 0.0
  %v1253 = vmax.f32 %v645, 0.0
  %v1254 = vmax.f32 %v996, 0.0
  %v1255 = vmax.f32 %v998, 0.0
  %v1256 = vmax.f32 %v647, 0.0
  %v1257 = vmax.f32 %v649, 0.0
  %v1258 = vmax.f32 %v1000, 0.0
  %v1259 = vmax.f32 %v1002, 0.0
  %v1260 = vpack.c.bf16 %v1008, %v1004
  %v1261 = vpack.c.bf16 %v1009, %v1005
  %v1262 = vpack.c.bf16 %v1010, %v1006
  %v1263 = vpack.c.bf16 %v1011, %v1007
  %v1264 = vpack.c.bf16 %v1016, %v1012
  %v1265 = vpack.c.bf16 %v1017, %v1013
  %v1266 = vpack.c.bf16 %v1018, %v1014
  %v1267 = vpack.c.bf16 %v1019, %v1015
  %v1268 = vpack.c.bf16 %v1024, %v1020
  %v1269 = vpack.c.bf16 %v1025, %v1021
  %v1270 = vpack.c.bf16 %v1026, %v1022
  %v1271 = vpack.c.bf16 %v1027, %v1023
  %v1272 = vpack.c.bf16 %v1032, %v1028
  %v1273 = vpack.c.bf16 %v1033, %v1029
  %v1274 = vpack.c.bf16 %v1034, %v1030
  %v1275 = vpack.c.bf16 %v1035, %v1031
  %v1276 = vpack.c.bf16 %v1040, %v1036
  %v1277 = vpack.c.bf16 %v1041, %v1037
  %v1278 = vpack.c.bf16 %v1042, %v1038
  %v1279 = vpack.c.bf16 %v1043, %v1039
  %v1280 = vpack.c.bf16 %v1048, %v1044
  %v1281 = vpack.c.bf16 %v1049, %v1045
  %v1282 = vpack.c.bf16 %v1050, %v1046
  %v1283 = vpack.c.bf16 %v1051, %v1047
  %v1284 = vpack.c.bf16 %v1056, %v1052
  %v1285 = vpack.c.bf16 %v1057, %v1053
  %v1286 = vpack.c.bf16 %v1058, %v1054
  %v1287 = vpack.c.bf16 %v1059, %v1055
  %v1288 = vpack.c.bf16 %v1064, %v1060
  %v1289 = vpack.c.bf16 %v1065, %v1061
  %v1290 = vpack.c.bf16 %v1066, %v1062
  %v1291 = vpack.c.bf16 %v1067, %v1063
  %v1292 = vpack.c.bf16 %v1072, %v1068
  %v1293 = vpack.c.bf16 %v1073, %v1069
  %v1294 = vpack.c.bf16 %v1074, %v1070
  %v1295 = vpack.c.bf16 %v1075, %v1071
  %v1296 = vpack.c.bf16 %v1080, %v1076
  %v1297 = vpack.c.bf16 %v1081, %v1077
  %v1298 = vpack.c.bf16 %v1082, %v1078
  %v1299 = vpack.c.bf16 %v1083, %v1079
  %v1300 = vpack.c.bf16 %v1088, %v1084
  %v1301 = vpack.c.bf16 %v1089, %v1085
  %v1302 = vpack.c.bf16 %v1090, %v1086
  %v1303 = vpack.c.bf16 %v1091, %v1087
  %v1304 = vpack.c.bf16 %v1096, %v1092
  %v1305 = vpack.c.bf16 %v1097, %v1093
  %v1306 = vpack.c.bf16 %v1098, %v1094
  %v1307 = vpack.c.bf16 %v1099, %v1095
  %v1308 = vpack.c.bf16 %v1104, %v1100
  %v1309 = vpack.c.bf16 %v1105, %v1101
  %v1310 = vpack.c.bf16 %v1106, %v1102
  %v1311 = vpack.c.bf16 %v1107, %v1103
  %v1312 = vpack.c.bf16 %v1112, %v1108
  %v1313 = vpack.c.bf16 %v1113, %v1109
  %v1314 = vpack.c.bf16 %v1114, %v1110
  %v1315 = vpack.c.bf16 %v1115, %v1111
  %v1316 = vpack.c.bf16 %v1120, %v1116
  %v1317 = vpack.c.bf16 %v1121, %v1117
  %v1318 = vpack.c.bf16 %v1122, %v1118
  %v1319 = vpack.c.bf16 %v1123, %v1119
  %v1320 = vpack.c.bf16 %v1128, %v1124
  %v1321 = vpack.c.bf16 %v1129, %v1125
  %v1322 = vpack.c.bf16 %v1130, %v1126
  %v1323 = vpack.c.bf16 %v1131, %v1127
  %v1324 = vpack.c.bf16 %v1136, %v1132
  %v1325 = vpack.c.bf16 %v1137, %v1133
  %v1326 = vpack.c.bf16 %v1138, %v1134
  %v1327 = vpack.c.bf16 %v1139, %v1135
  %v1328 = vpack.c.bf16 %v1144, %v1140
  %v1329 = vpack.c.bf16 %v1145, %v1141
  %v1330 = vpack.c.bf16 %v1146, %v1142
  %v1331 = vpack.c.bf16 %v1147, %v1143
  %v1332 = vpack.c.bf16 %v1152, %v1148
  %v1333 = vpack.c.bf16 %v1153, %v1149
  %v1334 = vpack.c.bf16 %v1154, %v1150
  %v1335 = vpack.c.bf16 %v1155, %v1151
  %v1336 = vpack.c.bf16 %v1160, %v1156
  %v1337 = vpack.c.bf16 %v1161, %v1157
  %v1338 = vpack.c.bf16 %v1162, %v1158
  %v1339 = vpack.c.bf16 %v1163, %v1159
  %v1340 = vpack.c.bf16 %v1168, %v1164
  %v1341 = vpack.c.bf16 %v1169, %v1165
  %v1342 = vpack.c.bf16 %v1170, %v1166
  %v1343 = vpack.c.bf16 %v1171, %v1167
  %v1344 = vpack.c.bf16 %v1176, %v1172
  %v1345 = vpack.c.bf16 %v1177, %v1173
  %v1346 = vpack.c.bf16 %v1178, %v1174
  %v1347 = vpack.c.bf16 %v1179, %v1175
  %v1348 = vpack.c.bf16 %v1184, %v1180
  %v1349 = vpack.c.bf16 %v1185, %v1181
  %v1350 = vpack.c.bf16 %v1186, %v1182
  %v1351 = vpack.c.bf16 %v1187, %v1183
  %v1352 = vpack.c.bf16 %v1192, %v1188
  %v1353 = vpack.c.bf16 %v1193, %v1189
  %v1354 = vpack.c.bf16 %v1194, %v1190
  %v1355 = vpack.c.bf16 %v1195, %v1191
  %v1356 = vpack.c.bf16 %v1200, %v1196
  %v1357 = vpack.c.bf16 %v1201, %v1197
  %v1358 = vpack.c.bf16 %v1202, %v1198
  %v1359 = vpack.c.bf16 %v1203, %v1199
  %v1360 = vpack.c.bf16 %v1208, %v1204
  %v1361 = vpack.c.bf16 %v1209, %v1205
  %v1362 = vpack.c.bf16 %v1210, %v1206
  %v1363 = vpack.c.bf16 %v1211, %v1207
  %v1364 = vpack.c.bf16 %v1216, %v1212
  %v1365 = vpack.c.bf16 %v1217, %v1213
  %v1366 = vpack.c.bf16 %v1218, %v1214
  %v1367 = vpack.c.bf16 %v1219, %v1215
  %v1368 = vpack.c.bf16 %v1224, %v1220
  %v1369 = vpack.c.bf16 %v1225, %v1221
  %v1370 = vpack.c.bf16 %v1226, %v1222
  %v1371 = vpack.c.bf16 %v1227, %v1223
  %v1372 = vpack.c.bf16 %v1232, %v1228
  %v1373 = vpack.c.bf16 %v1233, %v1229
  %v1374 = vpack.c.bf16 %v1234, %v1230
  %v1375 = vpack.c.bf16 %v1235, %v1231
  %v1376 = vpack.c.bf16 %v1240, %v1236
  %v1377 = vpack.c.bf16 %v1241, %v1237
  %v1378 = vpack.c.bf16 %v1242, %v1238
  %v1379 = vpack.c.bf16 %v1243, %v1239
  %v1380 = vpack.c.bf16 %v1248, %v1244
  %v1381 = vpack.c.bf16 %v1249, %v1245
  %v1382 = vpack.c.bf16 %v1250, %v1246
  %v1383 = vpack.c.bf16 %v1251, %v1247
  %v1384 = vpack.c.bf16 %v1256, %v1252
  %v1385 = vpack.c.bf16 %v1257, %v1253
  %v1386 = vpack.c.bf16 %v1258, %v1254
  %v1387 = vpack.c.bf16 %v1259, %v1255
  %v1388 = vld [vmem:[%s3] sm:$0xff]
  %v1389 = vld [vmem:[%s3 + $0x8] sm:$0xff]
  %v1390 = vld [vmem:[%s3 + $0x10] sm:$0xff]
  %v1391 = vld [vmem:[%s3 + $0x18] sm:$0xff]
  %v1392 = vld [vmem:[%s3 + $0x20] sm:$0xff]
  %v1393 = vld [vmem:[%s3 + $0x28] sm:$0xff]
  %v1394 = vld [vmem:[%s3 + $0x30] sm:$0xff]
  %v1395 = vld [vmem:[%s3 + $0x38] sm:$0xff]
  %v1396 = vld [vmem:[%s3 + $0x40] sm:$0xff]
  %v1397 = vld [vmem:[%s3 + $0x48] sm:$0xff]
  %v1398 = vld [vmem:[%s3 + $0x50] sm:$0xff]
  %v1399 = vld [vmem:[%s3 + $0x58] sm:$0xff]
  %v1400 = vld [vmem:[%s3 + $0x60] sm:$0xff]
  %v1401 = vld [vmem:[%s3 + $0x68] sm:$0xff]
  %v1402 = vld [vmem:[%s3 + $0x70] sm:$0xff]
  %v1403 = vld [vmem:[%s3 + $0x78] sm:$0xff]
  %v1404 = vld [vmem:[%s3 + $0x80] sm:$0xff]
  %v1405 = vld [vmem:[%s3 + $0x88] sm:$0xff]
  %v1406 = vld [vmem:[%s3 + $0x90] sm:$0xff]
  %v1407 = vld [vmem:[%s3 + $0x98] sm:$0xff]
  %v1408 = vld [vmem:[%s3 + $0xa0] sm:$0xff]
  %v1409 = vld [vmem:[%s3 + $0xa8] sm:$0xff]
  %v1410 = vld [vmem:[%s3 + $0xb0] sm:$0xff]
  %v1411 = vld [vmem:[%s3 + $0xb8] sm:$0xff]
  %v1412 = vld [vmem:[%s3 + $0xc0] sm:$0xff]
  %v1413 = vld [vmem:[%s3 + $0xc8] sm:$0xff]
  %v1414 = vld [vmem:[%s3 + $0xd0] sm:$0xff]
  %v1415 = vld [vmem:[%s3 + $0xd8] sm:$0xff]
  %v1416 = vld [vmem:[%s3 + $0xe0] sm:$0xff]
  %v1417 = vld [vmem:[%s3 + $0xe8] sm:$0xff]
  %v1418 = vld [vmem:[%s3 + $0xf0] sm:$0xff]
  %v1419 = vld [vmem:[%s3 + $0xf8] sm:$0xff]
  %v1420 = vld [vmem:[%s3 + $0x100] sm:$0xff]
  %v1421 = vld [vmem:[%s3 + $0x108] sm:$0xff]
  %v1422 = vld [vmem:[%s3 + $0x110] sm:$0xff]
  %v1423 = vld [vmem:[%s3 + $0x118] sm:$0xff]
  %v1424 = vld [vmem:[%s3 + $0x120] sm:$0xff]
  %v1425 = vld [vmem:[%s3 + $0x128] sm:$0xff]
  %v1426 = vld [vmem:[%s3 + $0x130] sm:$0xff]
  %v1427 = vld [vmem:[%s3 + $0x138] sm:$0xff]
  %v1428 = vld [vmem:[%s3 + $0x140] sm:$0xff]
  %v1429 = vld [vmem:[%s3 + $0x148] sm:$0xff]
  %v1430 = vld [vmem:[%s3 + $0x150] sm:$0xff]
  %v1431 = vld [vmem:[%s3 + $0x158] sm:$0xff]
  %v1432 = vld [vmem:[%s3 + $0x160] sm:$0xff]
  %v1433 = vld [vmem:[%s3 + $0x168] sm:$0xff]
  %v1434 = vld [vmem:[%s3 + $0x170] sm:$0xff]
  %v1435 = vld [vmem:[%s3 + $0x178] sm:$0xff]
  %v1436 = vld [vmem:[%s3 + $0x180] sm:$0xff]
  %v1437 = vld [vmem:[%s3 + $0x188] sm:$0xff]
  %v1438 = vld [vmem:[%s3 + $0x190] sm:$0xff]
  %v1439 = vld [vmem:[%s3 + $0x198] sm:$0xff]
  %v1440 = vld [vmem:[%s3 + $0x1a0] sm:$0xff]
  %v1441 = vld [vmem:[%s3 + $0x1a8] sm:$0xff]
  %v1442 = vld [vmem:[%s3 + $0x1b0] sm:$0xff]
  %v1443 = vld [vmem:[%s3 + $0x1b8] sm:$0xff]
  %v1444 = vld [vmem:[%s3 + $0x1c0] sm:$0xff]
  %v1445 = vld [vmem:[%s3 + $0x1c8] sm:$0xff]
  %v1446 = vld [vmem:[%s3 + $0x1d0] sm:$0xff]
  %v1447 = vld [vmem:[%s3 + $0x1d8] sm:$0xff]
  %v1448 = vld [vmem:[%s3 + $0x1e0] sm:$0xff]
  %v1449 = vld [vmem:[%s3 + $0x1e8] sm:$0xff]
  %v1450 = vld [vmem:[%s3 + $0x1f0] sm:$0xff]
  %v1451 = vld [vmem:[%s3 + $0x1f8] sm:$0xff]
  %v1452 = vld [vmem:[%s4] sm:$0x3]
  %v1454 = vlaneseq
  %v1455 = vshrl.u32 %v1454, 7
  %v1456 = vsub.s32 0, %v1455
  %v1457 = vrot.slane %v1452, %v1456
  %v1458 = vlaneseq
  %v1459 = vshrl.u32 %v1458, 7
  %v1460 = vsub.s32 1, %v1459
  %v1461 = vrot.slane %v1452, %v1460
  %v1528 = vunpack.c.l.b16 %v1388
  %v1529 = vunpack.c.h.b16 %v1388
  %v1530 = vunpack.c.l.b16 %v1389
  %v1531 = vunpack.c.h.b16 %v1389
  %v1532 = vunpack.c.l.b16 %v1390
  %v1533 = vunpack.c.h.b16 %v1390
  %v1534 = vunpack.c.l.b16 %v1391
  %v1535 = vunpack.c.h.b16 %v1391
  %v1536 = vunpack.c.l.b16 %v1392
  %v1537 = vunpack.c.h.b16 %v1392
  %v1538 = vunpack.c.l.b16 %v1393
  %v1539 = vunpack.c.h.b16 %v1393
  %v1540 = vunpack.c.l.b16 %v1394
  %v1541 = vunpack.c.h.b16 %v1394
  %v1542 = vunpack.c.l.b16 %v1395
  %v1543 = vunpack.c.h.b16 %v1395
  %v1544 = vunpack.c.l.b16 %v1396
  %v1545 = vunpack.c.h.b16 %v1396
  %v1546 = vunpack.c.l.b16 %v1397
  %v1547 = vunpack.c.h.b16 %v1397
  %v1548 = vunpack.c.l.b16 %v1398
  %v1549 = vunpack.c.h.b16 %v1398
  %v1550 = vunpack.c.l.b16 %v1399
  %v1551 = vunpack.c.h.b16 %v1399
  %v1552 = vunpack.c.l.b16 %v1400
  %v1553 = vunpack.c.h.b16 %v1400
  %v1554 = vunpack.c.l.b16 %v1401
  %v1555 = vunpack.c.h.b16 %v1401
  %v1556 = vunpack.c.l.b16 %v1402
  %v1557 = vunpack.c.h.b16 %v1402
  %v1558 = vunpack.c.l.b16 %v1403
  %v1559 = vunpack.c.h.b16 %v1403
  %v1560 = vunpack.c.l.b16 %v1404
  %v1561 = vunpack.c.h.b16 %v1404
  %v1562 = vunpack.c.l.b16 %v1405
  %v1563 = vunpack.c.h.b16 %v1405
  %v1564 = vunpack.c.l.b16 %v1406
  %v1565 = vunpack.c.h.b16 %v1406
  %v1566 = vunpack.c.l.b16 %v1407
  %v1567 = vunpack.c.h.b16 %v1407
  %v1568 = vunpack.c.l.b16 %v1408
  %v1569 = vunpack.c.h.b16 %v1408
  %v1570 = vunpack.c.l.b16 %v1409
  %v1571 = vunpack.c.h.b16 %v1409
  %v1572 = vunpack.c.l.b16 %v1410
  %v1573 = vunpack.c.h.b16 %v1410
  %v1574 = vunpack.c.l.b16 %v1411
  %v1575 = vunpack.c.h.b16 %v1411
  %v1576 = vunpack.c.l.b16 %v1412
  %v1577 = vunpack.c.h.b16 %v1412
  %v1578 = vunpack.c.l.b16 %v1413
  %v1579 = vunpack.c.h.b16 %v1413
  %v1580 = vunpack.c.l.b16 %v1414
  %v1581 = vunpack.c.h.b16 %v1414
  %v1582 = vunpack.c.l.b16 %v1415
  %v1583 = vunpack.c.h.b16 %v1415
  %v1584 = vunpack.c.l.b16 %v1416
  %v1585 = vunpack.c.h.b16 %v1416
  %v1586 = vunpack.c.l.b16 %v1417
  %v1587 = vunpack.c.h.b16 %v1417
  %v1588 = vunpack.c.l.b16 %v1418
  %v1589 = vunpack.c.h.b16 %v1418
  %v1590 = vunpack.c.l.b16 %v1419
  %v1591 = vunpack.c.h.b16 %v1419
  %v1592 = vunpack.c.l.b16 %v1420
  %v1593 = vunpack.c.h.b16 %v1420
  %v1594 = vunpack.c.l.b16 %v1421
  %v1595 = vunpack.c.h.b16 %v1421
  %v1596 = vunpack.c.l.b16 %v1422
  %v1597 = vunpack.c.h.b16 %v1422
  %v1598 = vunpack.c.l.b16 %v1423
  %v1599 = vunpack.c.h.b16 %v1423
  %v1600 = vunpack.c.l.b16 %v1424
  %v1601 = vunpack.c.h.b16 %v1424
  %v1602 = vunpack.c.l.b16 %v1425
  %v1603 = vunpack.c.h.b16 %v1425
  %v1604 = vunpack.c.l.b16 %v1426
  %v1605 = vunpack.c.h.b16 %v1426
  %v1606 = vunpack.c.l.b16 %v1427
  %v1607 = vunpack.c.h.b16 %v1427
  %v1608 = vunpack.c.l.b16 %v1428
  %v1609 = vunpack.c.h.b16 %v1428
  %v1610 = vunpack.c.l.b16 %v1429
  %v1611 = vunpack.c.h.b16 %v1429
  %v1612 = vunpack.c.l.b16 %v1430
  %v1613 = vunpack.c.h.b16 %v1430
  %v1614 = vunpack.c.l.b16 %v1431
  %v1615 = vunpack.c.h.b16 %v1431
  %v1616 = vunpack.c.l.b16 %v1432
  %v1617 = vunpack.c.h.b16 %v1432
  %v1618 = vunpack.c.l.b16 %v1433
  %v1619 = vunpack.c.h.b16 %v1433
  %v1620 = vunpack.c.l.b16 %v1434
  %v1621 = vunpack.c.h.b16 %v1434
  %v1622 = vunpack.c.l.b16 %v1435
  %v1623 = vunpack.c.h.b16 %v1435
  %v1624 = vunpack.c.l.b16 %v1436
  %v1625 = vunpack.c.h.b16 %v1436
  %v1626 = vunpack.c.l.b16 %v1437
  %v1627 = vunpack.c.h.b16 %v1437
  %v1628 = vunpack.c.l.b16 %v1438
  %v1629 = vunpack.c.h.b16 %v1438
  %v1630 = vunpack.c.l.b16 %v1439
  %v1631 = vunpack.c.h.b16 %v1439
  %v1632 = vunpack.c.l.b16 %v1440
  %v1633 = vunpack.c.h.b16 %v1440
  %v1634 = vunpack.c.l.b16 %v1441
  %v1635 = vunpack.c.h.b16 %v1441
  %v1636 = vunpack.c.l.b16 %v1442
  %v1637 = vunpack.c.h.b16 %v1442
  %v1638 = vunpack.c.l.b16 %v1443
  %v1639 = vunpack.c.h.b16 %v1443
  %v1640 = vunpack.c.l.b16 %v1444
  %v1641 = vunpack.c.h.b16 %v1444
  %v1642 = vunpack.c.l.b16 %v1445
  %v1643 = vunpack.c.h.b16 %v1445
  %v1644 = vunpack.c.l.b16 %v1446
  %v1645 = vunpack.c.h.b16 %v1446
  %v1646 = vunpack.c.l.b16 %v1447
  %v1647 = vunpack.c.h.b16 %v1447
  %v1648 = vunpack.c.l.b16 %v1448
  %v1649 = vunpack.c.h.b16 %v1448
  %v1650 = vunpack.c.l.b16 %v1449
  %v1651 = vunpack.c.h.b16 %v1449
  %v1652 = vunpack.c.l.b16 %v1450
  %v1653 = vunpack.c.h.b16 %v1450
  %v1654 = vunpack.c.l.b16 %v1451
  %v1655 = vunpack.c.h.b16 %v1451
  %v1656 = vpack.c.b16 %v1530, %v1528
  %v1657 = vpack.c.b16 %v1531, %v1529
  %v1658 = vpack.c.b16 %v1534, %v1532
  %v1659 = vpack.c.b16 %v1535, %v1533
  %v1660 = vpack.c.b16 %v1538, %v1536
  %v1661 = vpack.c.b16 %v1539, %v1537
  %v1662 = vpack.c.b16 %v1542, %v1540
  %v1663 = vpack.c.b16 %v1543, %v1541
  %v1664 = vpack.c.b16 %v1546, %v1544
  %v1665 = vpack.c.b16 %v1547, %v1545
  %v1666 = vpack.c.b16 %v1550, %v1548
  %v1667 = vpack.c.b16 %v1551, %v1549
  %v1668 = vpack.c.b16 %v1554, %v1552
  %v1669 = vpack.c.b16 %v1555, %v1553
  %v1670 = vpack.c.b16 %v1558, %v1556
  %v1671 = vpack.c.b16 %v1559, %v1557
  %v1672 = vpack.c.b16 %v1562, %v1560
  %v1673 = vpack.c.b16 %v1563, %v1561
  %v1674 = vpack.c.b16 %v1566, %v1564
  %v1675 = vpack.c.b16 %v1567, %v1565
  %v1676 = vpack.c.b16 %v1570, %v1568
  %v1677 = vpack.c.b16 %v1571, %v1569
  %v1678 = vpack.c.b16 %v1574, %v1572
  %v1679 = vpack.c.b16 %v1575, %v1573
  %v1680 = vpack.c.b16 %v1578, %v1576
  %v1681 = vpack.c.b16 %v1579, %v1577
  %v1682 = vpack.c.b16 %v1582, %v1580
  %v1683 = vpack.c.b16 %v1583, %v1581
  %v1684 = vpack.c.b16 %v1586, %v1584
  %v1685 = vpack.c.b16 %v1587, %v1585
  %v1686 = vpack.c.b16 %v1590, %v1588
  %v1687 = vpack.c.b16 %v1591, %v1589
  %v1688 = vpack.c.b16 %v1594, %v1592
  %v1689 = vpack.c.b16 %v1595, %v1593
  %v1690 = vpack.c.b16 %v1598, %v1596
  %v1691 = vpack.c.b16 %v1599, %v1597
  %v1692 = vpack.c.b16 %v1602, %v1600
  %v1693 = vpack.c.b16 %v1603, %v1601
  %v1694 = vpack.c.b16 %v1606, %v1604
  %v1695 = vpack.c.b16 %v1607, %v1605
  %v1696 = vpack.c.b16 %v1610, %v1608
  %v1697 = vpack.c.b16 %v1611, %v1609
  %v1698 = vpack.c.b16 %v1614, %v1612
  %v1699 = vpack.c.b16 %v1615, %v1613
  %v1700 = vpack.c.b16 %v1618, %v1616
  %v1701 = vpack.c.b16 %v1619, %v1617
  %v1702 = vpack.c.b16 %v1622, %v1620
  %v1703 = vpack.c.b16 %v1623, %v1621
  %v1704 = vpack.c.b16 %v1626, %v1624
  %v1705 = vpack.c.b16 %v1627, %v1625
  %v1706 = vpack.c.b16 %v1630, %v1628
  %v1707 = vpack.c.b16 %v1631, %v1629
  %v1708 = vpack.c.b16 %v1634, %v1632
  %v1709 = vpack.c.b16 %v1635, %v1633
  %v1710 = vpack.c.b16 %v1638, %v1636
  %v1711 = vpack.c.b16 %v1639, %v1637
  %v1712 = vpack.c.b16 %v1642, %v1640
  %v1713 = vpack.c.b16 %v1643, %v1641
  %v1714 = vpack.c.b16 %v1646, %v1644
  %v1715 = vpack.c.b16 %v1647, %v1645
  %v1716 = vpack.c.b16 %v1650, %v1648
  %v1717 = vpack.c.b16 %v1651, %v1649
  %v1718 = vpack.c.b16 %v1654, %v1652
  %v1719 = vpack.c.b16 %v1655, %v1653
  %1784 = vmatprep.subr.bf16.mxu0 %v1657
  %1785 = vmatpush1.bf16.msra.mxu0 %v1656
  %1786 = vmatprep.subr.bf16.mxu0 %v1659
  %1787 = vmatpush1.bf16.msra.mxu0 %v1658
  %1788 = vmatprep.subr.bf16.mxu0 %v1661
  %1789 = vmatpush1.bf16.msra.mxu0 %v1660
  %1790 = vmatprep.subr.bf16.mxu0 %v1663
  %1791 = vmatpush1.bf16.msra.mxu0 %v1662
  %1792 = vmatprep.subr.bf16.mxu0 %v1665
  %1793 = vmatpush1.bf16.msra.mxu0 %v1664
  %1794 = vmatprep.subr.bf16.mxu0 %v1667
  %1795 = vmatpush1.bf16.msra.mxu0 %v1666
  %1796 = vmatprep.subr.bf16.mxu0 %v1669
  %1797 = vmatpush1.bf16.msra.mxu0 %v1668
  %1798 = vmatprep.subr.bf16.mxu0 %v1671
  %1799 = vmatpush1.bf16.msra.mxu0 %v1670
  %1800 = vmatprep.subr.bf16.mxu0 %v1673
  %1801 = vmatpush1.bf16.msra.mxu0 %v1672
  %1802 = vmatprep.subr.bf16.mxu0 %v1675
  %1803 = vmatpush1.bf16.msra.mxu0 %v1674
  %1804 = vmatprep.subr.bf16.mxu0 %v1677
  %1805 = vmatpush1.bf16.msra.mxu0 %v1676
  %1806 = vmatprep.subr.bf16.mxu0 %v1679
  %1807 = vmatpush1.bf16.msra.mxu0 %v1678
  %1808 = vmatprep.subr.bf16.mxu0 %v1681
  %1809 = vmatpush1.bf16.msra.mxu0 %v1680
  %1810 = vmatprep.subr.bf16.mxu0 %v1683
  %1811 = vmatpush1.bf16.msra.mxu0 %v1682
  %1812 = vmatprep.subr.bf16.mxu0 %v1685
  %1813 = vmatpush1.bf16.msra.mxu0 %v1684
  %1814 = vmatprep.subr.bf16.mxu0 %v1687
  %1815 = vmatpush1.bf16.msra.mxu0 %v1686
  %1816 = vmatprep.mubr.bf16.mxu0 %v1261
  %1817 = vmatmul.mubr.bf16.gmra.mrb[0].mxu0 %v1260
  %v1818 = vpop.f32.mrb[0].mxu0
  %v1819 = vadd.f32 %v1457, %v1818
  %v1820 = vpop.f32.mrb[0].mxu0
  %v1821 = vadd.f32 %v1461, %v1820
  %v1822 = vpop.f32.mrb[0].mxu0
  %v1823 = vadd.f32 %v1457, %v1822
  %v1824 = vpop.f32.mrb[0].mxu0
  %v1825 = vadd.f32 %v1461, %v1824
  %1826 = vmatprep.mubr.bf16.mxu0 %v1265
  %1827 = vmatmul.mubr.bf16.gmra.mrb[0].mxu0 %v1264
  %v1828 = vpop.f32.mrb[0].mxu0
  %v1829 = vadd.f32 %v1457, %v1828
  %v1830 = vpop.f32.mrb[0].mxu0
  %v1831 = vadd.f32 %v1461, %v1830
  %v1832 = vpop.f32.mrb[0].mxu0
  %v1833 = vadd.f32 %v1457, %v1832
  %v1834 = vpop.f32.mrb[0].mxu0
  %v1835 = vadd.f32 %v1461, %v1834
  %1836 = vmatprep.mubr.bf16.mxu0 %v1269
  %1837 = vmatmul.mubr.bf16.gmra.mrb[0].mxu0 %v1268
  %v1838 = vpop.f32.mrb[0].mxu0
  %v1839 = vadd.f32 %v1457, %v1838
  %v1840 = vpop.f32.mrb[0].mxu0
  %v1841 = vadd.f32 %v1461, %v1840
  %v1842 = vpop.f32.mrb[0].mxu0
  %v1843 = vadd.f32 %v1457, %v1842
  %v1844 = vpop.f32.mrb[0].mxu0
  %v1845 = vadd.f32 %v1461, %v1844
  %1846 = vmatprep.mubr.bf16.mxu0 %v1273
  %1847 = vmatmul.mubr.bf16.gmra.mrb[0].mxu0 %v1272
  %v1848 = vpop.f32.mrb[0].mxu0
  %v1849 = vadd.f32 %v1457, %v1848
  %v1850 = vpop.f32.mrb[0].mxu0
  %v1851 = vadd.f32 %v1461, %v1850
  %v1852 = vpop.f32.mrb[0].mxu0
  %v1853 = vadd.f32 %v1457, %v1852
  %v1854 = vpop.f32.mrb[0].mxu0
  %v1855 = vadd.f32 %v1461, %v1854
  %1856 = vmatprep.mubr.bf16.mxu0 %v1277
  %1857 = vmatmul.mubr.bf16.gmra.mrb[0].mxu0 %v1276
  %v1858 = vpop.f32.mrb[0].mxu0
  %v1859 = vadd.f32 %v1457, %v1858
  %v1860 = vpop.f32.mrb[0].mxu0
  %v1861 = vadd.f32 %v1461, %v1860
  %v1862 = vpop.f32.mrb[0].mxu0
  %v1863 = vadd.f32 %v1457, %v1862
  %v1864 = vpop.f32.mrb[0].mxu0
  %v1865 = vadd.f32 %v1461, %v1864
  %1866 = vmatprep.mubr.bf16.mxu0 %v1281
  %1867 = vmatmul.mubr.bf16.gmra.mrb[0].mxu0 %v1280
  %v1868 = vpop.f32.mrb[0].mxu0
  %v1869 = vadd.f32 %v1457, %v1868
  %v1870 = vpop.f32.mrb[0].mxu0
  %v1871 = vadd.f32 %v1461, %v1870
  %v1872 = vpop.f32.mrb[0].mxu0
  %v1873 = vadd.f32 %v1457, %v1872
  %v1874 = vpop.f32.mrb[0].mxu0
  %v1875 = vadd.f32 %v1461, %v1874
  %1876 = vmatprep.mubr.bf16.mxu0 %v1285
  %1877 = vmatmul.mubr.bf16.gmra.mrb[0].mxu0 %v1284
  %v1878 = vpop.f32.mrb[0].mxu0
  %v1879 = vadd.f32 %v1457, %v1878
  %v1880 = vpop.f32.mrb[0].mxu0
  %v1881 = vadd.f32 %v1461, %v1880
  %v1882 = vpop.f32.mrb[0].mxu0
  %v1883 = vadd.f32 %v1457, %v1882
  %v1884 = vpop.f32.mrb[0].mxu0
  %v1885 = vadd.f32 %v1461, %v1884
  %1886 = vmatprep.mubr.bf16.mxu0 %v1289
  %1887 = vmatmul.mubr.bf16.gmra.mrb[0].mxu0 %v1288
  %v1888 = vpop.f32.mrb[0].mxu0
  %v1889 = vadd.f32 %v1457, %v1888
  %v1890 = vpop.f32.mrb[0].mxu0
  %v1891 = vadd.f32 %v1461, %v1890
  %v1892 = vpop.f32.mrb[0].mxu0
  %v1893 = vadd.f32 %v1457, %v1892
  %v1894 = vpop.f32.mrb[0].mxu0
  %v1895 = vadd.f32 %v1461, %v1894
  %1896 = vmatprep.mubr.bf16.mxu0 %v1293
  %1897 = vmatmul.mubr.bf16.gmra.mrb[0].mxu0 %v1292
  %v1898 = vpop.f32.mrb[0].mxu0
  %v1899 = vadd.f32 %v1457, %v1898
  %v1900 = vpop.f32.mrb[0].mxu0
  %v1901 = vadd.f32 %v1461, %v1900
  %v1902 = vpop.f32.mrb[0].mxu0
  %v1903 = vadd.f32 %v1457, %v1902
  %v1904 = vpop.f32.mrb[0].mxu0
  %v1905 = vadd.f32 %v1461, %v1904
  %1906 = vmatprep.mubr.bf16.mxu0 %v1297
  %1907 = vmatmul.mubr.bf16.gmra.mrb[0].mxu0 %v1296
  %v1908 = vpop.f32.mrb[0].mxu0
  %v1909 = vadd.f32 %v1457, %v1908
  %v1910 = vpop.f32.mrb[0].mxu0
  %v1911 = vadd.f32 %v1461, %v1910
  %v1912 = vpop.f32.mrb[0].mxu0
  %v1913 = vadd.f32 %v1457, %v1912
  %v1914 = vpop.f32.mrb[0].mxu0
  %v1915 = vadd.f32 %v1461, %v1914
  %1916 = vmatprep.mubr.bf16.mxu0 %v1301
  %1917 = vmatmul.mubr.bf16.gmra.mrb[0].mxu0 %v1300
  %v1918 = vpop.f32.mrb[0].mxu0
  %v1919 = vadd.f32 %v1457, %v1918
  %v1920 = vpop.f32.mrb[0].mxu0
  %v1921 = vadd.f32 %v1461, %v1920
  %v1922 = vpop.f32.mrb[0].mxu0
  %v1923 = vadd.f32 %v1457, %v1922
  %v1924 = vpop.f32.mrb[0].mxu0
  %v1925 = vadd.f32 %v1461, %v1924
  %1926 = vmatprep.mubr.bf16.mxu0 %v1305
  %1927 = vmatmul.mubr.bf16.gmra.mrb[0].mxu0 %v1304
  %v1928 = vpop.f32.mrb[0].mxu0
  %v1929 = vadd.f32 %v1457, %v1928
  %v1930 = vpop.f32.mrb[0].mxu0
  %v1931 = vadd.f32 %v1461, %v1930
  %v1932 = vpop.f32.mrb[0].mxu0
  %v1933 = vadd.f32 %v1457, %v1932
  %v1934 = vpop.f32.mrb[0].mxu0
  %v1935 = vadd.f32 %v1461, %v1934
  %1936 = vmatprep.mubr.bf16.mxu0 %v1309
  %1937 = vmatmul.mubr.bf16.gmra.mrb[0].mxu0 %v1308
  %v1938 = vpop.f32.mrb[0].mxu0
  %v1939 = vadd.f32 %v1457, %v1938
  %v1940 = vpop.f32.mrb[0].mxu0
  %v1941 = vadd.f32 %v1461, %v1940
  %v1942 = vpop.f32.mrb[0].mxu0
  %v1943 = vadd.f32 %v1457, %v1942
  %v1944 = vpop.f32.mrb[0].mxu0
  %v1945 = vadd.f32 %v1461, %v1944
  %1946 = vmatprep.mubr.bf16.mxu0 %v1313
  %1947 = vmatmul.mubr.bf16.gmra.mrb[0].mxu0 %v1312
  %v1948 = vpop.f32.mrb[0].mxu0
  %v1949 = vadd.f32 %v1457, %v1948
  %v1950 = vpop.f32.mrb[0].mxu0
  %v1951 = vadd.f32 %v1461, %v1950
  %v1952 = vpop.f32.mrb[0].mxu0
  %v1953 = vadd.f32 %v1457, %v1952
  %v1954 = vpop.f32.mrb[0].mxu0
  %v1955 = vadd.f32 %v1461, %v1954
  %1956 = vmatprep.mubr.bf16.mxu0 %v1317
  %1957 = vmatmul.mubr.bf16.gmra.mrb[0].mxu0 %v1316
  %v1958 = vpop.f32.mrb[0].mxu0
  %v1959 = vadd.f32 %v1457, %v1958
  %v1960 = vpop.f32.mrb[0].mxu0
  %v1961 = vadd.f32 %v1461, %v1960
  %v1962 = vpop.f32.mrb[0].mxu0
  %v1963 = vadd.f32 %v1457, %v1962
  %v1964 = vpop.f32.mrb[0].mxu0
  %v1965 = vadd.f32 %v1461, %v1964
  %1966 = vmatprep.mubr.bf16.mxu0 %v1321
  %1967 = vmatmul.mubr.bf16.gmra.mrb[0].mxu0 %v1320
  %v1968 = vpop.f32.mrb[0].mxu0
  %v1969 = vadd.f32 %v1457, %v1968
  %v1970 = vpop.f32.mrb[0].mxu0
  %v1971 = vadd.f32 %v1461, %v1970
  %v1972 = vpop.f32.mrb[0].mxu0
  %v1973 = vadd.f32 %v1457, %v1972
  %v1974 = vpop.f32.mrb[0].mxu0
  %v1975 = vadd.f32 %v1461, %v1974
  %1976 = vmatprep.mubr.bf16.mxu0 %v1325
  %1977 = vmatmul.mubr.bf16.gmra.mrb[0].mxu0 %v1324
  %v1978 = vpop.f32.mrb[0].mxu0
  %v1979 = vadd.f32 %v1457, %v1978
  %v1980 = vpop.f32.mrb[0].mxu0
  %v1981 = vadd.f32 %v1461, %v1980
  %v1982 = vpop.f32.mrb[0].mxu0
  %v1983 = vadd.f32 %v1457, %v1982
  %v1984 = vpop.f32.mrb[0].mxu0
  %v1985 = vadd.f32 %v1461, %v1984
  %1986 = vmatprep.mubr.bf16.mxu0 %v1329
  %1987 = vmatmul.mubr.bf16.gmra.mrb[0].mxu0 %v1328
  %v1988 = vpop.f32.mrb[0].mxu0
  %v1989 = vadd.f32 %v1457, %v1988
  %v1990 = vpop.f32.mrb[0].mxu0
  %v1991 = vadd.f32 %v1461, %v1990
  %v1992 = vpop.f32.mrb[0].mxu0
  %v1993 = vadd.f32 %v1457, %v1992
  %v1994 = vpop.f32.mrb[0].mxu0
  %v1995 = vadd.f32 %v1461, %v1994
  %1996 = vmatprep.mubr.bf16.mxu0 %v1333
  %1997 = vmatmul.mubr.bf16.gmra.mrb[0].mxu0 %v1332
  %v1998 = vpop.f32.mrb[0].mxu0
  %v1999 = vadd.f32 %v1457, %v1998
  %v2000 = vpop.f32.mrb[0].mxu0
  %v2001 = vadd.f32 %v1461, %v2000
  %v2002 = vpop.f32.mrb[0].mxu0
  %v2003 = vadd.f32 %v1457, %v2002
  %v2004 = vpop.f32.mrb[0].mxu0
  %v2005 = vadd.f32 %v1461, %v2004
  %2006 = vmatprep.mubr.bf16.mxu0 %v1337
  %2007 = vmatmul.mubr.bf16.gmra.mrb[0].mxu0 %v1336
  %v2008 = vpop.f32.mrb[0].mxu0
  %v2009 = vadd.f32 %v1457, %v2008
  %v2010 = vpop.f32.mrb[0].mxu0
  %v2011 = vadd.f32 %v1461, %v2010
  %v2012 = vpop.f32.mrb[0].mxu0
  %v2013 = vadd.f32 %v1457, %v2012
  %v2014 = vpop.f32.mrb[0].mxu0
  %v2015 = vadd.f32 %v1461, %v2014
  %2016 = vmatprep.mubr.bf16.mxu0 %v1341
  %2017 = vmatmul.mubr.bf16.gmra.mrb[0].mxu0 %v1340
  %v2018 = vpop.f32.mrb[0].mxu0
  %v2019 = vadd.f32 %v1457, %v2018
  %v2020 = vpop.f32.mrb[0].mxu0
  %v2021 = vadd.f32 %v1461, %v2020
  %v2022 = vpop.f32.mrb[0].mxu0
  %v2023 = vadd.f32 %v1457, %v2022
  %v2024 = vpop.f32.mrb[0].mxu0
  %v2025 = vadd.f32 %v1461, %v2024
  %2026 = vmatprep.mubr.bf16.mxu0 %v1345
  %2027 = vmatmul.mubr.bf16.gmra.mrb[0].mxu0 %v1344
  %v2028 = vpop.f32.mrb[0].mxu0
  %v2029 = vadd.f32 %v1457, %v2028
  %v2030 = vpop.f32.mrb[0].mxu0
  %v2031 = vadd.f32 %v1461, %v2030
  %v2032 = vpop.f32.mrb[0].mxu0
  %v2033 = vadd.f32 %v1457, %v2032
  %v2034 = vpop.f32.mrb[0].mxu0
  %v2035 = vadd.f32 %v1461, %v2034
  %2036 = vmatprep.mubr.bf16.mxu0 %v1349
  %2037 = vmatmul.mubr.bf16.gmra.mrb[0].mxu0 %v1348
  %v2038 = vpop.f32.mrb[0].mxu0
  %v2039 = vadd.f32 %v1457, %v2038
  %v2040 = vpop.f32.mrb[0].mxu0
  %v2041 = vadd.f32 %v1461, %v2040
  %v2042 = vpop.f32.mrb[0].mxu0
  %v2043 = vadd.f32 %v1457, %v2042
  %v2044 = vpop.f32.mrb[0].mxu0
  %v2045 = vadd.f32 %v1461, %v2044
  %2046 = vmatprep.mubr.bf16.mxu0 %v1353
  %2047 = vmatmul.mubr.bf16.gmra.mrb[0].mxu0 %v1352
  %v2048 = vpop.f32.mrb[0].mxu0
  %v2049 = vadd.f32 %v1457, %v2048
  %v2050 = vpop.f32.mrb[0].mxu0
  %v2051 = vadd.f32 %v1461, %v2050
  %v2052 = vpop.f32.mrb[0].mxu0
  %v2053 = vadd.f32 %v1457, %v2052
  %v2054 = vpop.f32.mrb[0].mxu0
  %v2055 = vadd.f32 %v1461, %v2054
  %2056 = vmatprep.mubr.bf16.mxu0 %v1357
  %2057 = vmatmul.mubr.bf16.gmra.mrb[0].mxu0 %v1356
  %v2058 = vpop.f32.mrb[0].mxu0
  %v2059 = vadd.f32 %v1457, %v2058
  %v2060 = vpop.f32.mrb[0].mxu0
  %v2061 = vadd.f32 %v1461, %v2060
  %v2062 = vpop.f32.mrb[0].mxu0
  %v2063 = vadd.f32 %v1457, %v2062
  %v2064 = vpop.f32.mrb[0].mxu0
  %v2065 = vadd.f32 %v1461, %v2064
  %2066 = vmatprep.mubr.bf16.mxu0 %v1361
  %2067 = vmatmul.mubr.bf16.gmra.mrb[0].mxu0 %v1360
  %v2068 = vpop.f32.mrb[0].mxu0
  %v2069 = vadd.f32 %v1457, %v2068
  %v2070 = vpop.f32.mrb[0].mxu0
  %v2071 = vadd.f32 %v1461, %v2070
  %v2072 = vpop.f32.mrb[0].mxu0
  %v2073 = vadd.f32 %v1457, %v2072
  %v2074 = vpop.f32.mrb[0].mxu0
  %v2075 = vadd.f32 %v1461, %v2074
  %2076 = vmatprep.mubr.bf16.mxu0 %v1365
  %2077 = vmatmul.mubr.bf16.gmra.mrb[0].mxu0 %v1364
  %v2078 = vpop.f32.mrb[0].mxu0
  %v2079 = vadd.f32 %v1457, %v2078
  %v2080 = vpop.f32.mrb[0].mxu0
  %v2081 = vadd.f32 %v1461, %v2080
  %v2082 = vpop.f32.mrb[0].mxu0
  %v2083 = vadd.f32 %v1457, %v2082
  %v2084 = vpop.f32.mrb[0].mxu0
  %v2085 = vadd.f32 %v1461, %v2084
  %2086 = vmatprep.mubr.bf16.mxu0 %v1369
  %2087 = vmatmul.mubr.bf16.gmra.mrb[0].mxu0 %v1368
  %v2088 = vpop.f32.mrb[0].mxu0
  %v2089 = vadd.f32 %v1457, %v2088
  %v2090 = vpop.f32.mrb[0].mxu0
  %v2091 = vadd.f32 %v1461, %v2090
  %v2092 = vpop.f32.mrb[0].mxu0
  %v2093 = vadd.f32 %v1457, %v2092
  %v2094 = vpop.f32.mrb[0].mxu0
  %v2095 = vadd.f32 %v1461, %v2094
  %2096 = vmatprep.mubr.bf16.mxu0 %v1373
  %2097 = vmatmul.mubr.bf16.gmra.mrb[0].mxu0 %v1372
  %v2098 = vpop.f32.mrb[0].mxu0
  %v2099 = vadd.f32 %v1457, %v2098
  %v2100 = vpop.f32.mrb[0].mxu0
  %v2101 = vadd.f32 %v1461, %v2100
  %v2102 = vpop.f32.mrb[0].mxu0
  %v2103 = vadd.f32 %v1457, %v2102
  %v2104 = vpop.f32.mrb[0].mxu0
  %v2105 = vadd.f32 %v1461, %v2104
  %2106 = vmatprep.mubr.bf16.mxu0 %v1377
  %2107 = vmatmul.mubr.bf16.gmra.mrb[0].mxu0 %v1376
  %v2108 = vpop.f32.mrb[0].mxu0
  %v2109 = vadd.f32 %v1457, %v2108
  %v2110 = vpop.f32.mrb[0].mxu0
  %v2111 = vadd.f32 %v1461, %v2110
  %v2112 = vpop.f32.mrb[0].mxu0
  %v2113 = vadd.f32 %v1457, %v2112
  %v2114 = vpop.f32.mrb[0].mxu0
  %v2115 = vadd.f32 %v1461, %v2114
  %2116 = vmatprep.mubr.bf16.mxu0 %v1381
  %2117 = vmatmul.mubr.bf16.gmra.mrb[0].mxu0 %v1380
  %v2118 = vpop.f32.mrb[0].mxu0
  %v2119 = vadd.f32 %v1457, %v2118
  %v2120 = vpop.f32.mrb[0].mxu0
  %v2121 = vadd.f32 %v1461, %v2120
  %v2122 = vpop.f32.mrb[0].mxu0
  %v2123 = vadd.f32 %v1457, %v2122
  %v2124 = vpop.f32.mrb[0].mxu0
  %v2125 = vadd.f32 %v1461, %v2124
  %2126 = vmatprep.mubr.bf16.mxu0 %v1385
  %2127 = vmatmul.mubr.bf16.gmra.mrb[0].mxu0 %v1384
  %v2128 = vpop.f32.mrb[0].mxu0
  %v2129 = vadd.f32 %v1457, %v2128
  %v2130 = vpop.f32.mrb[0].mxu0
  %v2131 = vadd.f32 %v1461, %v2130
  %v2132 = vpop.f32.mrb[0].mxu0
  %v2133 = vadd.f32 %v1457, %v2132
  %v2134 = vpop.f32.mrb[0].mxu0
  %v2135 = vadd.f32 %v1461, %v2134
  %2136 = vdwg.mxu0
  %2137 = vmatprep.subr.bf16.mxu0 %v1689
  %2138 = vmatpush1.bf16.msra.mxu0 %v1688
  %2139 = vmatprep.subr.bf16.mxu0 %v1691
  %2140 = vmatpush1.bf16.msra.mxu0 %v1690
  %2141 = vmatprep.subr.bf16.mxu0 %v1693
  %2142 = vmatpush1.bf16.msra.mxu0 %v1692
  %2143 = vmatprep.subr.bf16.mxu0 %v1695
  %2144 = vmatpush1.bf16.msra.mxu0 %v1694
  %2145 = vmatprep.subr.bf16.mxu0 %v1697
  %2146 = vmatpush1.bf16.msra.mxu0 %v1696
  %2147 = vmatprep.subr.bf16.mxu0 %v1699
  %2148 = vmatpush1.bf16.msra.mxu0 %v1698
  %2149 = vmatprep.subr.bf16.mxu0 %v1701
  %2150 = vmatpush1.bf16.msra.mxu0 %v1700
  %2151 = vmatprep.subr.bf16.mxu0 %v1703
  %2152 = vmatpush1.bf16.msra.mxu0 %v1702
  %2153 = vmatprep.subr.bf16.mxu0 %v1705
  %2154 = vmatpush1.bf16.msra.mxu0 %v1704
  %2155 = vmatprep.subr.bf16.mxu0 %v1707
  %2156 = vmatpush1.bf16.msra.mxu0 %v1706
  %2157 = vmatprep.subr.bf16.mxu0 %v1709
  %2158 = vmatpush1.bf16.msra.mxu0 %v1708
  %2159 = vmatprep.subr.bf16.mxu0 %v1711
  %2160 = vmatpush1.bf16.msra.mxu0 %v1710
  %2161 = vmatprep.subr.bf16.mxu0 %v1713
  %2162 = vmatpush1.bf16.msra.mxu0 %v1712
  %2163 = vmatprep.subr.bf16.mxu0 %v1715
  %2164 = vmatpush1.bf16.msra.mxu0 %v1714
  %2165 = vmatprep.subr.bf16.mxu0 %v1717
  %2166 = vmatpush1.bf16.msra.mxu0 %v1716
  %2167 = vmatprep.subr.bf16.mxu0 %v1719
  %2168 = vmatpush1.bf16.msra.mxu0 %v1718
  %2169 = vmatprep.mubr.bf16.mxu0 %v1263
  %2170 = vmatmul.mubr.bf16.gmra.mrb[0].mxu0 %v1262
  %v2171 = vpop.f32.mrb[0].mxu0
  %v2172 = vadd.f32 %v1819, %v2171
  %v2173 = vpop.f32.mrb[0].mxu0
  %v2174 = vadd.f32 %v1821, %v2173
  %v2175 = vpop.f32.mrb[0].mxu0
  %v2176 = vadd.f32 %v1823, %v2175
  %v2177 = vpop.f32.mrb[0].mxu0
  %v2178 = vadd.f32 %v1825, %v2177
  %2179 = vmatprep.mubr.bf16.mxu0 %v1267
  %2180 = vmatmul.mubr.bf16.gmra.mrb[0].mxu0 %v1266
  %v2181 = vpop.f32.mrb[0].mxu0
  %v2182 = vadd.f32 %v1829, %v2181
  %v2183 = vpop.f32.mrb[0].mxu0
  %v2184 = vadd.f32 %v1831, %v2183
  %v2185 = vpop.f32.mrb[0].mxu0
  %v2186 = vadd.f32 %v1833, %v2185
  %v2187 = vpop.f32.mrb[0].mxu0
  %v2188 = vadd.f32 %v1835, %v2187
  %2189 = vmatprep.mubr.bf16.mxu0 %v1271
  %2190 = vmatmul.mubr.bf16.gmra.mrb[0].mxu0 %v1270
  %v2191 = vpop.f32.mrb[0].mxu0
  %v2192 = vadd.f32 %v1839, %v2191
  %v2193 = vpop.f32.mrb[0].mxu0
  %v2194 = vadd.f32 %v1841, %v2193
  %v2195 = vpop.f32.mrb[0].mxu0
  %v2196 = vadd.f32 %v1843, %v2195
  %v2197 = vpop.f32.mrb[0].mxu0
  %v2198 = vadd.f32 %v1845, %v2197
  %2199 = vmatprep.mubr.bf16.mxu0 %v1275
  %2200 = vmatmul.mubr.bf16.gmra.mrb[0].mxu0 %v1274
  %v2201 = vpop.f32.mrb[0].mxu0
  %v2202 = vadd.f32 %v1849, %v2201
  %v2203 = vpop.f32.mrb[0].mxu0
  %v2204 = vadd.f32 %v1851, %v2203
  %v2205 = vpop.f32.mrb[0].mxu0
  %v2206 = vadd.f32 %v1853, %v2205
  %v2207 = vpop.f32.mrb[0].mxu0
  %v2208 = vadd.f32 %v1855, %v2207
  %2209 = vmatprep.mubr.bf16.mxu0 %v1279
  %2210 = vmatmul.mubr.bf16.gmra.mrb[0].mxu0 %v1278
  %v2211 = vpop.f32.mrb[0].mxu0
  %v2212 = vadd.f32 %v1859, %v2211
  %v2213 = vpop.f32.mrb[0].mxu0
  %v2214 = vadd.f32 %v1861, %v2213
  %v2215 = vpop.f32.mrb[0].mxu0
  %v2216 = vadd.f32 %v1863, %v2215
  %v2217 = vpop.f32.mrb[0].mxu0
  %v2218 = vadd.f32 %v1865, %v2217
  %2219 = vmatprep.mubr.bf16.mxu0 %v1283
  %2220 = vmatmul.mubr.bf16.gmra.mrb[0].mxu0 %v1282
  %v2221 = vpop.f32.mrb[0].mxu0
  %v2222 = vadd.f32 %v1869, %v2221
  %v2223 = vpop.f32.mrb[0].mxu0
  %v2224 = vadd.f32 %v1871, %v2223
  %v2225 = vpop.f32.mrb[0].mxu0
  %v2226 = vadd.f32 %v1873, %v2225
  %v2227 = vpop.f32.mrb[0].mxu0
  %v2228 = vadd.f32 %v1875, %v2227
  %2229 = vmatprep.mubr.bf16.mxu0 %v1287
  %2230 = vmatmul.mubr.bf16.gmra.mrb[0].mxu0 %v1286
  %v2231 = vpop.f32.mrb[0].mxu0
  %v2232 = vadd.f32 %v1879, %v2231
  %v2233 = vpop.f32.mrb[0].mxu0
  %v2234 = vadd.f32 %v1881, %v2233
  %v2235 = vpop.f32.mrb[0].mxu0
  %v2236 = vadd.f32 %v1883, %v2235
  %v2237 = vpop.f32.mrb[0].mxu0
  %v2238 = vadd.f32 %v1885, %v2237
  %2239 = vmatprep.mubr.bf16.mxu0 %v1291
  %2240 = vmatmul.mubr.bf16.gmra.mrb[0].mxu0 %v1290
  %v2241 = vpop.f32.mrb[0].mxu0
  %v2242 = vadd.f32 %v1889, %v2241
  %v2243 = vpop.f32.mrb[0].mxu0
  %v2244 = vadd.f32 %v1891, %v2243
  %v2245 = vpop.f32.mrb[0].mxu0
  %v2246 = vadd.f32 %v1893, %v2245
  %v2247 = vpop.f32.mrb[0].mxu0
  %v2248 = vadd.f32 %v1895, %v2247
  %2249 = vmatprep.mubr.bf16.mxu0 %v1295
  %2250 = vmatmul.mubr.bf16.gmra.mrb[0].mxu0 %v1294
  %v2251 = vpop.f32.mrb[0].mxu0
  %v2252 = vadd.f32 %v1899, %v2251
  %v2253 = vpop.f32.mrb[0].mxu0
  %v2254 = vadd.f32 %v1901, %v2253
  %v2255 = vpop.f32.mrb[0].mxu0
  %v2256 = vadd.f32 %v1903, %v2255
  %v2257 = vpop.f32.mrb[0].mxu0
  %v2258 = vadd.f32 %v1905, %v2257
  %2259 = vmatprep.mubr.bf16.mxu0 %v1299
  %2260 = vmatmul.mubr.bf16.gmra.mrb[0].mxu0 %v1298
  %v2261 = vpop.f32.mrb[0].mxu0
  %v2262 = vadd.f32 %v1909, %v2261
  %v2263 = vpop.f32.mrb[0].mxu0
  %v2264 = vadd.f32 %v1911, %v2263
  %v2265 = vpop.f32.mrb[0].mxu0
  %v2266 = vadd.f32 %v1913, %v2265
  %v2267 = vpop.f32.mrb[0].mxu0
  %v2268 = vadd.f32 %v1915, %v2267
  %2269 = vmatprep.mubr.bf16.mxu0 %v1303
  %2270 = vmatmul.mubr.bf16.gmra.mrb[0].mxu0 %v1302
  %v2271 = vpop.f32.mrb[0].mxu0
  %v2272 = vadd.f32 %v1919, %v2271
  %v2273 = vpop.f32.mrb[0].mxu0
  %v2274 = vadd.f32 %v1921, %v2273
  %v2275 = vpop.f32.mrb[0].mxu0
  %v2276 = vadd.f32 %v1923, %v2275
  %v2277 = vpop.f32.mrb[0].mxu0
  %v2278 = vadd.f32 %v1925, %v2277
  %2279 = vmatprep.mubr.bf16.mxu0 %v1307
  %2280 = vmatmul.mubr.bf16.gmra.mrb[0].mxu0 %v1306
  %v2281 = vpop.f32.mrb[0].mxu0
  %v2282 = vadd.f32 %v1929, %v2281
  %v2283 = vpop.f32.mrb[0].mxu0
  %v2284 = vadd.f32 %v1931, %v2283
  %v2285 = vpop.f32.mrb[0].mxu0
  %v2286 = vadd.f32 %v1933, %v2285
  %v2287 = vpop.f32.mrb[0].mxu0
  %v2288 = vadd.f32 %v1935, %v2287
  %2289 = vmatprep.mubr.bf16.mxu0 %v1311
  %2290 = vmatmul.mubr.bf16.gmra.mrb[0].mxu0 %v1310
  %v2291 = vpop.f32.mrb[0].mxu0
  %v2292 = vadd.f32 %v1939, %v2291
  %v2293 = vpop.f32.mrb[0].mxu0
  %v2294 = vadd.f32 %v1941, %v2293
  %v2295 = vpop.f32.mrb[0].mxu0
  %v2296 = vadd.f32 %v1943, %v2295
  %v2297 = vpop.f32.mrb[0].mxu0
  %v2298 = vadd.f32 %v1945, %v2297
  %2299 = vmatprep.mubr.bf16.mxu0 %v1315
  %2300 = vmatmul.mubr.bf16.gmra.mrb[0].mxu0 %v1314
  %v2301 = vpop.f32.mrb[0].mxu0
  %v2302 = vadd.f32 %v1949, %v2301
  %v2303 = vpop.f32.mrb[0].mxu0
  %v2304 = vadd.f32 %v1951, %v2303
  %v2305 = vpop.f32.mrb[0].mxu0
  %v2306 = vadd.f32 %v1953, %v2305
  %v2307 = vpop.f32.mrb[0].mxu0
  %v2308 = vadd.f32 %v1955, %v2307
  %2309 = vmatprep.mubr.bf16.mxu0 %v1319
  %2310 = vmatmul.mubr.bf16.gmra.mrb[0].mxu0 %v1318
  %v2311 = vpop.f32.mrb[0].mxu0
  %v2312 = vadd.f32 %v1959, %v2311
  %v2313 = vpop.f32.mrb[0].mxu0
  %v2314 = vadd.f32 %v1961, %v2313
  %v2315 = vpop.f32.mrb[0].mxu0
  %v2316 = vadd.f32 %v1963, %v2315
  %v2317 = vpop.f32.mrb[0].mxu0
  %v2318 = vadd.f32 %v1965, %v2317
  %2319 = vmatprep.mubr.bf16.mxu0 %v1323
  %2320 = vmatmul.mubr.bf16.gmra.mrb[0].mxu0 %v1322
  %v2321 = vpop.f32.mrb[0].mxu0
  %v2322 = vadd.f32 %v1969, %v2321
  %v2323 = vpop.f32.mrb[0].mxu0
  %v2324 = vadd.f32 %v1971, %v2323
  %v2325 = vpop.f32.mrb[0].mxu0
  %v2326 = vadd.f32 %v1973, %v2325
  %v2327 = vpop.f32.mrb[0].mxu0
  %v2328 = vadd.f32 %v1975, %v2327
  %2329 = vmatprep.mubr.bf16.mxu0 %v1327
  %2330 = vmatmul.mubr.bf16.gmra.mrb[0].mxu0 %v1326
  %v2331 = vpop.f32.mrb[0].mxu0
  %v2332 = vadd.f32 %v1979, %v2331
  %v2333 = vpop.f32.mrb[0].mxu0
  %v2334 = vadd.f32 %v1981, %v2333
  %v2335 = vpop.f32.mrb[0].mxu0
  %v2336 = vadd.f32 %v1983, %v2335
  %v2337 = vpop.f32.mrb[0].mxu0
  %v2338 = vadd.f32 %v1985, %v2337
  %2339 = vmatprep.mubr.bf16.mxu0 %v1331
  %2340 = vmatmul.mubr.bf16.gmra.mrb[0].mxu0 %v1330
  %v2341 = vpop.f32.mrb[0].mxu0
  %v2342 = vadd.f32 %v1989, %v2341
  %v2343 = vpop.f32.mrb[0].mxu0
  %v2344 = vadd.f32 %v1991, %v2343
  %v2345 = vpop.f32.mrb[0].mxu0
  %v2346 = vadd.f32 %v1993, %v2345
  %v2347 = vpop.f32.mrb[0].mxu0
  %v2348 = vadd.f32 %v1995, %v2347
  %2349 = vmatprep.mubr.bf16.mxu0 %v1335
  %2350 = vmatmul.mubr.bf16.gmra.mrb[0].mxu0 %v1334
  %v2351 = vpop.f32.mrb[0].mxu0
  %v2352 = vadd.f32 %v1999, %v2351
  %v2353 = vpop.f32.mrb[0].mxu0
  %v2354 = vadd.f32 %v2001, %v2353
  %v2355 = vpop.f32.mrb[0].mxu0
  %v2356 = vadd.f32 %v2003, %v2355
  %v2357 = vpop.f32.mrb[0].mxu0
  %v2358 = vadd.f32 %v2005, %v2357
  %2359 = vmatprep.mubr.bf16.mxu0 %v1339
  %2360 = vmatmul.mubr.bf16.gmra.mrb[0].mxu0 %v1338
  %v2361 = vpop.f32.mrb[0].mxu0
  %v2362 = vadd.f32 %v2009, %v2361
  %v2363 = vpop.f32.mrb[0].mxu0
  %v2364 = vadd.f32 %v2011, %v2363
  %v2365 = vpop.f32.mrb[0].mxu0
  %v2366 = vadd.f32 %v2013, %v2365
  %v2367 = vpop.f32.mrb[0].mxu0
  %v2368 = vadd.f32 %v2015, %v2367
  %2369 = vmatprep.mubr.bf16.mxu0 %v1343
  %2370 = vmatmul.mubr.bf16.gmra.mrb[0].mxu0 %v1342
  %v2371 = vpop.f32.mrb[0].mxu0
  %v2372 = vadd.f32 %v2019, %v2371
  %v2373 = vpop.f32.mrb[0].mxu0
  %v2374 = vadd.f32 %v2021, %v2373
  %v2375 = vpop.f32.mrb[0].mxu0
  %v2376 = vadd.f32 %v2023, %v2375
  %v2377 = vpop.f32.mrb[0].mxu0
  %v2378 = vadd.f32 %v2025, %v2377
  %2379 = vmatprep.mubr.bf16.mxu0 %v1347
  %2380 = vmatmul.mubr.bf16.gmra.mrb[0].mxu0 %v1346
  %v2381 = vpop.f32.mrb[0].mxu0
  %v2382 = vadd.f32 %v2029, %v2381
  %v2383 = vpop.f32.mrb[0].mxu0
  %v2384 = vadd.f32 %v2031, %v2383
  %v2385 = vpop.f32.mrb[0].mxu0
  %v2386 = vadd.f32 %v2033, %v2385
  %v2387 = vpop.f32.mrb[0].mxu0
  %v2388 = vadd.f32 %v2035, %v2387
  %2389 = vmatprep.mubr.bf16.mxu0 %v1351
  %2390 = vmatmul.mubr.bf16.gmra.mrb[0].mxu0 %v1350
  %v2391 = vpop.f32.mrb[0].mxu0
  %v2392 = vadd.f32 %v2039, %v2391
  %v2393 = vpop.f32.mrb[0].mxu0
  %v2394 = vadd.f32 %v2041, %v2393
  %v2395 = vpop.f32.mrb[0].mxu0
  %v2396 = vadd.f32 %v2043, %v2395
  %v2397 = vpop.f32.mrb[0].mxu0
  %v2398 = vadd.f32 %v2045, %v2397
  %2399 = vmatprep.mubr.bf16.mxu0 %v1355
  %2400 = vmatmul.mubr.bf16.gmra.mrb[0].mxu0 %v1354
  %v2401 = vpop.f32.mrb[0].mxu0
  %v2402 = vadd.f32 %v2049, %v2401
  %v2403 = vpop.f32.mrb[0].mxu0
  %v2404 = vadd.f32 %v2051, %v2403
  %v2405 = vpop.f32.mrb[0].mxu0
  %v2406 = vadd.f32 %v2053, %v2405
  %v2407 = vpop.f32.mrb[0].mxu0
  %v2408 = vadd.f32 %v2055, %v2407
  %2409 = vmatprep.mubr.bf16.mxu0 %v1359
  %2410 = vmatmul.mubr.bf16.gmra.mrb[0].mxu0 %v1358
  %v2411 = vpop.f32.mrb[0].mxu0
  %v2412 = vadd.f32 %v2059, %v2411
  %v2413 = vpop.f32.mrb[0].mxu0
  %v2414 = vadd.f32 %v2061, %v2413
  %v2415 = vpop.f32.mrb[0].mxu0
  %v2416 = vadd.f32 %v2063, %v2415
  %v2417 = vpop.f32.mrb[0].mxu0
  %v2418 = vadd.f32 %v2065, %v2417
  %2419 = vmatprep.mubr.bf16.mxu0 %v1363
  %2420 = vmatmul.mubr.bf16.gmra.mrb[0].mxu0 %v1362
  %v2421 = vpop.f32.mrb[0].mxu0
  %v2422 = vadd.f32 %v2069, %v2421
  %v2423 = vpop.f32.mrb[0].mxu0
  %v2424 = vadd.f32 %v2071, %v2423
  %v2425 = vpop.f32.mrb[0].mxu0
  %v2426 = vadd.f32 %v2073, %v2425
  %v2427 = vpop.f32.mrb[0].mxu0
  %v2428 = vadd.f32 %v2075, %v2427
  %2429 = vmatprep.mubr.bf16.mxu0 %v1367
  %2430 = vmatmul.mubr.bf16.gmra.mrb[0].mxu0 %v1366
  %v2431 = vpop.f32.mrb[0].mxu0
  %v2432 = vadd.f32 %v2079, %v2431
  %v2433 = vpop.f32.mrb[0].mxu0
  %v2434 = vadd.f32 %v2081, %v2433
  %v2435 = vpop.f32.mrb[0].mxu0
  %v2436 = vadd.f32 %v2083, %v2435
  %v2437 = vpop.f32.mrb[0].mxu0
  %v2438 = vadd.f32 %v2085, %v2437
  %2439 = vmatprep.mubr.bf16.mxu0 %v1371
  %2440 = vmatmul.mubr.bf16.gmra.mrb[0].mxu0 %v1370
  %v2441 = vpop.f32.mrb[0].mxu0
  %v2442 = vadd.f32 %v2089, %v2441
  %v2443 = vpop.f32.mrb[0].mxu0
  %v2444 = vadd.f32 %v2091, %v2443
  %v2445 = vpop.f32.mrb[0].mxu0
  %v2446 = vadd.f32 %v2093, %v2445
  %v2447 = vpop.f32.mrb[0].mxu0
  %v2448 = vadd.f32 %v2095, %v2447
  %2449 = vmatprep.mubr.bf16.mxu0 %v1375
  %2450 = vmatmul.mubr.bf16.gmra.mrb[0].mxu0 %v1374
  %v2451 = vpop.f32.mrb[0].mxu0
  %v2452 = vadd.f32 %v2099, %v2451
  %v2453 = vpop.f32.mrb[0].mxu0
  %v2454 = vadd.f32 %v2101, %v2453
  %v2455 = vpop.f32.mrb[0].mxu0
  %v2456 = vadd.f32 %v2103, %v2455
  %v2457 = vpop.f32.mrb[0].mxu0
  %v2458 = vadd.f32 %v2105, %v2457
  %2459 = vmatprep.mubr.bf16.mxu0 %v1379
  %2460 = vmatmul.mubr.bf16.gmra.mrb[0].mxu0 %v1378
  %v2461 = vpop.f32.mrb[0].mxu0
  %v2462 = vadd.f32 %v2109, %v2461
  %v2463 = vpop.f32.mrb[0].mxu0
  %v2464 = vadd.f32 %v2111, %v2463
  %v2465 = vpop.f32.mrb[0].mxu0
  %v2466 = vadd.f32 %v2113, %v2465
  %v2467 = vpop.f32.mrb[0].mxu0
  %v2468 = vadd.f32 %v2115, %v2467
  %2469 = vmatprep.mubr.bf16.mxu0 %v1383
  %2470 = vmatmul.mubr.bf16.gmra.mrb[0].mxu0 %v1382
  %v2471 = vpop.f32.mrb[0].mxu0
  %v2472 = vadd.f32 %v2119, %v2471
  %v2473 = vpop.f32.mrb[0].mxu0
  %v2474 = vadd.f32 %v2121, %v2473
  %v2475 = vpop.f32.mrb[0].mxu0
  %v2476 = vadd.f32 %v2123, %v2475
  %v2477 = vpop.f32.mrb[0].mxu0
  %v2478 = vadd.f32 %v2125, %v2477
  %2479 = vmatprep.mubr.bf16.mxu0 %v1387
  %2480 = vmatmul.mubr.bf16.gmra.mrb[0].mxu0 %v1386
  %v2481 = vpop.f32.mrb[0].mxu0
  %v2482 = vadd.f32 %v2129, %v2481
  %v2483 = vpop.f32.mrb[0].mxu0
  %v2484 = vadd.f32 %v2131, %v2483
  %v2485 = vpop.f32.mrb[0].mxu0
  %v2486 = vadd.f32 %v2133, %v2485
  %v2487 = vpop.f32.mrb[0].mxu0
  %v2488 = vadd.f32 %v2135, %v2487
  %2489 = vdwg.mxu0
  %v2490 = vmax.f32 %v2172, 0.0
  %v2491 = vmax.f32 %v2174, 0.0
  %v2492 = vmax.f32 %v2176, 0.0
  %v2493 = vmax.f32 %v2178, 0.0
  %v2494 = vmax.f32 %v2182, 0.0
  %v2495 = vmax.f32 %v2184, 0.0
  %v2496 = vmax.f32 %v2186, 0.0
  %v2497 = vmax.f32 %v2188, 0.0
  %v2498 = vmax.f32 %v2192, 0.0
  %v2499 = vmax.f32 %v2194, 0.0
  %v2500 = vmax.f32 %v2196, 0.0
  %v2501 = vmax.f32 %v2198, 0.0
  %v2502 = vmax.f32 %v2202, 0.0
  %v2503 = vmax.f32 %v2204, 0.0
  %v2504 = vmax.f32 %v2206, 0.0
  %v2505 = vmax.f32 %v2208, 0.0
  %v2506 = vmax.f32 %v2212, 0.0
  %v2507 = vmax.f32 %v2214, 0.0
  %v2508 = vmax.f32 %v2216, 0.0
  %v2509 = vmax.f32 %v2218, 0.0
  %v2510 = vmax.f32 %v2222, 0.0
  %v2511 = vmax.f32 %v2224, 0.0
  %v2512 = vmax.f32 %v2226, 0.0
  %v2513 = vmax.f32 %v2228, 0.0
  %v2514 = vmax.f32 %v2232, 0.0
  %v2515 = vmax.f32 %v2234, 0.0
  %v2516 = vmax.f32 %v2236, 0.0
  %v2517 = vmax.f32 %v2238, 0.0
  %v2518 = vmax.f32 %v2242, 0.0
  %v2519 = vmax.f32 %v2244, 0.0
  %v2520 = vmax.f32 %v2246, 0.0
  %v2521 = vmax.f32 %v2248, 0.0
  %v2522 = vmax.f32 %v2252, 0.0
  %v2523 = vmax.f32 %v2254, 0.0
  %v2524 = vmax.f32 %v2256, 0.0
  %v2525 = vmax.f32 %v2258, 0.0
  %v2526 = vmax.f32 %v2262, 0.0
  %v2527 = vmax.f32 %v2264, 0.0
  %v2528 = vmax.f32 %v2266, 0.0
  %v2529 = vmax.f32 %v2268, 0.0
  %v2530 = vmax.f32 %v2272, 0.0
  %v2531 = vmax.f32 %v2274, 0.0
  %v2532 = vmax.f32 %v2276, 0.0
  %v2533 = vmax.f32 %v2278, 0.0
  %v2534 = vmax.f32 %v2282, 0.0
  %v2535 = vmax.f32 %v2284, 0.0
  %v2536 = vmax.f32 %v2286, 0.0
  %v2537 = vmax.f32 %v2288, 0.0
  %v2538 = vmax.f32 %v2292, 0.0
  %v2539 = vmax.f32 %v2294, 0.0
  %v2540 = vmax.f32 %v2296, 0.0
  %v2541 = vmax.f32 %v2298, 0.0
  %v2542 = vmax.f32 %v2302, 0.0
  %v2543 = vmax.f32 %v2304, 0.0
  %v2544 = vmax.f32 %v2306, 0.0
  %v2545 = vmax.f32 %v2308, 0.0
  %v2546 = vmax.f32 %v2312, 0.0
  %v2547 = vmax.f32 %v2314, 0.0
  %v2548 = vmax.f32 %v2316, 0.0
  %v2549 = vmax.f32 %v2318, 0.0
  %v2550 = vmax.f32 %v2322, 0.0
  %v2551 = vmax.f32 %v2324, 0.0
  %v2552 = vmax.f32 %v2326, 0.0
  %v2553 = vmax.f32 %v2328, 0.0
  %v2554 = vmax.f32 %v2332, 0.0
  %v2555 = vmax.f32 %v2334, 0.0
  %v2556 = vmax.f32 %v2336, 0.0
  %v2557 = vmax.f32 %v2338, 0.0
  %v2558 = vmax.f32 %v2342, 0.0
  %v2559 = vmax.f32 %v2344, 0.0
  %v2560 = vmax.f32 %v2346, 0.0
  %v2561 = vmax.f32 %v2348, 0.0
  %v2562 = vmax.f32 %v2352, 0.0
  %v2563 = vmax.f32 %v2354, 0.0
  %v2564 = vmax.f32 %v2356, 0.0
  %v2565 = vmax.f32 %v2358, 0.0
  %v2566 = vmax.f32 %v2362, 0.0
  %v2567 = vmax.f32 %v2364, 0.0
  %v2568 = vmax.f32 %v2366, 0.0
  %v2569 = vmax.f32 %v2368, 0.0
  %v2570 = vmax.f32 %v2372, 0.0
  %v2571 = vmax.f32 %v2374, 0.0
  %v2572 = vmax.f32 %v2376, 0.0
  %v2573 = vmax.f32 %v2378, 0.0
  %v2574 = vmax.f32 %v2382, 0.0
  %v2575 = vmax.f32 %v2384, 0.0
  %v2576 = vmax.f32 %v2386, 0.0
  %v2577 = vmax.f32 %v2388, 0.0
  %v2578 = vmax.f32 %v2392, 0.0
  %v2579 = vmax.f32 %v2394, 0.0
  %v2580 = vmax.f32 %v2396, 0.0
  %v2581 = vmax.f32 %v2398, 0.0
  %v2582 = vmax.f32 %v2402, 0.0
  %v2583 = vmax.f32 %v2404, 0.0
  %v2584 = vmax.f32 %v2406, 0.0
  %v2585 = vmax.f32 %v2408, 0.0
  %v2586 = vmax.f32 %v2412, 0.0
  %v2587 = vmax.f32 %v2414, 0.0
  %v2588 = vmax.f32 %v2416, 0.0
  %v2589 = vmax.f32 %v2418, 0.0
  %v2590 = vmax.f32 %v2422, 0.0
  %v2591 = vmax.f32 %v2424, 0.0
  %v2592 = vmax.f32 %v2426, 0.0
  %v2593 = vmax.f32 %v2428, 0.0
  %v2594 = vmax.f32 %v2432, 0.0
  %v2595 = vmax.f32 %v2434, 0.0
  %v2596 = vmax.f32 %v2436, 0.0
  %v2597 = vmax.f32 %v2438, 0.0
  %v2598 = vmax.f32 %v2442, 0.0
  %v2599 = vmax.f32 %v2444, 0.0
  %v2600 = vmax.f32 %v2446, 0.0
  %v2601 = vmax.f32 %v2448, 0.0
  %v2602 = vmax.f32 %v2452, 0.0
  %v2603 = vmax.f32 %v2454, 0.0
  %v2604 = vmax.f32 %v2456, 0.0
  %v2605 = vmax.f32 %v2458, 0.0
  %v2606 = vmax.f32 %v2462, 0.0
  %v2607 = vmax.f32 %v2464, 0.0
  %v2608 = vmax.f32 %v2466, 0.0
  %v2609 = vmax.f32 %v2468, 0.0
  %v2610 = vmax.f32 %v2472, 0.0
  %v2611 = vmax.f32 %v2474, 0.0
  %v2612 = vmax.f32 %v2476, 0.0
  %v2613 = vmax.f32 %v2478, 0.0
  %v2614 = vmax.f32 %v2482, 0.0
  %v2615 = vmax.f32 %v2484, 0.0
  %v2616 = vmax.f32 %v2486, 0.0
  %v2617 = vmax.f32 %v2488, 0.0
  %v2618 = vpack.c.bf16 %v2492, %v2490
  %v2619 = vpack.c.bf16 %v2493, %v2491
  %v2620 = vpack.c.bf16 %v2496, %v2494
  %v2621 = vpack.c.bf16 %v2497, %v2495
  %v2622 = vpack.c.bf16 %v2500, %v2498
  %v2623 = vpack.c.bf16 %v2501, %v2499
  %v2624 = vpack.c.bf16 %v2504, %v2502
  %v2625 = vpack.c.bf16 %v2505, %v2503
  %v2626 = vpack.c.bf16 %v2508, %v2506
  %v2627 = vpack.c.bf16 %v2509, %v2507
  %v2628 = vpack.c.bf16 %v2512, %v2510
  %v2629 = vpack.c.bf16 %v2513, %v2511
  %v2630 = vpack.c.bf16 %v2516, %v2514
  %v2631 = vpack.c.bf16 %v2517, %v2515
  %v2632 = vpack.c.bf16 %v2520, %v2518
  %v2633 = vpack.c.bf16 %v2521, %v2519
  %v2634 = vpack.c.bf16 %v2524, %v2522
  %v2635 = vpack.c.bf16 %v2525, %v2523
  %v2636 = vpack.c.bf16 %v2528, %v2526
  %v2637 = vpack.c.bf16 %v2529, %v2527
  %v2638 = vpack.c.bf16 %v2532, %v2530
  %v2639 = vpack.c.bf16 %v2533, %v2531
  %v2640 = vpack.c.bf16 %v2536, %v2534
  %v2641 = vpack.c.bf16 %v2537, %v2535
  %v2642 = vpack.c.bf16 %v2540, %v2538
  %v2643 = vpack.c.bf16 %v2541, %v2539
  %v2644 = vpack.c.bf16 %v2544, %v2542
  %v2645 = vpack.c.bf16 %v2545, %v2543
  %v2646 = vpack.c.bf16 %v2548, %v2546
  %v2647 = vpack.c.bf16 %v2549, %v2547
  %v2648 = vpack.c.bf16 %v2552, %v2550
  %v2649 = vpack.c.bf16 %v2553, %v2551
  %v2650 = vpack.c.bf16 %v2556, %v2554
  %v2651 = vpack.c.bf16 %v2557, %v2555
  %v2652 = vpack.c.bf16 %v2560, %v2558
  %v2653 = vpack.c.bf16 %v2561, %v2559
  %v2654 = vpack.c.bf16 %v2564, %v2562
  %v2655 = vpack.c.bf16 %v2565, %v2563
  %v2656 = vpack.c.bf16 %v2568, %v2566
  %v2657 = vpack.c.bf16 %v2569, %v2567
  %v2658 = vpack.c.bf16 %v2572, %v2570
  %v2659 = vpack.c.bf16 %v2573, %v2571
  %v2660 = vpack.c.bf16 %v2576, %v2574
  %v2661 = vpack.c.bf16 %v2577, %v2575
  %v2662 = vpack.c.bf16 %v2580, %v2578
  %v2663 = vpack.c.bf16 %v2581, %v2579
  %v2664 = vpack.c.bf16 %v2584, %v2582
  %v2665 = vpack.c.bf16 %v2585, %v2583
  %v2666 = vpack.c.bf16 %v2588, %v2586
  %v2667 = vpack.c.bf16 %v2589, %v2587
  %v2668 = vpack.c.bf16 %v2592, %v2590
  %v2669 = vpack.c.bf16 %v2593, %v2591
  %v2670 = vpack.c.bf16 %v2596, %v2594
  %v2671 = vpack.c.bf16 %v2597, %v2595
  %v2672 = vpack.c.bf16 %v2600, %v2598
  %v2673 = vpack.c.bf16 %v2601, %v2599
  %v2674 = vpack.c.bf16 %v2604, %v2602
  %v2675 = vpack.c.bf16 %v2605, %v2603
  %v2676 = vpack.c.bf16 %v2608, %v2606
  %v2677 = vpack.c.bf16 %v2609, %v2607
  %v2678 = vpack.c.bf16 %v2612, %v2610
  %v2679 = vpack.c.bf16 %v2613, %v2611
  %v2680 = vpack.c.bf16 %v2616, %v2614
  %v2681 = vpack.c.bf16 %v2617, %v2615
  %v2682 = vld [vmem:[%s5] sm:$0xf]
  %v2683 = vld [vmem:[%s5 + $0x4] sm:$0xf]
  %v2684 = vld [vmem:[%s5 + $0x8] sm:$0xf]
  %v2685 = vld [vmem:[%s5 + $0xc] sm:$0xf]
  %v2686 = vld [vmem:[%s5 + $0x10] sm:$0xf]
  %v2687 = vld [vmem:[%s5 + $0x14] sm:$0xf]
  %v2688 = vld [vmem:[%s5 + $0x18] sm:$0xf]
  %v2689 = vld [vmem:[%s5 + $0x1c] sm:$0xf]
  %v2690 = vld [vmem:[%s5 + $0x20] sm:$0xf]
  %v2691 = vld [vmem:[%s5 + $0x24] sm:$0xf]
  %v2692 = vld [vmem:[%s5 + $0x28] sm:$0xf]
  %v2693 = vld [vmem:[%s5 + $0x2c] sm:$0xf]
  %v2694 = vld [vmem:[%s5 + $0x30] sm:$0xf]
  %v2695 = vld [vmem:[%s5 + $0x34] sm:$0xf]
  %v2696 = vld [vmem:[%s5 + $0x38] sm:$0xf]
  %v2697 = vld [vmem:[%s5 + $0x3c] sm:$0xf]
  %v2698 = vld [vmem:[%s5 + $0x40] sm:$0xf]
  %v2699 = vld [vmem:[%s5 + $0x44] sm:$0xf]
  %v2700 = vld [vmem:[%s5 + $0x48] sm:$0xf]
  %v2701 = vld [vmem:[%s5 + $0x4c] sm:$0xf]
  %v2702 = vld [vmem:[%s5 + $0x50] sm:$0xf]
  %v2703 = vld [vmem:[%s5 + $0x54] sm:$0xf]
  %v2704 = vld [vmem:[%s5 + $0x58] sm:$0xf]
  %v2705 = vld [vmem:[%s5 + $0x5c] sm:$0xf]
  %v2706 = vld [vmem:[%s5 + $0x60] sm:$0xf]
  %v2707 = vld [vmem:[%s5 + $0x64] sm:$0xf]
  %v2708 = vld [vmem:[%s5 + $0x68] sm:$0xf]
  %v2709 = vld [vmem:[%s5 + $0x6c] sm:$0xf]
  %v2710 = vld [vmem:[%s5 + $0x70] sm:$0xf]
  %v2711 = vld [vmem:[%s5 + $0x74] sm:$0xf]
  %v2712 = vld [vmem:[%s5 + $0x78] sm:$0xf]
  %v2713 = vld [vmem:[%s5 + $0x7c] sm:$0xf]
  %v2714 = vld [vmem:[%s6] sm:$0x1]
  %v2716 = vlaneseq
  %v2717 = vshrl.u32 %v2716, 7
  %v2718 = vsub.s32 0, %v2717
  %v2719 = vrot.slane %v2714, %v2718
  %v2753 = vunpack.c.l.b16 %v2682
  %v2754 = vunpack.c.l.b16 %v2683
  %v2755 = vunpack.c.l.b16 %v2684
  %v2756 = vunpack.c.l.b16 %v2685
  %v2757 = vunpack.c.l.b16 %v2686
  %v2758 = vunpack.c.l.b16 %v2687
  %v2759 = vunpack.c.l.b16 %v2688
  %v2760 = vunpack.c.l.b16 %v2689
  %v2761 = vunpack.c.l.b16 %v2690
  %v2762 = vunpack.c.l.b16 %v2691
  %v2763 = vunpack.c.l.b16 %v2692
  %v2764 = vunpack.c.l.b16 %v2693
  %v2765 = vunpack.c.l.b16 %v2694
  %v2766 = vunpack.c.l.b16 %v2695
  %v2767 = vunpack.c.l.b16 %v2696
  %v2768 = vunpack.c.l.b16 %v2697
  %v2769 = vunpack.c.l.b16 %v2698
  %v2770 = vunpack.c.l.b16 %v2699
  %v2771 = vunpack.c.l.b16 %v2700
  %v2772 = vunpack.c.l.b16 %v2701
  %v2773 = vunpack.c.l.b16 %v2702
  %v2774 = vunpack.c.l.b16 %v2703
  %v2775 = vunpack.c.l.b16 %v2704
  %v2776 = vunpack.c.l.b16 %v2705
  %v2777 = vunpack.c.l.b16 %v2706
  %v2778 = vunpack.c.l.b16 %v2707
  %v2779 = vunpack.c.l.b16 %v2708
  %v2780 = vunpack.c.l.b16 %v2709
  %v2781 = vunpack.c.l.b16 %v2710
  %v2782 = vunpack.c.l.b16 %v2711
  %v2783 = vunpack.c.l.b16 %v2712
  %v2784 = vunpack.c.l.b16 %v2713
  %v2785 = vpack.c.b16 %v2754, %v2753
  %v2786 = vpack.c.b16 %v2756, %v2755
  %v2787 = vpack.c.b16 %v2758, %v2757
  %v2788 = vpack.c.b16 %v2760, %v2759
  %v2789 = vpack.c.b16 %v2762, %v2761
  %v2790 = vpack.c.b16 %v2764, %v2763
  %v2791 = vpack.c.b16 %v2766, %v2765
  %v2792 = vpack.c.b16 %v2768, %v2767
  %v2793 = vpack.c.b16 %v2770, %v2769
  %v2794 = vpack.c.b16 %v2772, %v2771
  %v2795 = vpack.c.b16 %v2774, %v2773
  %v2796 = vpack.c.b16 %v2776, %v2775
  %v2797 = vpack.c.b16 %v2778, %v2777
  %v2798 = vpack.c.b16 %v2780, %v2779
  %v2799 = vpack.c.b16 %v2782, %v2781
  %v2800 = vpack.c.b16 %v2784, %v2783
  %2817 = vmatprep.subr.bf16.mxu0 0
  %2818 = vmatpush1.bf16.msra.mxu0 %v2785
  %2819 = vmatprep.subr.bf16.mxu0 0
  %2820 = vmatpush1.bf16.msra.mxu0 %v2786
  %2821 = vmatprep.subr.bf16.mxu0 0
  %2822 = vmatpush1.bf16.msra.mxu0 %v2787
  %2823 = vmatprep.subr.bf16.mxu0 0
  %2824 = vmatpush1.bf16.msra.mxu0 %v2788
  %2825 = vmatprep.subr.bf16.mxu0 0
  %2826 = vmatpush1.bf16.msra.mxu0 %v2789
  %2827 = vmatprep.subr.bf16.mxu0 0
  %2828 = vmatpush1.bf16.msra.mxu0 %v2790
  %2829 = vmatprep.subr.bf16.mxu0 0
  %2830 = vmatpush1.bf16.msra.mxu0 %v2791
  %2831 = vmatprep.subr.bf16.mxu0 0
  %2832 = vmatpush1.bf16.msra.mxu0 %v2792
  %2833 = vmatprep.subr.bf16.mxu0 0
  %2834 = vmatpush1.bf16.msra.mxu0 %v2793
  %2835 = vmatprep.subr.bf16.mxu0 0
  %2836 = vmatpush1.bf16.msra.mxu0 %v2794
  %2837 = vmatprep.subr.bf16.mxu0 0
  %2838 = vmatpush1.bf16.msra.mxu0 %v2795
  %2839 = vmatprep.subr.bf16.mxu0 0
  %2840 = vmatpush1.bf16.msra.mxu0 %v2796
  %2841 = vmatprep.subr.bf16.mxu0 0
  %2842 = vmatpush1.bf16.msra.mxu0 %v2797
  %2843 = vmatprep.subr.bf16.mxu0 0
  %2844 = vmatpush1.bf16.msra.mxu0 %v2798
  %2845 = vmatprep.subr.bf16.mxu0 0
  %2846 = vmatpush1.bf16.msra.mxu0 %v2799
  %2847 = vmatprep.subr.bf16.mxu0 0
  %2848 = vmatpush1.bf16.msra.mxu0 %v2800
  %2849 = vmatprep.mubr.bf16.mxu0 %v2619
  %2850 = vmatmul.mubr.bf16.gmra.mrb[0].mxu0 %v2618
  %v2851 = vpop.f32.mrb[0].mxu0
  %v2852 = vadd.f32 %v2719, %v2851
  %v2853 = vpop.f32.mrb[0].mxu0
  %v2854 = vpop.f32.mrb[0].mxu0
  %v2855 = vadd.f32 %v2719, %v2854
  %v2856 = vpop.f32.mrb[0].mxu0
  %2857 = vmatprep.mubr.bf16.mxu0 %v2621
  %2858 = vmatmul.mubr.bf16.gmra.mrb[0].mxu0 %v2620
  %v2859 = vpop.f32.mrb[0].mxu0
  %v2860 = vadd.f32 %v2719, %v2859
  %v2861 = vpop.f32.mrb[0].mxu0
  %v2862 = vpop.f32.mrb[0].mxu0
  %v2863 = vadd.f32 %v2719, %v2862
  %v2864 = vpop.f32.mrb[0].mxu0
  %2865 = vmatprep.mubr.bf16.mxu0 %v2623
  %2866 = vmatmul.mubr.bf16.gmra.mrb[0].mxu0 %v2622
  %v2867 = vpop.f32.mrb[0].mxu0
  %v2868 = vadd.f32 %v2719, %v2867
  %v2869 = vpop.f32.mrb[0].mxu0
  %v2870 = vpop.f32.mrb[0].mxu0
  %v2871 = vadd.f32 %v2719, %v2870
  %v2872 = vpop.f32.mrb[0].mxu0
  %2873 = vmatprep.mubr.bf16.mxu0 %v2625
  %2874 = vmatmul.mubr.bf16.gmra.mrb[0].mxu0 %v2624
  %v2875 = vpop.f32.mrb[0].mxu0
  %v2876 = vadd.f32 %v2719, %v2875
  %v2877 = vpop.f32.mrb[0].mxu0
  %v2878 = vpop.f32.mrb[0].mxu0
  %v2879 = vadd.f32 %v2719, %v2878
  %v2880 = vpop.f32.mrb[0].mxu0
  %2881 = vmatprep.mubr.bf16.mxu0 %v2627
  %2882 = vmatmul.mubr.bf16.gmra.mrb[0].mxu0 %v2626
  %v2883 = vpop.f32.mrb[0].mxu0
  %v2884 = vadd.f32 %v2719, %v2883
  %v2885 = vpop.f32.mrb[0].mxu0
  %v2886 = vpop.f32.mrb[0].mxu0
  %v2887 = vadd.f32 %v2719, %v2886
  %v2888 = vpop.f32.mrb[0].mxu0
  %2889 = vmatprep.mubr.bf16.mxu0 %v2629
  %2890 = vmatmul.mubr.bf16.gmra.mrb[0].mxu0 %v2628
  %v2891 = vpop.f32.mrb[0].mxu0
  %v2892 = vadd.f32 %v2719, %v2891
  %v2893 = vpop.f32.mrb[0].mxu0
  %v2894 = vpop.f32.mrb[0].mxu0
  %v2895 = vadd.f32 %v2719, %v2894
  %v2896 = vpop.f32.mrb[0].mxu0
  %2897 = vmatprep.mubr.bf16.mxu0 %v2631
  %2898 = vmatmul.mubr.bf16.gmra.mrb[0].mxu0 %v2630
  %v2899 = vpop.f32.mrb[0].mxu0
  %v2900 = vadd.f32 %v2719, %v2899
  %v2901 = vpop.f32.mrb[0].mxu0
  %v2902 = vpop.f32.mrb[0].mxu0
  %v2903 = vadd.f32 %v2719, %v2902
  %v2904 = vpop.f32.mrb[0].mxu0
  %2905 = vmatprep.mubr.bf16.mxu0 %v2633
  %2906 = vmatmul.mubr.bf16.gmra.mrb[0].mxu0 %v2632
  %v2907 = vpop.f32.mrb[0].mxu0
  %v2908 = vadd.f32 %v2719, %v2907
  %v2909 = vpop.f32.mrb[0].mxu0
  %v2910 = vpop.f32.mrb[0].mxu0
  %v2911 = vadd.f32 %v2719, %v2910
  %v2912 = vpop.f32.mrb[0].mxu0
  %2913 = vmatprep.mubr.bf16.mxu0 %v2635
  %2914 = vmatmul.mubr.bf16.gmra.mrb[0].mxu0 %v2634
  %v2915 = vpop.f32.mrb[0].mxu0
  %v2916 = vadd.f32 %v2719, %v2915
  %v2917 = vpop.f32.mrb[0].mxu0
  %v2918 = vpop.f32.mrb[0].mxu0
  %v2919 = vadd.f32 %v2719, %v2918
  %v2920 = vpop.f32.mrb[0].mxu0
  %2921 = vmatprep.mubr.bf16.mxu0 %v2637
  %2922 = vmatmul.mubr.bf16.gmra.mrb[0].mxu0 %v2636
  %v2923 = vpop.f32.mrb[0].mxu0
  %v2924 = vadd.f32 %v2719, %v2923
  %v2925 = vpop.f32.mrb[0].mxu0
  %v2926 = vpop.f32.mrb[0].mxu0
  %v2927 = vadd.f32 %v2719, %v2926
  %v2928 = vpop.f32.mrb[0].mxu0
  %2929 = vmatprep.mubr.bf16.mxu0 %v2639
  %2930 = vmatmul.mubr.bf16.gmra.mrb[0].mxu0 %v2638
  %v2931 = vpop.f32.mrb[0].mxu0
  %v2932 = vadd.f32 %v2719, %v2931
  %v2933 = vpop.f32.mrb[0].mxu0
  %v2934 = vpop.f32.mrb[0].mxu0
  %v2935 = vadd.f32 %v2719, %v2934
  %v2936 = vpop.f32.mrb[0].mxu0
  %2937 = vmatprep.mubr.bf16.mxu0 %v2641
  %2938 = vmatmul.mubr.bf16.gmra.mrb[0].mxu0 %v2640
  %v2939 = vpop.f32.mrb[0].mxu0
  %v2940 = vadd.f32 %v2719, %v2939
  %v2941 = vpop.f32.mrb[0].mxu0
  %v2942 = vpop.f32.mrb[0].mxu0
  %v2943 = vadd.f32 %v2719, %v2942
  %v2944 = vpop.f32.mrb[0].mxu0
  %2945 = vmatprep.mubr.bf16.mxu0 %v2643
  %2946 = vmatmul.mubr.bf16.gmra.mrb[0].mxu0 %v2642
  %v2947 = vpop.f32.mrb[0].mxu0
  %v2948 = vadd.f32 %v2719, %v2947
  %v2949 = vpop.f32.mrb[0].mxu0
  %v2950 = vpop.f32.mrb[0].mxu0
  %v2951 = vadd.f32 %v2719, %v2950
  %v2952 = vpop.f32.mrb[0].mxu0
  %2953 = vmatprep.mubr.bf16.mxu0 %v2645
  %2954 = vmatmul.mubr.bf16.gmra.mrb[0].mxu0 %v2644
  %v2955 = vpop.f32.mrb[0].mxu0
  %v2956 = vadd.f32 %v2719, %v2955
  %v2957 = vpop.f32.mrb[0].mxu0
  %v2958 = vpop.f32.mrb[0].mxu0
  %v2959 = vadd.f32 %v2719, %v2958
  %v2960 = vpop.f32.mrb[0].mxu0
  %2961 = vmatprep.mubr.bf16.mxu0 %v2647
  %2962 = vmatmul.mubr.bf16.gmra.mrb[0].mxu0 %v2646
  %v2963 = vpop.f32.mrb[0].mxu0
  %v2964 = vadd.f32 %v2719, %v2963
  %v2965 = vpop.f32.mrb[0].mxu0
  %v2966 = vpop.f32.mrb[0].mxu0
  %v2967 = vadd.f32 %v2719, %v2966
  %v2968 = vpop.f32.mrb[0].mxu0
  %2969 = vmatprep.mubr.bf16.mxu0 %v2649
  %2970 = vmatmul.mubr.bf16.gmra.mrb[0].mxu0 %v2648
  %v2971 = vpop.f32.mrb[0].mxu0
  %v2972 = vadd.f32 %v2719, %v2971
  %v2973 = vpop.f32.mrb[0].mxu0
  %v2974 = vpop.f32.mrb[0].mxu0
  %v2975 = vadd.f32 %v2719, %v2974
  %v2976 = vpop.f32.mrb[0].mxu0
  %2977 = vmatprep.mubr.bf16.mxu0 %v2651
  %2978 = vmatmul.mubr.bf16.gmra.mrb[0].mxu0 %v2650
  %v2979 = vpop.f32.mrb[0].mxu0
  %v2980 = vadd.f32 %v2719, %v2979
  %v2981 = vpop.f32.mrb[0].mxu0
  %v2982 = vpop.f32.mrb[0].mxu0
  %v2983 = vadd.f32 %v2719, %v2982
  %v2984 = vpop.f32.mrb[0].mxu0
  %2985 = vmatprep.mubr.bf16.mxu0 %v2653
  %2986 = vmatmul.mubr.bf16.gmra.mrb[0].mxu0 %v2652
  %v2987 = vpop.f32.mrb[0].mxu0
  %v2988 = vadd.f32 %v2719, %v2987
  %v2989 = vpop.f32.mrb[0].mxu0
  %v2990 = vpop.f32.mrb[0].mxu0
  %v2991 = vadd.f32 %v2719, %v2990
  %v2992 = vpop.f32.mrb[0].mxu0
  %2993 = vmatprep.mubr.bf16.mxu0 %v2655
  %2994 = vmatmul.mubr.bf16.gmra.mrb[0].mxu0 %v2654
  %v2995 = vpop.f32.mrb[0].mxu0
  %v2996 = vadd.f32 %v2719, %v2995
  %v2997 = vpop.f32.mrb[0].mxu0
  %v2998 = vpop.f32.mrb[0].mxu0
  %v2999 = vadd.f32 %v2719, %v2998
  %v3000 = vpop.f32.mrb[0].mxu0
  %3001 = vmatprep.mubr.bf16.mxu0 %v2657
  %3002 = vmatmul.mubr.bf16.gmra.mrb[0].mxu0 %v2656
  %v3003 = vpop.f32.mrb[0].mxu0
  %v3004 = vadd.f32 %v2719, %v3003
  %v3005 = vpop.f32.mrb[0].mxu0
  %v3006 = vpop.f32.mrb[0].mxu0
  %v3007 = vadd.f32 %v2719, %v3006
  %v3008 = vpop.f32.mrb[0].mxu0
  %3009 = vmatprep.mubr.bf16.mxu0 %v2659
  %3010 = vmatmul.mubr.bf16.gmra.mrb[0].mxu0 %v2658
  %v3011 = vpop.f32.mrb[0].mxu0
  %v3012 = vadd.f32 %v2719, %v3011
  %v3013 = vpop.f32.mrb[0].mxu0
  %v3014 = vpop.f32.mrb[0].mxu0
  %v3015 = vadd.f32 %v2719, %v3014
  %v3016 = vpop.f32.mrb[0].mxu0
  %3017 = vmatprep.mubr.bf16.mxu0 %v2661
  %3018 = vmatmul.mubr.bf16.gmra.mrb[0].mxu0 %v2660
  %v3019 = vpop.f32.mrb[0].mxu0
  %v3020 = vadd.f32 %v2719, %v3019
  %v3021 = vpop.f32.mrb[0].mxu0
  %v3022 = vpop.f32.mrb[0].mxu0
  %v3023 = vadd.f32 %v2719, %v3022
  %v3024 = vpop.f32.mrb[0].mxu0
  %3025 = vmatprep.mubr.bf16.mxu0 %v2663
  %3026 = vmatmul.mubr.bf16.gmra.mrb[0].mxu0 %v2662
  %v3027 = vpop.f32.mrb[0].mxu0
  %v3028 = vadd.f32 %v2719, %v3027
  %v3029 = vpop.f32.mrb[0].mxu0
  %v3030 = vpop.f32.mrb[0].mxu0
  %v3031 = vadd.f32 %v2719, %v3030
  %v3032 = vpop.f32.mrb[0].mxu0
  %3033 = vmatprep.mubr.bf16.mxu0 %v2665
  %3034 = vmatmul.mubr.bf16.gmra.mrb[0].mxu0 %v2664
  %v3035 = vpop.f32.mrb[0].mxu0
  %v3036 = vadd.f32 %v2719, %v3035
  %v3037 = vpop.f32.mrb[0].mxu0
  %v3038 = vpop.f32.mrb[0].mxu0
  %v3039 = vadd.f32 %v2719, %v3038
  %v3040 = vpop.f32.mrb[0].mxu0
  %3041 = vmatprep.mubr.bf16.mxu0 %v2667
  %3042 = vmatmul.mubr.bf16.gmra.mrb[0].mxu0 %v2666
  %v3043 = vpop.f32.mrb[0].mxu0
  %v3044 = vadd.f32 %v2719, %v3043
  %v3045 = vpop.f32.mrb[0].mxu0
  %v3046 = vpop.f32.mrb[0].mxu0
  %v3047 = vadd.f32 %v2719, %v3046
  %v3048 = vpop.f32.mrb[0].mxu0
  %3049 = vmatprep.mubr.bf16.mxu0 %v2669
  %3050 = vmatmul.mubr.bf16.gmra.mrb[0].mxu0 %v2668
  %v3051 = vpop.f32.mrb[0].mxu0
  %v3052 = vadd.f32 %v2719, %v3051
  %v3053 = vpop.f32.mrb[0].mxu0
  %v3054 = vpop.f32.mrb[0].mxu0
  %v3055 = vadd.f32 %v2719, %v3054
  %v3056 = vpop.f32.mrb[0].mxu0
  %3057 = vmatprep.mubr.bf16.mxu0 %v2671
  %3058 = vmatmul.mubr.bf16.gmra.mrb[0].mxu0 %v2670
  %v3059 = vpop.f32.mrb[0].mxu0
  %v3060 = vadd.f32 %v2719, %v3059
  %v3061 = vpop.f32.mrb[0].mxu0
  %v3062 = vpop.f32.mrb[0].mxu0
  %v3063 = vadd.f32 %v2719, %v3062
  %v3064 = vpop.f32.mrb[0].mxu0
  %3065 = vmatprep.mubr.bf16.mxu0 %v2673
  %3066 = vmatmul.mubr.bf16.gmra.mrb[0].mxu0 %v2672
  %v3067 = vpop.f32.mrb[0].mxu0
  %v3068 = vadd.f32 %v2719, %v3067
  %v3069 = vpop.f32.mrb[0].mxu0
  %v3070 = vpop.f32.mrb[0].mxu0
  %v3071 = vadd.f32 %v2719, %v3070
  %v3072 = vpop.f32.mrb[0].mxu0
  %3073 = vmatprep.mubr.bf16.mxu0 %v2675
  %3074 = vmatmul.mubr.bf16.gmra.mrb[0].mxu0 %v2674
  %v3075 = vpop.f32.mrb[0].mxu0
  %v3076 = vadd.f32 %v2719, %v3075
  %v3077 = vpop.f32.mrb[0].mxu0
  %v3078 = vpop.f32.mrb[0].mxu0
  %v3079 = vadd.f32 %v2719, %v3078
  %v3080 = vpop.f32.mrb[0].mxu0
  %3081 = vmatprep.mubr.bf16.mxu0 %v2677
  %3082 = vmatmul.mubr.bf16.gmra.mrb[0].mxu0 %v2676
  %v3083 = vpop.f32.mrb[0].mxu0
  %v3084 = vadd.f32 %v2719, %v3083
  %v3085 = vpop.f32.mrb[0].mxu0
  %v3086 = vpop.f32.mrb[0].mxu0
  %v3087 = vadd.f32 %v2719, %v3086
  %v3088 = vpop.f32.mrb[0].mxu0
  %3089 = vmatprep.mubr.bf16.mxu0 %v2679
  %3090 = vmatmul.mubr.bf16.gmra.mrb[0].mxu0 %v2678
  %v3091 = vpop.f32.mrb[0].mxu0
  %v3092 = vadd.f32 %v2719, %v3091
  %v3093 = vpop.f32.mrb[0].mxu0
  %v3094 = vpop.f32.mrb[0].mxu0
  %v3095 = vadd.f32 %v2719, %v3094
  %v3096 = vpop.f32.mrb[0].mxu0
  %3097 = vmatprep.mubr.bf16.mxu0 %v2681
  %3098 = vmatmul.mubr.bf16.gmra.mrb[0].mxu0 %v2680
  %v3099 = vpop.f32.mrb[0].mxu0
  %v3100 = vadd.f32 %v2719, %v3099
  %v3101 = vpop.f32.mrb[0].mxu0
  %v3102 = vpop.f32.mrb[0].mxu0
  %v3103 = vadd.f32 %v2719, %v3102
  %v3104 = vpop.f32.mrb[0].mxu0
  %3105 = vdwg.mxu0
  %v3106 = vmax.f32 %v2852, 0.0
  %v3107 = vmax.f32 %v2855, 0.0
  %v3108 = vmax.f32 %v2860, 0.0
  %v3109 = vmax.f32 %v2863, 0.0
  %v3110 = vmax.f32 %v2868, 0.0
  %v3111 = vmax.f32 %v2871, 0.0
  %v3112 = vmax.f32 %v2876, 0.0
  %v3113 = vmax.f32 %v2879, 0.0
  %v3114 = vmax.f32 %v2884, 0.0
  %v3115 = vmax.f32 %v2887, 0.0
  %v3116 = vmax.f32 %v2892, 0.0
  %v3117 = vmax.f32 %v2895, 0.0
  %v3118 = vmax.f32 %v2900, 0.0
  %v3119 = vmax.f32 %v2903, 0.0
  %v3120 = vmax.f32 %v2908, 0.0
  %v3121 = vmax.f32 %v2911, 0.0
  %v3122 = vmax.f32 %v2916, 0.0
  %v3123 = vmax.f32 %v2919, 0.0
  %v3124 = vmax.f32 %v2924, 0.0
  %v3125 = vmax.f32 %v2927, 0.0
  %v3126 = vmax.f32 %v2932, 0.0
  %v3127 = vmax.f32 %v2935, 0.0
  %v3128 = vmax.f32 %v2940, 0.0
  %v3129 = vmax.f32 %v2943, 0.0
  %v3130 = vmax.f32 %v2948, 0.0
  %v3131 = vmax.f32 %v2951, 0.0
  %v3132 = vmax.f32 %v2956, 0.0
  %v3133 = vmax.f32 %v2959, 0.0
  %v3134 = vmax.f32 %v2964, 0.0
  %v3135 = vmax.f32 %v2967, 0.0
  %v3136 = vmax.f32 %v2972, 0.0
  %v3137 = vmax.f32 %v2975, 0.0
  %v3138 = vmax.f32 %v2980, 0.0
  %v3139 = vmax.f32 %v2983, 0.0
  %v3140 = vmax.f32 %v2988, 0.0
  %v3141 = vmax.f32 %v2991, 0.0
  %v3142 = vmax.f32 %v2996, 0.0
  %v3143 = vmax.f32 %v2999, 0.0
  %v3144 = vmax.f32 %v3004, 0.0
  %v3145 = vmax.f32 %v3007, 0.0
  %v3146 = vmax.f32 %v3012, 0.0
  %v3147 = vmax.f32 %v3015, 0.0
  %v3148 = vmax.f32 %v3020, 0.0
  %v3149 = vmax.f32 %v3023, 0.0
  %v3150 = vmax.f32 %v3028, 0.0
  %v3151 = vmax.f32 %v3031, 0.0
  %v3152 = vmax.f32 %v3036, 0.0
  %v3153 = vmax.f32 %v3039, 0.0
  %v3154 = vmax.f32 %v3044, 0.0
  %v3155 = vmax.f32 %v3047, 0.0
  %v3156 = vmax.f32 %v3052, 0.0
  %v3157 = vmax.f32 %v3055, 0.0
  %v3158 = vmax.f32 %v3060, 0.0
  %v3159 = vmax.f32 %v3063, 0.0
  %v3160 = vmax.f32 %v3068, 0.0
  %v3161 = vmax.f32 %v3071, 0.0
  %v3162 = vmax.f32 %v3076, 0.0
  %v3163 = vmax.f32 %v3079, 0.0
  %v3164 = vmax.f32 %v3084, 0.0
  %v3165 = vmax.f32 %v3087, 0.0
  %v3166 = vmax.f32 %v3092, 0.0
  %v3167 = vmax.f32 %v3095, 0.0
  %v3168 = vmax.f32 %v3100, 0.0
  %v3169 = vmax.f32 %v3103, 0.0
  %v3170 = vld [vmem:[%s7] sm:$0x1]
  %v3171 = vld [vmem:[#allocation2] sm:$0x1]
  %3173 = vset.pattern.permute.xlu0 0
  %3174 = vperm.xlu0 %3173, %v3171
  %v3175 = vpop.permute.xlu0 %3174
  %v3177 = vlaneseq
  %v3178 = vshrl.u32 %v3177, 7
  %v3179 = vsub.s32 0, %v3178
  %v3180 = vrot.slane %v3175, %v3179
  %3181 = vmatprep.subr.mxu0 0.0
  %3182 = vmatpush1.xpose.msra.mxu0 %v3106
  %3183 = vmatprep.subr.mxu0 0.0
  %3184 = vmatpush1.xpose.msra.mxu0 %v3107
  %3185 = vmatprep.subr.mxu0 0.0
  %3186 = vmatpush1.xpose.msra.mxu0 %v3108
  %3187 = vmatprep.subr.mxu0 0.0
  %3188 = vmatpush1.xpose.msra.mxu0 %v3109
  %3189 = vmatprep.subr.mxu0 0.0
  %3190 = vmatpush1.xpose.msra.mxu0 %v3110
  %3191 = vmatprep.subr.mxu0 0.0
  %3192 = vmatpush1.xpose.msra.mxu0 %v3111
  %3193 = vmatprep.subr.mxu0 0.0
  %3194 = vmatpush1.xpose.msra.mxu0 %v3112
  %3195 = vmatprep.subr.mxu0 0.0
  %3196 = vmatpush1.xpose.msra.mxu0 %v3113
  %3197 = vmatprep.subr.mxu0 0.0
  %3198 = vmatpush1.xpose.msra.mxu0 %v3114
  %3199 = vmatprep.subr.mxu0 0.0
  %3200 = vmatpush1.xpose.msra.mxu0 %v3115
  %3201 = vmatprep.subr.mxu0 0.0
  %3202 = vmatpush1.xpose.msra.mxu0 %v3116
  %3203 = vmatprep.subr.mxu0 0.0
  %3204 = vmatpush1.xpose.msra.mxu0 %v3117
  %3205 = vmatprep.subr.mxu0 0.0
  %3206 = vmatpush1.xpose.msra.mxu0 %v3118
  %3207 = vmatprep.subr.mxu0 0.0
  %3208 = vmatpush1.xpose.msra.mxu0 %v3119
  %3209 = vmatprep.subr.mxu0 0.0
  %3210 = vmatpush1.xpose.msra.mxu0 %v3120
  %3211 = vmatprep.subr.mxu0 0.0
  %3212 = vmatpush1.xpose.msra.mxu0 %v3121
  %3213 = vmatprep.subr.mxu0 0.0
  %3214 = vmatpush1.xpose.msra.mxu0 %v3122
  %3215 = vmatprep.subr.mxu0 0.0
  %3216 = vmatpush1.xpose.msra.mxu0 %v3123
  %3217 = vmatprep.subr.mxu0 0.0
  %3218 = vmatpush1.xpose.msra.mxu0 %v3124
  %3219 = vmatprep.subr.mxu0 0.0
  %3220 = vmatpush1.xpose.msra.mxu0 %v3125
  %3221 = vmatprep.subr.mxu0 0.0
  %3222 = vmatpush1.xpose.msra.mxu0 %v3126
  %3223 = vmatprep.subr.mxu0 0.0
  %3224 = vmatpush1.xpose.msra.mxu0 %v3127
  %3225 = vmatprep.subr.mxu0 0.0
  %3226 = vmatpush1.xpose.msra.mxu0 %v3128
  %3227 = vmatprep.subr.mxu0 0.0
  %3228 = vmatpush1.xpose.msra.mxu0 %v3129
  %3229 = vmatprep.subr.mxu0 0.0
  %3230 = vmatpush1.xpose.msra.mxu0 %v3130
  %3231 = vmatprep.subr.mxu0 0.0
  %3232 = vmatpush1.xpose.msra.mxu0 %v3131
  %3233 = vmatprep.subr.mxu0 0.0
  %3234 = vmatpush1.xpose.msra.mxu0 %v3132
  %3235 = vmatprep.subr.mxu0 0.0
  %3236 = vmatpush1.xpose.msra.mxu0 %v3133
  %3237 = vmatprep.subr.mxu0 0.0
  %3238 = vmatpush1.xpose.msra.mxu0 %v3134
  %3239 = vmatprep.subr.mxu0 0.0
  %3240 = vmatpush1.xpose.msra.mxu0 %v3135
  %3241 = vmatprep.subr.mxu0 0.0
  %3242 = vmatpush1.xpose.msra.mxu0 %v3136
  %3243 = vmatprep.subr.mxu0 0.0
  %3244 = vmatpush1.xpose.msra.mxu0 %v3137
  %3245 = vmatprep.mubr.f32.mxu0 0.0
  %3246 = vmatmul.mubr.f32.gmra.mrb[0].mxu0 %v3170
  %v3247 = vpop.f32.mrb[0].mxu0
  %v3248 = vadd.f32 %v3180, %v3247
  %v3249 = vpop.f32.mrb[0].mxu0
  %v3250 = vadd.f32 %v3180, %v3249
  %3251 = vdwg.mxu0
  %3252 = vmatprep.subr.mxu0 0.0
  %3253 = vmatpush1.xpose.msra.mxu0 %v3138
  %3254 = vmatprep.subr.mxu0 0.0
  %3255 = vmatpush1.xpose.msra.mxu0 %v3139
  %3256 = vmatprep.subr.mxu0 0.0
  %3257 = vmatpush1.xpose.msra.mxu0 %v3140
  %3258 = vmatprep.subr.mxu0 0.0
  %3259 = vmatpush1.xpose.msra.mxu0 %v3141
  %3260 = vmatprep.subr.mxu0 0.0
  %3261 = vmatpush1.xpose.msra.mxu0 %v3142
  %3262 = vmatprep.subr.mxu0 0.0
  %3263 = vmatpush1.xpose.msra.mxu0 %v3143
  %3264 = vmatprep.subr.mxu0 0.0
  %3265 = vmatpush1.xpose.msra.mxu0 %v3144
  %3266 = vmatprep.subr.mxu0 0.0
  %3267 = vmatpush1.xpose.msra.mxu0 %v3145
  %3268 = vmatprep.subr.mxu0 0.0
  %3269 = vmatpush1.xpose.msra.mxu0 %v3146
  %3270 = vmatprep.subr.mxu0 0.0
  %3271 = vmatpush1.xpose.msra.mxu0 %v3147
  %3272 = vmatprep.subr.mxu0 0.0
  %3273 = vmatpush1.xpose.msra.mxu0 %v3148
  %3274 = vmatprep.subr.mxu0 0.0
  %3275 = vmatpush1.xpose.msra.mxu0 %v3149
  %3276 = vmatprep.subr.mxu0 0.0
  %3277 = vmatpush1.xpose.msra.mxu0 %v3150
  %3278 = vmatprep.subr.mxu0 0.0
  %3279 = vmatpush1.xpose.msra.mxu0 %v3151
  %3280 = vmatprep.subr.mxu0 0.0
  %3281 = vmatpush1.xpose.msra.mxu0 %v3152
  %3282 = vmatprep.subr.mxu0 0.0
  %3283 = vmatpush1.xpose.msra.mxu0 %v3153
  %3284 = vmatprep.subr.mxu0 0.0
  %3285 = vmatpush1.xpose.msra.mxu0 %v3154
  %3286 = vmatprep.subr.mxu0 0.0
  %3287 = vmatpush1.xpose.msra.mxu0 %v3155
  %3288 = vmatprep.subr.mxu0 0.0
  %3289 = vmatpush1.xpose.msra.mxu0 %v3156
  %3290 = vmatprep.subr.mxu0 0.0
  %3291 = vmatpush1.xpose.msra.mxu0 %v3157
  %3292 = vmatprep.subr.mxu0 0.0
  %3293 = vmatpush1.xpose.msra.mxu0 %v3158
  %3294 = vmatprep.subr.mxu0 0.0
  %3295 = vmatpush1.xpose.msra.mxu0 %v3159
  %3296 = vmatprep.subr.mxu0 0.0
  %3297 = vmatpush1.xpose.msra.mxu0 %v3160
  %3298 = vmatprep.subr.mxu0 0.0
  %3299 = vmatpush1.xpose.msra.mxu0 %v3161
  %3300 = vmatprep.subr.mxu0 0.0
  %3301 = vmatpush1.xpose.msra.mxu0 %v3162
  %3302 = vmatprep.subr.mxu0 0.0
  %3303 = vmatpush1.xpose.msra.mxu0 %v3163
  %3304 = vmatprep.subr.mxu0 0.0
  %3305 = vmatpush1.xpose.msra.mxu0 %v3164
  %3306 = vmatprep.subr.mxu0 0.0
  %3307 = vmatpush1.xpose.msra.mxu0 %v3165
  %3308 = vmatprep.subr.mxu0 0.0
  %3309 = vmatpush1.xpose.msra.mxu0 %v3166
  %3310 = vmatprep.subr.mxu0 0.0
  %3311 = vmatpush1.xpose.msra.mxu0 %v3167
  %3312 = vmatprep.subr.mxu0 0.0
  %3313 = vmatpush1.xpose.msra.mxu0 %v3168
  %3314 = vmatprep.subr.mxu0 0.0
  %3315 = vmatpush1.xpose.msra.mxu0 %v3169
  %3316 = vmatprep.mubr.f32.mxu0 0.0
  %3317 = vmatmul.mubr.f32.gmra.mrb[0].mxu0 %v3170
  %v3318 = vpop.f32.mrb[0].mxu0
  %v3319 = vadd.f32 %v3180, %v3318
  %v3320 = vpop.f32.mrb[0].mxu0
  %v3321 = vadd.f32 %v3180, %v3320
  %3322 = vdwg.mxu0
  %v3327 = vcombine.low %v3248, %v3250
  %v3328 = vcombine.low %v3319, %v3321
  %v3330 = vunpack.c.l.s4 1966171168
  %v3331 = vunpack.c.0.s8 %v3330
  %v3332 = vlaneseq
  %v3333 = vshrl.u32 %v3332, 7
  %v3334 = vsub.s32 %v3331, %v3333
  %v3335 = vrot.slane %v3327, %v3334
  %v3337 = vunpack.c.l.s4 1966171168
  %v3338 = vunpack.c.0.s8 %v3337
  %v3339 = vlaneseq
  %v3340 = vshrl.u32 %v3339, 7
  %v3341 = vsub.s32 %v3338, %v3340
  %v3342 = vrot.slane %v3328, %v3341
  %v3343 = vcombine.low %v3335, %v3342
  %v3345 = vunpack.c.l.s4 1966171168
  %v3346 = vunpack.c.0.s8 %v3345
  %v3347 = vlaneseq
  %v3348 = vshrl.u32 %v3347, 7
  %v3349 = vsub.s32 %v3346, %v3348
  %v3350 = vrot.slane %v3343, %v3349
  %v3352 = vlaneseq
  %vm3353 = vcmp.ge.s32.totalorder %v3352, 0
  %vm3354 = vcmp.lt.s32.totalorder %v3352, 512
  %vm3355 = vmand %vm3353, %vm3354
  %3356 = vst.msk [vmem:[%s9] sm:$0xf] %vm3355, %v3350
  // Predicated region
  $region38: #{deep_mlp_forward.1} parent=0 // pred_check
    _
  $region39: #{deep_mlp_forward.1} parent=0 // pred_check_branch
    %3358 = sbr.rel (0) target = $region41
  $region40: #{deep_mlp_forward.1} parent=0 // pred_region
    _
  $region41: #{deep_mlp_forward.1} parent=0 // pred_fallthru
    _
  // Predicated region
  $region42: #{deep_mlp_forward.1} parent=0 // pred_check
    _
  $region43: #{deep_mlp_forward.1} parent=0 // pred_check_branch
    %3360 = sbr.rel (0) target = $region45
  $region44: #{deep_mlp_forward.1} parent=0 // pred_region
    _
  $region45: #{deep_mlp_forward.1} parent=0 // pred_fallthru
    _

</llo_original>
